<compile_context>
chip_gen: v6e
topology: v6e:2x2x1
jax: 0.10.0
libtpu: 0.0.40
codegen_flags: <defaults>
</compile_context>

<pallas_src>
import functools
import math

import jax
import jax.numpy as jnp
from jax.experimental import pallas as pl
from jax.experimental.pallas import tpu as pltpu


# ---------------------------------------------------------------------------
# helpers
# ---------------------------------------------------------------------------

def _layer_norm_f32(y, gamma, beta, eps):
    """LayerNorm over the last axis; `y` must already be f32."""
    mean = jnp.mean(y, axis=-1, keepdims=True)
    var = jnp.mean(jnp.square(y - mean), axis=-1, keepdims=True)
    return (y - mean) * jax.lax.rsqrt(var + eps) * gamma + beta


def _sublane(dtype):
    return 16 if jnp.dtype(dtype) == jnp.dtype(jnp.bfloat16) else 8


def _pick_tile(n, max_tile, sublane, target_points=1):
    """Largest divisor tile of n that is a multiple of `sublane`, <= max_tile,
    preferring tiles that give at least `target_points` grid steps."""
    divs = [t for t in range(sublane, n + 1, sublane)
            if n % t == 0 and t <= max_tile]
    if not divs:
        return n                      # full-extent block (always legal)
    divs.sort(reverse=True)
    for t in divs:
        if n // t >= target_points:
            return t
    return divs[0]


@functools.lru_cache(maxsize=None)
def _vmem_capacity_bytes():
    try:
        return int(pltpu.get_tpu_info().vmem_capacity_bytes)
    except Exception:
        return 64 << 20               # conservative (v7x) default


def _vmem_limit(block_bytes):
    """Scoped-VMEM request from the per-block working set, clamped below the
    chip's physical VMEM with headroom for Mosaic internal scratch."""
    cap = _vmem_capacity_bytes()
    hi = max(32 << 20, cap - (8 << 20))          # ~56 MiB v7x, ~120 MiB v5e/v6e
    need = int(block_bytes) + (8 << 20)
    return int(min(max(need, 32 << 20), hi))


@functools.lru_cache(maxsize=None)
def _single_buffer_supported():
    """Probe whether BlockSpec(pipeline_mode=pl.Buffered(1)) lowers & runs."""
    try:
        def k(x_ref, o_ref):
            o_ref[...] = x_ref[...]
        x = jnp.arange(8 * 128, dtype=jnp.float32).reshape(8, 128)
        out = pl.pallas_call(
            k,
            out_shape=jax.ShapeDtypeStruct((16, 128), jnp.float32),
            grid=(2,),
            in_specs=[pl.BlockSpec((8, 128), lambda i: (0, 0),
                                   pipeline_mode=pl.Buffered(1))],
            out_specs=pl.BlockSpec((8, 128), lambda i: (i, 0)),
        )(x)
        out = jax.block_until_ready(out)
        return bool(jnp.all(out[:8] == x) and jnp.all(out[8:] == x))
    except Exception:
        return False


def _const_weight_spec(block_shape, index_map):
    """BlockSpec for an operand with a constant index map: single-buffer it
    (halves its VMEM footprint) when the backend supports pipeline_mode."""
    if _single_buffer_supported():
        return pl.BlockSpec(block_shape, index_map, pipeline_mode=pl.Buffered(1))
    return pl.BlockSpec(block_shape, index_map)


# ---------------------------------------------------------------------------
# kernels
# ---------------------------------------------------------------------------

def _attn_block_kernel(xq_ref, xkv_ref, wq_ref, bq_ref, wkv_ref, bkv_ref,
                       wo_ref, bo_ref, g_ref, b_ref, o_ref, acc_ref, *, eps):
    """One (batch, q-tile, head) grid step of y = LayerNorm1(x + MHA(x)).

    Heads are the innermost ("arbitrary") grid axis: each step computes one
    head's attention for the q-tile and accumulates its output-projection
    contribution ctx_h @ Wo[h] into the f32 VMEM accumulator; the last head
    adds the residual + bias and applies LayerNorm1.
    """
    h = pl.program_id(2)

    @pl.when(h == 0)
    def _():
        acc_ref[...] = jnp.zeros_like(acc_ref)

    xq = xq_ref[0]                              # (tq, D)  compute dtype
    xkv = xkv_ref[0]                            # (S,  D)
    dh = wq_ref.shape[-1]
    scale = 1.0 / math.sqrt(dh)
    cdt = xq.dtype

    # Projections for this head only (MXU, f32 accumulation, f32 bias add).
    q = jnp.dot(xq, wq_ref[0], preferred_element_type=jnp.float32) + bq_ref[0]
    kv = jnp.dot(xkv, wkv_ref[0], preferred_element_type=jnp.float32) + bkv_ref[0]
    k = kv[:, :dh]
    v = kv[:, dh:]

    # Scores + softmax (f32).  The 1/row_sum is folded in after P@V so the
    # normalization is a (tq, dh) multiply with an EUP reciprocal instead of a
    # (tq, S) VALU divide.
    s = jax.lax.dot_general((q * scale).astype(cdt), k.astype(cdt),
                            (((1,), (1,)), ((), ())),
                            preferred_element_type=jnp.float32)        # (tq, S)
    s = s - jnp.max(s, axis=-1, keepdims=True)
    p = jnp.exp(s)
    l = jnp.sum(p, axis=-1, keepdims=True)                             # (tq, 1)
    ctx = jnp.dot(p.astype(cdt), v.astype(cdt),
                  preferred_element_type=jnp.float32)                  # (tq, dh)
    ctx = ctx * pl.reciprocal(l, approx=True)

    # Fused output projection: acc += ctx_h @ Wo[h]  (no head concat).
    acc_ref[...] += jnp.dot(ctx.astype(wo_ref.dtype), wo_ref[0],
                            preferred_element_type=jnp.float32)        # (tq, D)

    @pl.when(h == pl.num_programs(2) - 1)
    def _():
        y = xq.astype(jnp.float32) + acc_ref[...] + bo_ref[...]
        o_ref[0] = _layer_norm_f32(y, g_ref[...], b_ref[...], eps).astype(o_ref.dtype)


def _ffn_block_kernel(x_ref, w1_ref, b1_ref, w2_ref, b2_ref, g_ref, b_ref,
                      o_ref, acc_ref, *, eps):
    """One (token-tile, F-tile) grid step of y = LayerNorm2(x + FFN(x))."""
    fi = pl.program_id(1)

    @pl.when(fi == 0)
    def _():
        acc_ref[...] = jnp.zeros_like(acc_ref)

    x = x_ref[...]                                          # (tn, D)
    hdn = jnp.dot(x, w1_ref[...], preferred_element_type=jnp.float32) + b1_ref[...]
    hdn = jnp.maximum(hdn, 0.0)                             # ReLU; dropout = id
    acc_ref[...] += jnp.dot(hdn.astype(w2_ref.dtype), w2_ref[...],
                            preferred_element_type=jnp.float32)

    @pl.when(fi == pl.num_programs(1) - 1)
    def _():
        y = x.astype(jnp.float32) + acc_ref[...] + b2_ref[...]
        o_ref[...] = _layer_norm_f32(y, g_ref[...], b_ref[...], eps).astype(o_ref.dtype)


def _final_norm_project_kernel(x_ref, g_ref, b_ref, wp_ref, bp_ref, o_ref, *, eps):
    """Token tile: out = LayerNorm(x) @ Wp + bp."""
    x = x_ref[...].astype(jnp.float32)
    xn = _layer_norm_f32(x, g_ref[...], b_ref[...], eps)
    y = jnp.dot(xn.astype(wp_ref.dtype), wp_ref[...],
                preferred_element_type=jnp.float32) + bp_ref[...]
    o_ref[...] = y.astype(o_ref.dtype)


# ---------------------------------------------------------------------------
# pallas_call wrappers
# ---------------------------------------------------------------------------

def _attn_block(x, lp, *, nhead, eps, q_tile, compute_dtype):
    B, S, D = x.shape
    dh = D // nhead
    it = jnp.dtype(compute_dtype).itemsize

    # Per-head weight layouts (no in-kernel reshapes/transposes needed):
    #   Wq -> (H, D, dh), Wkv -> (H, D, 2*dh), Wo -> (H, dh, D).
    wqkv = lp["wqkv"]                                       # (D, 3D)
    bqkv = lp["bqkv"].reshape(3 * D)

    def head_w(w):                                          # (D, D) -> (H, D, dh)
        return w.reshape(D, nhead, dh).transpose(1, 0, 2)

    def head_b(v):                                          # (D,) -> (H, 1, dh)
        return v.reshape(nhead, dh)[:, None, :].astype(jnp.float32)

    wq = head_w(wqkv[:, :D]).astype(compute_dtype)
    wkv = jnp.concatenate([head_w(wqkv[:, D:2 * D]),
                           head_w(wqkv[:, 2 * D:])], axis=-1).astype(compute_dtype)
    bq = head_b(bqkv[:D])
    bkv = jnp.concatenate([head_b(bqkv[D:2 * D]), head_b(bqkv[2 * D:])], axis=-1)
    wo = lp["wo"].reshape(nhead, dh, D).astype(compute_dtype)
    bo = lp["bo"].astype(jnp.float32)
    g = lp["g1"].astype(jnp.float32)
    b = lp["be1"].astype(jnp.float32)

    sub = _sublane(compute_dtype)
    tq = _pick_tile(S, q_tile, sub, target_points=max(1, -(-4 // B)))
    nq = S // tq

    blk = (2 * (tq * D + S * D + tq * D) * it                   # xq / xkv / out
           + 2 * (D * dh + D * 2 * dh + dh * D) * it            # per-head weights
           + 2 * (4 * dh + 3 * D) * 4                           # biases / LN params
           + tq * D * 4                                         # f32 accumulator
           + (2 * tq * S + S * 2 * dh + tq * (D + dh)) * 4)     # f32 temporaries
    flops = B * nq * nhead * (2 * tq * D * dh + 4 * S * D * dh
                              + 4 * tq * S * dh + 2 * tq * dh * D)
    transc = B * nq * nhead * (tq * S + tq)
    bytes_acc = (B * nq * (2 * tq * D + S * D) * it
                 + B * nq * nhead * 4 * D * dh * it)

    kernel = functools.partial(_attn_block_kernel, eps=eps)
    return pl.pallas_call(
        kernel,
        out_shape=jax.ShapeDtypeStruct((B, S, D), compute_dtype),
        grid_spec=pltpu.PrefetchScalarGridSpec(
            num_scalar_prefetch=0,
            grid=(B, nq, nhead),
            in_specs=[
                pl.BlockSpec((1, tq, D), lambda bi, qi, hi: (bi, qi, 0)),    # x (q rows)
                pl.BlockSpec((1, S, D), lambda bi, qi, hi: (bi, 0, 0)),      # x (kv rows)
                pl.BlockSpec((1, D, dh), lambda bi, qi, hi: (hi, 0, 0)),     # Wq[h]
                pl.BlockSpec((1, 1, dh), lambda bi, qi, hi: (hi, 0, 0)),     # bq[h]
                pl.BlockSpec((1, D, 2 * dh), lambda bi, qi, hi: (hi, 0, 0)), # Wkv[h]
                pl.BlockSpec((1, 1, 2 * dh), lambda bi, qi, hi: (hi, 0, 0)), # bkv[h]
                pl.BlockSpec((1, dh, D), lambda bi, qi, hi: (hi, 0, 0)),     # Wo[h]
                _const_weight_spec((1, D), lambda bi, qi, hi: (0, 0)),       # bo
                _const_weight_spec((1, D), lambda bi, qi, hi: (0, 0)),       # LN1 gamma
                _const_weight_spec((1, D), lambda bi, qi, hi: (0, 0)),       # LN1 beta
            ],
            out_specs=pl.BlockSpec((1, tq, D), lambda bi, qi, hi: (bi, qi, 0)),
            scratch_shapes=[pltpu.VMEM((tq, D), jnp.float32)]),
        compiler_params=pltpu.CompilerParams(
            dimension_semantics=("parallel", "parallel", "arbitrary"),
            vmem_limit_bytes=_vmem_limit(blk)),
        cost_estimate=pl.CostEstimate(flops=int(flops),
                                      transcendentals=int(transc),
                                      bytes_accessed=int(bytes_acc)),
    )(x, x, wq, bq, wkv, bkv, wo, bo, g, b)


def _ffn_block(x, lp, *, eps, token_tile, ff_tile, compute_dtype):
    N, D = x.shape
    F = lp["w1"].shape[1]
    it = jnp.dtype(compute_dtype).itemsize
    w1 = lp["w1"].astype(compute_dtype)
    w2 = lp["w2"].astype(compute_dtype)
    b1 = lp["b1"].astype(jnp.float32)
    b2 = lp["b2"].astype(jnp.float32)
    g = lp["g2"].astype(jnp.float32)
    b = lp["be2"].astype(jnp.float32)

    sub = _sublane(compute_dtype)
    tn = _pick_tile(N, token_tile, sub, target_points=4)
    tf = _pick_tile(F, ff_tile, 128)
    nf = F // tf
    # Single F step -> W1/W2 are effectively constant-index; single-buffer.
    w_spec = _const_weight_spec if nf == 1 else pl.BlockSpec

    blk = (4 * tn * D * it                              # x in / out (dbl-buffered)
           + 2 * (D * tf + tf * D) * it + 2 * tf * 4    # W1/W2/b1 tiles
           + 3 * D * 4
           + tn * D * 4                                 # f32 accumulator
           + 2 * tn * tf * 4)                           # f32 hidden temporaries
    flops = 4 * N * D * F
    bytes_acc = 2 * N * D * it + (N // tn) * 2 * D * F * it

    kernel = functools.partial(_ffn_block_kernel, eps=eps)
    return pl.pallas_call(
        kernel,
        out_shape=jax.ShapeDtypeStruct((N, D), compute_dtype),
        grid_spec=pltpu.PrefetchScalarGridSpec(
            num_scalar_prefetch=0,
            grid=(N // tn, nf),
            in_specs=[
                pl.BlockSpec((tn, D), lambda i, fi: (i, 0)),        # token tile
                w_spec((D, tf), lambda i, fi: (0, fi)),             # W1 tile
                w_spec((1, tf), lambda i, fi: (0, fi)),             # b1 tile
                w_spec((tf, D), lambda i, fi: (fi, 0)),             # W2 tile
                _const_weight_spec((1, D), lambda i, fi: (0, 0)),   # b2
                _const_weight_spec((1, D), lambda i, fi: (0, 0)),   # LN2 gamma
                _const_weight_spec((1, D), lambda i, fi: (0, 0)),   # LN2 beta
            ],
            out_specs=pl.BlockSpec((tn, D), lambda i, fi: (i, 0)),
            scratch_shapes=[pltpu.VMEM((tn, D), jnp.float32)]),
        compiler_params=pltpu.CompilerParams(
            dimension_semantics=("parallel", "arbitrary"),
            vmem_limit_bytes=_vmem_limit(blk)),
        cost_estimate=pl.CostEstimate(flops=int(flops), transcendentals=int(N),
                                      bytes_accessed=int(bytes_acc)),
    )(x, w1, b1, w2, b2, g, b)


def _final_norm_project(x, params, *, eps, token_tile, compute_dtype, out_dtype):
    N, D = x.shape
    O = params["wp"].shape[1]
    it = jnp.dtype(compute_dtype).itemsize
    wp = params["wp"].astype(compute_dtype)
    bp = params["bp"].astype(jnp.float32)
    g = params["gf"].astype(jnp.float32)
    b = params["bef"].astype(jnp.float32)

    sub = _sublane(compute_dtype)
    tn = _pick_tile(N, token_tile, sub, target_points=4)
    wbuf = 1 if _single_buffer_supported() else 2

    blk = (2 * tn * D * it + 2 * tn * O * jnp.dtype(out_dtype).itemsize
           + wbuf * (D * O * it + (2 * D + O) * 4) + 2 * tn * D * 4)
    flops = 2 * N * D * O
    bytes_acc = (N * D * it + D * O * it
                 + N * O * jnp.dtype(out_dtype).itemsize)

    kernel = functools.partial(_final_norm_project_kernel, eps=eps)
    return pl.pallas_call(
        kernel,
        out_shape=jax.ShapeDtypeStruct((N, O), out_dtype),
        grid_spec=pltpu.PrefetchScalarGridSpec(
            num_scalar_prefetch=0,
            grid=(N // tn,),
            in_specs=[
                pl.BlockSpec((tn, D), lambda i: (i, 0)),            # token tile
                _const_weight_spec((1, D), lambda i: (0, 0)),       # final LN gamma
                _const_weight_spec((1, D), lambda i: (0, 0)),       # final LN beta
                _const_weight_spec((D, O), lambda i: (0, 0)),       # projection W
                _const_weight_spec((1, O), lambda i: (0, 0)),       # projection b
            ],
            out_specs=pl.BlockSpec((tn, O), lambda i: (i, 0)),
        ),
        compiler_params=pltpu.CompilerParams(
            dimension_semantics=("parallel",),
            vmem_limit_bytes=_vmem_limit(blk)),
        cost_estimate=pl.CostEstimate(flops=int(flops), transcendentals=int(N),
                                      bytes_accessed=int(bytes_acc)),
    )(x, g, b, wp, bp)


@functools.partial(jax.jit, static_argnames=("nhead", "eps", "q_tile",
                                              "token_tile", "ff_tile",
                                              "compute_dtype"))
def transformer_encoder(x, params, *, nhead, eps=1e-5, q_tile=256,
                        token_tile=None, ff_tile=2048,
                        compute_dtype=jnp.bfloat16):
    """Eval-mode forward of the clara TransformerEncoder.

    x: [seq, batch, d_model] (batch_first=False).  Returns [seq, batch, out]
    in x.dtype.  bf16 compute by default; accumulation, bias adds, softmax and
    LayerNorm statistics are f32.
    """
    S, B, D = x.shape
    N = B * S
    if token_tile is None:
        # v5e/v6e (128 MiB VMEM) can afford larger row tiles than v7x (64 MiB).
        token_tile = 512 if _vmem_capacity_bytes() >= (96 << 20) else 256
    out_dtype = x.dtype
    # Cast before the layout transpose so the XLA copy moves half the bytes.
    h = jnp.transpose(x.astype(compute_dtype), (1, 0, 2))              # (B, S, D)
    for lp in params["layers"]:
        h = _attn_block(h, lp, nhead=nhead, eps=eps, q_tile=q_tile,
                        compute_dtype=compute_dtype)
        h2 = _ffn_block(h.reshape(N, D), lp, eps=eps, token_tile=token_tile,
                        ff_tile=ff_tile, compute_dtype=compute_dtype)
        h = h2.reshape(B, S, D)
    # TODO(synk): fold the final LayerNorm+projection into the last layer's
    #             FFN kernel to save one more HBM round-trip.
    out = _final_norm_project(h.reshape(N, D), params, eps=eps,
                              token_tile=token_tile,
                              compute_dtype=compute_dtype, out_dtype=out_dtype)
    O = params["wp"].shape[1]
    return jnp.transpose(out.reshape(B, S, O), (1, 0, 2))              # (S, B, O)


# ---------------------------------------------------------------------------
# pure-JAX reference + parameter init (for the self-test)
# ---------------------------------------------------------------------------

def reference_forward(x, params, *, nhead, eps=1e-5):
    S, B, D = x.shape
    dh = D // nhead
    h = jnp.transpose(x, (1, 0, 2))                                    # (B, S, D)
    for lp in params["layers"]:
        qkv = h @ lp["wqkv"] + lp["bqkv"]
        q, k, v = jnp.split(qkv, 3, axis=-1)

        def split_heads(t):
            return t.reshape(B, S, nhead, dh).transpose(0, 2, 1, 3)

        q, k, v = split_heads(q), split_heads(k), split_heads(v)
        s = jnp.einsum("bhqd,bhkd->bhqk", q, k) / math.sqrt(dh)
        p = jax.nn.softmax(s, axis=-1)
        ctx = jnp.einsum("bhqk,bhkd->bhqd", p, v)
        ctx = ctx.transpose(0, 2, 1, 3).reshape(B, S, D)
        attn = ctx @ lp["wo"] + lp["bo"]
        h = _layer_norm_f32(h + attn, lp["g1"], lp["be1"], eps)
        ff = jnp.maximum(h @ lp["w1"] + lp["b1"], 0.0) @ lp["w2"] + lp["b2"]
        h = _layer_norm_f32(h + ff, lp["g2"], lp["be2"], eps)
    h = _layer_norm_f32(h, params["gf"], params["bef"], eps)
    y = h @ params["wp"] + params["bp"]
    return jnp.transpose(y, (1, 0, 2))


def init_params(key, *, d_model, nhead, dim_feedforward, out_channels, num_layers):
    del nhead  # head split handled at call time
    params = {"layers": []}
    keys = jax.random.split(key, num_layers + 1)
    b_d = 1.0 / math.sqrt(d_model)
    b_f = 1.0 / math.sqrt(dim_feedforward)
    for lk in keys[:-1]:
        ks = jax.random.split(lk, 12)
        params["layers"].append({
            "wqkv": jax.random.uniform(ks[0], (d_model, 3 * d_model), jnp.float32, -b_d, b_d),
            "bqkv": jax.random.uniform(ks[1], (1, 3 * d_model), jnp.float32, -b_d, b_d),
            "wo": jax.random.uniform(ks[2], (d_model, d_model), jnp.float32, -b_d, b_d),
            "bo": jax.random.uniform(ks[3], (1, d_model), jnp.float32, -b_d, b_d),
            "g1": 1.0 + 0.1 * jax.random.normal(ks[4], (1, d_model), jnp.float32),
            "be1": 0.1 * jax.random.normal(ks[5], (1, d_model), jnp.float32),
            "w1": jax.random.uniform(ks[6], (d_model, dim_feedforward), jnp.float32, -b_d, b_d),
            "b1": jax.random.uniform(ks[7], (1, dim_feedforward), jnp.float32, -b_d, b_d),
            "w2": jax.random.uniform(ks[8], (dim_feedforward, d_model), jnp.float32, -b_f, b_f),
            "b2": jax.random.uniform(ks[9], (1, d_model), jnp.float32, -b_f, b_f),
            "g2": 1.0 + 0.1 * jax.random.normal(ks[10], (1, d_model), jnp.float32),
            "be2": 0.1 * jax.random.normal(ks[11], (1, d_model), jnp.float32),
        })
    kf = jax.random.split(keys[-1], 4)
    params["gf"] = 1.0 + 0.1 * jax.random.normal(kf[0], (1, d_model), jnp.float32)
    params["bef"] = 0.1 * jax.random.normal(kf[1], (1, d_model), jnp.float32)
    params["wp"] = jax.random.uniform(kf[2], (d_model, out_channels), jnp.float32, -b_d, b_d)
    params["bp"] = jax.random.uniform(kf[3], (1, out_channels), jnp.float32, -b_d, b_d)
    return params


if __name__ == "__main__":
    # Small but representative shapes: lane-dense d_model, 128-wide heads.
    # (dh = 128 keeps the MXU filled; tiles are chosen so every grid has
    #  several steps, exercising the head/F accumulation paths.)
    S, B = 64, 2
    D_MODEL, N_HEAD, D_FF, OUT, LAYERS = 256, 2, 512, 128, 2
    EPS = 1e-5

    # Warm capability caches outside any trace.
    _vmem_capacity_bytes()
    _single_buffer_supported()

    key = jax.random.PRNGKey(0)
    kx, kp = jax.random.split(key)
    x = jax.random.normal(kx, (S, B, D_MODEL), dtype=jnp.float32)
    params = init_params(kp, d_model=D_MODEL, nhead=N_HEAD,
                         dim_feedforward=D_FF, out_channels=OUT,
                         num_layers=LAYERS)

    with jax.default_matmul_precision("highest"):
        ref = reference_forward(x, params, nhead=N_HEAD, eps=EPS)

    # f32 compute path: tight check against the pure-JAX reference.
    out_f32 = transformer_encoder(x, params, nhead=N_HEAD, eps=EPS,
                                  ff_tile=256, compute_dtype=jnp.float32)
    out_f32 = jax.block_until_ready(out_f32)
    assert out_f32.shape == (S, B, OUT)
    err32 = float(jnp.max(jnp.abs(out_f32 - ref)))
    assert jnp.allclose(out_f32, ref, atol=5e-3, rtol=5e-3), (
        f"f32 path mismatch vs reference: max abs err {err32:.3e}")

    # Default bf16 compute path (f32 accumulation / LN / softmax).
    out_bf16 = transformer_encoder(x, params, nhead=N_HEAD, eps=EPS, ff_tile=256)
    out_bf16 = jax.block_until_ready(out_bf16)
    assert out_bf16.shape == (S, B, OUT)
    err16 = float(jnp.max(jnp.abs(out_bf16 - ref)))
    assert jnp.allclose(out_bf16, ref, atol=1e-1, rtol=1e-1), (
        f"bf16 path mismatch vs reference: max abs err {err16:.3e}")

    print("KERNEL_OK")
</pallas_src>

<mosaic_0001>
module attributes {stable_mosaic.version = 11 : i64} {
  func.func @k(%arg0: i32, %arg1: memref<8x128xf32, #tpu.memory_space<vmem>>, %arg2: memref<8x128xf32, #tpu.memory_space<vmem>>) attributes {dimension_semantics = [#tpu.dimension_semantics<arbitrary>], iteration_bounds = array<i64: 2>, scalar_prefetch = 0 : i64, scratch_operands = 0 : i64, tpu.core_type = #tpu.core_type<tc>, window_params = [{pipeline_mode = #tpu.pipeline_mode<synchronous>, transform_indices = @transform_0, window_bounds = array<i64: 8, 128>}, {transform_indices = @transform_1, window_bounds = array<i64: 8, 128>}]} {
    %c0 = arith.constant 0 : index
    %c0_0 = arith.constant 0 : index
    %0 = vector.load %arg1[%c0, %c0_0] : memref<8x128xf32, #tpu.memory_space<vmem>>, vector<8x128xf32>
    %c0_1 = arith.constant 0 : index
    %c0_2 = arith.constant 0 : index
    %1 = vector.load %arg2[%c0_1, %c0_2] : memref<8x128xf32, #tpu.memory_space<vmem>>, vector<8x128xf32>
    tpu.vector_store %arg2[%c0_1, %c0_2], %0 {strides = array<i32>} : memref<8x128xf32, #tpu.memory_space<vmem>>, vector<8x128xf32>,
    return
  }
  func.func @transform_0(%arg0: i32) -> (i32, i32) {
    %c0_i32 = arith.constant 0 : i32
    %c0_i32_0 = arith.constant 0 : i32
    %c0_i32_1 = arith.constant 0 : i32
    return %c0_i32, %c0_i32_0 : i32, i32
  }
  func.func @transform_1(%arg0: i32) -> (i32, i32) {
    %c0_i32 = arith.constant 0 : i32
    %c0_i32_0 = arith.constant 0 : i32
    return %arg0, %c0_i32 : i32, i32
  }
}

module attributes {stable_mosaic.version = 11 : i64} {
  func.func @_final_norm_project_kernel(%arg0: i32, %arg1: memref<32x256xf32, #tpu.memory_space<vmem>>, %arg2: memref<1x256xf32, #tpu.memory_space<vmem>>, %arg3: memref<1x256xf32, #tpu.memory_space<vmem>>, %arg4: memref<256x128xf32, #tpu.memory_space<vmem>>, %arg5: memref<1x128xf32, #tpu.memory_space<vmem>>, %arg6: memref<32x128xf32, #tpu.memory_space<vmem>>) attributes {dimension_semantics = [#tpu.dimension_semantics<parallel>], iteration_bounds = array<i64: 4>, scalar_prefetch = 0 : i64, scratch_operands = 0 : i64, tpu.core_type = #tpu.core_type<tc>, window_params = [{transform_indices = @transform_0, window_bounds = array<i64: 32, 256>}, {pipeline_mode = #tpu.pipeline_mode<synchronous>, transform_indices = @transform_1, window_bounds = array<i64: 1, 256>}, {pipeline_mode = #tpu.pipeline_mode<synchronous>, transform_indices = @transform_2, window_bounds = array<i64: 1, 256>}, {pipeline_mode = #tpu.pipeline_mode<synchronous>, transform_indices = @transform_3, window_bounds = array<i64: 256, 128>}, {pipeline_mode = #tpu.pipeline_mode<synchronous>, transform_indices = @transform_4, window_bounds = array<i64: 1, 128>}, {transform_indices = @transform_5, window_bounds = array<i64: 32, 128>}]} {
    %c0 = arith.constant 0 : index
    %c0_0 = arith.constant 0 : index
    %0 = vector.load %arg1[%c0, %c0_0] : memref<32x256xf32, #tpu.memory_space<vmem>>, vector<32x256xf32>
    %c0_1 = arith.constant 0 : index
    %c0_2 = arith.constant 0 : index
    %1 = vector.load %arg2[%c0_1, %c0_2] : memref<1x256xf32, #tpu.memory_space<vmem>>, vector<1x256xf32>
    %c0_3 = arith.constant 0 : index
    %c0_4 = arith.constant 0 : index
    %2 = vector.load %arg3[%c0_3, %c0_4] : memref<1x256xf32, #tpu.memory_space<vmem>>, vector<1x256xf32>
    %cst = arith.constant dense<0.000000e+00> : vector<32xf32>
    %3 = vector.multi_reduction <add>, %0, %cst [1] : vector<32x256xf32> to vector<32xf32>
    %4 = vector.shape_cast %3 : vector<32xf32> to vector<32x1xf32>
    %cst_5 = arith.constant 2.560000e+02 : f32
    %5 = vector.broadcast %cst_5 : f32 to vector<32x1xf32>
    %6 = arith.divf %4, %5 : vector<32x1xf32>
    %7 = vector.broadcast %6 : vector<32x1xf32> to vector<32x256xf32>
    %8 = arith.subf %0, %7 : vector<32x256xf32>
    %9 = arith.mulf %8, %8 : vector<32x256xf32>
    %cst_6 = arith.constant dense<0.000000e+00> : vector<32xf32>
    %10 = vector.multi_reduction <add>, %9, %cst_6 [1] : vector<32x256xf32> to vector<32xf32>
    %11 = vector.shape_cast %10 : vector<32xf32> to vector<32x1xf32>
    %cst_7 = arith.constant 2.560000e+02 : f32
    %12 = vector.broadcast %cst_7 : f32 to vector<32x1xf32>
    %13 = arith.divf %11, %12 : vector<32x1xf32>
    %14 = vector.broadcast %6 : vector<32x1xf32> to vector<32x256xf32>
    %15 = arith.subf %0, %14 : vector<32x256xf32>
    %cst_8 = arith.constant 9.99999974E-6 : f32
    %16 = vector.broadcast %cst_8 : f32 to vector<32x1xf32>
    %17 = arith.addf %13, %16 : vector<32x1xf32>
    %18 = math.rsqrt %17 : vector<32x1xf32>
    %19 = vector.broadcast %18 : vector<32x1xf32> to vector<32x256xf32>
    %20 = arith.mulf %15, %19 : vector<32x256xf32>
    %21 = vector.broadcast %1 : vector<1x256xf32> to vector<32x256xf32>
    %22 = arith.mulf %20, %21 : vector<32x256xf32>
    %23 = vector.broadcast %2 : vector<1x256xf32> to vector<32x256xf32>
    %24 = arith.addf %22, %23 : vector<32x256xf32>
    %c0_9 = arith.constant 0 : index
    %c0_10 = arith.constant 0 : index
    %25 = vector.load %arg4[%c0_9, %c0_10] : memref<256x128xf32, #tpu.memory_space<vmem>>, vector<256x128xf32>
    %cst_11 = arith.constant dense<0.000000e+00> : vector<32x128xf32>
    %26 = tpu.matmul %24, %25, %cst_11 {dimension_numbers = #tpu.dot_dimension_numbers<[1], [0], [0], [1], [0, 0, 1, 1], [], []>} : vector<32x256xf32>, vector<256x128xf32>, vector<32x128xf32> -> vector<32x128xf32>
    %c0_12 = arith.constant 0 : index
    %c0_13 = arith.constant 0 : index
    %27 = vector.load %arg5[%c0_12, %c0_13] : memref<1x128xf32, #tpu.memory_space<vmem>>, vector<1x128xf32>
    %28 = vector.broadcast %27 : vector<1x128xf32> to vector<32x128xf32>
    %29 = arith.addf %26, %28 : vector<32x128xf32>
    %c0_14 = arith.constant 0 : index
    %c0_15 = arith.constant 0 : index
    %30 = vector.load %arg6[%c0_14, %c0_15] : memref<32x128xf32, #tpu.memory_space<vmem>>, vector<32x128xf32>
    tpu.vector_store %arg6[%c0_14, %c0_15], %29 {strides = array<i32>} : memref<32x128xf32, #tpu.memory_space<vmem>>, vector<32x128xf32>,
    return
  }
  func.func @transform_0(%arg0: i32) -> (i32, i32) {
    %c0_i32 = arith.constant 0 : i32
    %c0_i32_0 = arith.constant 0 : i32
    return %arg0, %c0_i32 : i32, i32
  }
  func.func @transform_1(%arg0: i32) -> (i32, i32) {
    %c0_i32 = arith.constant 0 : i32
    %c0_i32_0 = arith.constant 0 : i32
    %c0_i32_1 = arith.constant 0 : i32
    return %c0_i32, %c0_i32_0 : i32, i32
  }
  func.func @transform_2(%arg0: i32) -> (i32, i32) {
    %c0_i32 = arith.constant 0 : i32
    %c0_i32_0 = arith.constant 0 : i32
    %c0_i32_1 = arith.constant 0 : i32
    return %c0_i32, %c0_i32_0 : i32, i32
  }
  func.func @transform_3(%arg0: i32) -> (i32, i32) {
    %c0_i32 = arith.constant 0 : i32
    %c0_i32_0 = arith.constant 0 : i32
    %c0_i32_1 = arith.constant 0 : i32
    return %c0_i32, %c0_i32_0 : i32, i32
  }
  func.func @transform_4(%arg0: i32) -> (i32, i32) {
    %c0_i32 = arith.constant 0 : i32
    %c0_i32_0 = arith.constant 0 : i32
    %c0_i32_1 = arith.constant 0 : i32
    return %c0_i32, %c0_i32_0 : i32, i32
  }
  func.func @transform_5(%arg0: i32) -> (i32, i32) {
    %c0_i32 = arith.constant 0 : i32
    %c0_i32_0 = arith.constant 0 : i32
    return %arg0, %c0_i32 : i32, i32
  }
}

module attributes {stable_mosaic.version = 11 : i64} {
  func.func @_ffn_block_kernel(%arg0: i32, %arg1: i32, %arg2: memref<32x256xf32, #tpu.memory_space<vmem>>, %arg3: memref<256x256xf32, #tpu.memory_space<vmem>>, %arg4: memref<1x256xf32, #tpu.memory_space<vmem>>, %arg5: memref<256x256xf32, #tpu.memory_space<vmem>>, %arg6: memref<1x256xf32, #tpu.memory_space<vmem>>, %arg7: memref<1x256xf32, #tpu.memory_space<vmem>>, %arg8: memref<1x256xf32, #tpu.memory_space<vmem>>, %arg9: memref<32x256xf32, #tpu.memory_space<vmem>>, %arg10: memref<32x256xf32, #tpu.memory_space<vmem>>) attributes {dimension_semantics = [#tpu.dimension_semantics<parallel>, #tpu.dimension_semantics<arbitrary>], iteration_bounds = array<i64: 4, 2>, scalar_prefetch = 0 : i64, scratch_operands = 1 : i64, tpu.core_type = #tpu.core_type<tc>, window_params = [{transform_indices = @transform_0, window_bounds = array<i64: 32, 256>}, {transform_indices = @transform_1, window_bounds = array<i64: 256, 256>}, {transform_indices = @transform_2, window_bounds = array<i64: 1, 256>}, {transform_indices = @transform_3, window_bounds = array<i64: 256, 256>}, {pipeline_mode = #tpu.pipeline_mode<synchronous>, transform_indices = @transform_4, window_bounds = array<i64: 1, 256>}, {pipeline_mode = #tpu.pipeline_mode<synchronous>, transform_indices = @transform_5, window_bounds = array<i64: 1, 256>}, {pipeline_mode = #tpu.pipeline_mode<synchronous>, transform_indices = @transform_6, window_bounds = array<i64: 1, 256>}, {transform_indices = @transform_7, window_bounds = array<i64: 32, 256>}]} {
    %c0_i32 = arith.constant 0 : i32
    %0 = arith.cmpi eq, %arg1, %c0_i32 : i32
    %1 = arith.extui %0 : i1 to i32
    %c0_i32_0 = arith.constant 0 : i32
    %2 = arith.cmpi ne, %1, %c0_i32_0 : i32
    scf.if %2 {
      %cst_15 = arith.constant 0.000000e+00 : f32
      %19 = vector.broadcast %cst_15 : f32 to vector<32x256xf32>
      %c0_16 = arith.constant 0 : index
      %c0_17 = arith.constant 0 : index
      %20 = vector.load %arg10[%c0_16, %c0_17] : memref<32x256xf32, #tpu.memory_space<vmem>>, vector<32x256xf32>
      tpu.vector_store %arg10[%c0_16, %c0_17], %19 {strides = array<i32>} : memref<32x256xf32, #tpu.memory_space<vmem>>, vector<32x256xf32>,
    } else {
    }
    %c0 = arith.constant 0 : index
    %c0_1 = arith.constant 0 : index
    %3 = vector.load %arg2[%c0, %c0_1] : memref<32x256xf32, #tpu.memory_space<vmem>>, vector<32x256xf32>
    %c0_2 = arith.constant 0 : index
    %c0_3 = arith.constant 0 : index
    %4 = vector.load %arg3[%c0_2, %c0_3] : memref<256x256xf32, #tpu.memory_space<vmem>>, vector<256x256xf32>
    %cst = arith.constant dense<0.000000e+00> : vector<32x256xf32>
    %5 = tpu.matmul %3, %4, %cst {dimension_numbers = #tpu.dot_dimension_numbers<[1], [0], [0], [1], [0, 0, 1, 1], [], []>} : vector<32x256xf32>, vector<256x256xf32>, vector<32x256xf32> -> vector<32x256xf32>
    %c0_4 = arith.constant 0 : index
    %c0_5 = arith.constant 0 : index
    %6 = vector.load %arg4[%c0_4, %c0_5] : memref<1x256xf32, #tpu.memory_space<vmem>>, vector<1x256xf32>
    %7 = vector.broadcast %6 : vector<1x256xf32> to vector<32x256xf32>
    %8 = arith.addf %5, %7 : vector<32x256xf32>
    %cst_6 = arith.constant 0.000000e+00 : f32
    %9 = vector.broadcast %cst_6 : f32 to vector<32x256xf32>
    %10 = arith.maximumf %8, %9 : vector<32x256xf32>
    %c0_7 = arith.constant 0 : index
    %c0_8 = arith.constant 0 : index
    %11 = vector.load %arg10[%c0_7, %c0_8] : memref<32x256xf32, #tpu.memory_space<vmem>>, vector<32x256xf32>
    %c0_9 = arith.constant 0 : index
    %c0_10 = arith.constant 0 : index
    %12 = vector.load %arg5[%c0_9, %c0_10] : memref<256x256xf32, #tpu.memory_space<vmem>>, vector<256x256xf32>
    %cst_11 = arith.constant dense<0.000000e+00> : vector<32x256xf32>
    %13 = tpu.matmul %10, %12, %cst_11 {dimension_numbers = #tpu.dot_dimension_numbers<[1], [0], [0], [1], [0, 0, 1, 1], [], []>} : vector<32x256xf32>, vector<256x256xf32>, vector<32x256xf32> -> vector<32x256xf32>
    %14 = arith.addf %11, %13 : vector<32x256xf32>
    %c0_12 = arith.constant 0 : index
    %c0_13 = arith.constant 0 : index
    %15 = vector.load %arg10[%c0_12, %c0_13] : memref<32x256xf32, #tpu.memory_space<vmem>>, vector<32x256xf32>
    tpu.vector_store %arg10[%c0_12, %c0_13], %14 {strides = array<i32>} : memref<32x256xf32, #tpu.memory_space<vmem>>, vector<32x256xf32>,
    %c1_i32 = arith.constant 1 : i32
    %16 = arith.cmpi eq, %arg1, %c1_i32 : i32
    %17 = arith.extui %16 : i1 to i32
    %c0_i32_14 = arith.constant 0 : i32
    %18 = arith.cmpi ne, %17, %c0_i32_14 : i32
    scf.if %18 {
      %c0_15 = arith.constant 0 : index
      %c0_16 = arith.constant 0 : index
      %19 = vector.load %arg10[%c0_15, %c0_16] : memref<32x256xf32, #tpu.memory_space<vmem>>, vector<32x256xf32>
      %20 = arith.addf %3, %19 : vector<32x256xf32>
      %c0_17 = arith.constant 0 : index
      %c0_18 = arith.constant 0 : index
      %21 = vector.load %arg6[%c0_17, %c0_18] : memref<1x256xf32, #tpu.memory_space<vmem>>, vector<1x256xf32>
      %22 = vector.broadcast %21 : vector<1x256xf32> to vector<32x256xf32>
      %23 = arith.addf %20, %22 : vector<32x256xf32>
      %c0_19 = arith.constant 0 : index
      %c0_20 = arith.constant 0 : index
      %24 = vector.load %arg7[%c0_19, %c0_20] : memref<1x256xf32, #tpu.memory_space<vmem>>, vector<1x256xf32>
      %c0_21 = arith.constant 0 : index
      %c0_22 = arith.constant 0 : index
      %25 = vector.load %arg8[%c0_21, %c0_22] : memref<1x256xf32, #tpu.memory_space<vmem>>, vector<1x256xf32>
      %cst_23 = arith.constant dense<0.000000e+00> : vector<32xf32>
      %26 = vector.multi_reduction <add>, %23, %cst_23 [1] : vector<32x256xf32> to vector<32xf32>
      %27 = vector.shape_cast %26 : vector<32xf32> to vector<32x1xf32>
      %cst_24 = arith.constant 2.560000e+02 : f32
      %28 = vector.broadcast %cst_24 : f32 to vector<32x1xf32>
      %29 = arith.divf %27, %28 : vector<32x1xf32>
      %30 = vector.broadcast %29 : vector<32x1xf32> to vector<32x256xf32>
      %31 = arith.subf %23, %30 : vector<32x256xf32>
      %32 = arith.mulf %31, %31 : vector<32x256xf32>
      %cst_25 = arith.constant dense<0.000000e+00> : vector<32xf32>
      %33 = vector.multi_reduction <add>, %32, %cst_25 [1] : vector<32x256xf32> to vector<32xf32>
      %34 = vector.shape_cast %33 : vector<32xf32> to vector<32x1xf32>
      %cst_26 = arith.constant 2.560000e+02 : f32
      %35 = vector.broadcast %cst_26 : f32 to vector<32x1xf32>
      %36 = arith.divf %34, %35 : vector<32x1xf32>
      %37 = vector.broadcast %29 : vector<32x1xf32> to vector<32x256xf32>
      %38 = arith.subf %23, %37 : vector<32x256xf32>
      %cst_27 = arith.constant 9.99999974E-6 : f32
      %39 = vector.broadcast %cst_27 : f32 to vector<32x1xf32>
      %40 = arith.addf %36, %39 : vector<32x1xf32>
      %41 = math.rsqrt %40 : vector<32x1xf32>
      %42 = vector.broadcast %41 : vector<32x1xf32> to vector<32x256xf32>
      %43 = arith.mulf %38, %42 : vector<32x256xf32>
      %44 = vector.broadcast %24 : vector<1x256xf32> to vector<32x256xf32>
      %45 = arith.mulf %43, %44 : vector<32x256xf32>
      %46 = vector.broadcast %25 : vector<1x256xf32> to vector<32x256xf32>
      %47 = arith.addf %45, %46 : vector<32x256xf32>
      %c0_28 = arith.constant 0 : index
      %c0_29 = arith.constant 0 : index
      %48 = vector.load %arg9[%c0_28, %c0_29] : memref<32x256xf32, #tpu.memory_space<vmem>>, vector<32x256xf32>
      tpu.vector_store %arg9[%c0_28, %c0_29], %47 {strides = array<i32>} : memref<32x256xf32, #tpu.memory_space<vmem>>, vector<32x256xf32>,
    } else {
    }
    return
  }
  func.func @transform_0(%arg0: i32, %arg1: i32) -> (i32, i32) {
    %c0_i32 = arith.constant 0 : i32
    %c0_i32_0 = arith.constant 0 : i32
    return %arg0, %c0_i32 : i32, i32
  }
  func.func @transform_1(%arg0: i32, %arg1: i32) -> (i32, i32) {
    %c0_i32 = arith.constant 0 : i32
    %c0_i32_0 = arith.constant 0 : i32
    return %c0_i32, %arg1 : i32, i32
  }
  func.func @transform_2(%arg0: i32, %arg1: i32) -> (i32, i32) {
    %c0_i32 = arith.constant 0 : i32
    %c0_i32_0 = arith.constant 0 : i32
    return %c0_i32, %arg1 : i32, i32
  }
  func.func @transform_3(%arg0: i32, %arg1: i32) -> (i32, i32) {
    %c0_i32 = arith.constant 0 : i32
    %c0_i32_0 = arith.constant 0 : i32
    return %arg1, %c0_i32 : i32, i32
  }
  func.func @transform_4(%arg0: i32, %arg1: i32) -> (i32, i32) {
    %c0_i32 = arith.constant 0 : i32
    %c0_i32_0 = arith.constant 0 : i32
    %c0_i32_1 = arith.constant 0 : i32
    return %c0_i32, %c0_i32_0 : i32, i32
  }
  func.func @transform_5(%arg0: i32, %arg1: i32) -> (i32, i32) {
    %c0_i32 = arith.constant 0 : i32
    %c0_i32_0 = arith.constant 0 : i32
    %c0_i32_1 = arith.constant 0 : i32
    return %c0_i32, %c0_i32_0 : i32, i32
  }
  func.func @transform_6(%arg0: i32, %arg1: i32) -> (i32, i32) {
    %c0_i32 = arith.constant 0 : i32
    %c0_i32_0 = arith.constant 0 : i32
    %c0_i32_1 = arith.constant 0 : i32
    return %c0_i32, %c0_i32_0 : i32, i32
  }
  func.func @transform_7(%arg0: i32, %arg1: i32) -> (i32, i32) {
    %c0_i32 = arith.constant 0 : i32
    %c0_i32_0 = arith.constant 0 : i32
    return %arg0, %c0_i32 : i32, i32
  }
}

module attributes {stable_mosaic.version = 11 : i64} {
  func.func @_attn_block_kernel(%arg0: i32, %arg1: i32, %arg2: i32, %arg3: memref<1x32x256xf32, #tpu.memory_space<vmem>>, %arg4: memref<1x64x256xf32, #tpu.memory_space<vmem>>, %arg5: memref<1x256x128xf32, #tpu.memory_space<vmem>>, %arg6: memref<1x1x128xf32, #tpu.memory_space<vmem>>, %arg7: memref<1x256x256xf32, #tpu.memory_space<vmem>>, %arg8: memref<1x1x256xf32, #tpu.memory_space<vmem>>, %arg9: memref<1x128x256xf32, #tpu.memory_space<vmem>>, %arg10: memref<1x256xf32, #tpu.memory_space<vmem>>, %arg11: memref<1x256xf32, #tpu.memory_space<vmem>>, %arg12: memref<1x256xf32, #tpu.memory_space<vmem>>, %arg13: memref<1x32x256xf32, #tpu.memory_space<vmem>>, %arg14: memref<32x256xf32, #tpu.memory_space<vmem>>) attributes {dimension_semantics = [#tpu.dimension_semantics<parallel>, #tpu.dimension_semantics<parallel>, #tpu.dimension_semantics<arbitrary>], iteration_bounds = array<i64: 2, 2, 2>, scalar_prefetch = 0 : i64, scratch_operands = 1 : i64, tpu.core_type = #tpu.core_type<tc>, window_params = [{transform_indices = @transform_0, window_bounds = array<i64: 1, 32, 256>}, {transform_indices = @transform_1, window_bounds = array<i64: 1, 64, 256>}, {transform_indices = @transform_2, window_bounds = array<i64: 1, 256, 128>}, {transform_indices = @transform_3, window_bounds = array<i64: 1, 1, 128>}, {transform_indices = @transform_4, window_bounds = array<i64: 1, 256, 256>}, {transform_indices = @transform_5, window_bounds = array<i64: 1, 1, 256>}, {transform_indices = @transform_6, window_bounds = array<i64: 1, 128, 256>}, {pipeline_mode = #tpu.pipeline_mode<synchronous>, transform_indices = @transform_7, window_bounds = array<i64: 1, 256>}, {pipeline_mode = #tpu.pipeline_mode<synchronous>, transform_indices = @transform_8, window_bounds = array<i64: 1, 256>}, {pipeline_mode = #tpu.pipeline_mode<synchronous>, transform_indices = @transform_9, window_bounds = array<i64: 1, 256>}, {transform_indices = @transform_10, window_bounds = array<i64: 1, 32, 256>}]} {
    %c0_i32 = arith.constant 0 : i32
    %0 = arith.cmpi eq, %arg2, %c0_i32 : i32
    %1 = arith.extui %0 : i1 to i32
    %c0_i32_0 = arith.constant 0 : i32
    %2 = arith.cmpi ne, %1, %c0_i32_0 : i32
    scf.if %2 {
      %cst_33 = arith.constant 0.000000e+00 : f32
      %46 = vector.broadcast %cst_33 : f32 to vector<32x256xf32>
      %c0_34 = arith.constant 0 : index
      %c0_35 = arith.constant 0 : index
      %47 = vector.load %arg14[%c0_34, %c0_35] : memref<32x256xf32, #tpu.memory_space<vmem>>, vector<32x256xf32>
      tpu.vector_store %arg14[%c0_34, %c0_35], %46 {strides = array<i32>} : memref<32x256xf32, #tpu.memory_space<vmem>>, vector<32x256xf32>,
    } else {
    }
    %c0 = arith.constant 0 : index
    %c0_1 = arith.constant 0 : index
    %c0_2 = arith.constant 0 : index
    %3 = vector.load %arg3[%c0, %c0_1, %c0_2] : memref<1x32x256xf32, #tpu.memory_space<vmem>>, vector<1x32x256xf32>
    %4 = vector.shape_cast %3 : vector<1x32x256xf32> to vector<32x256xf32>
    %c0_3 = arith.constant 0 : index
    %c0_4 = arith.constant 0 : index
    %c0_5 = arith.constant 0 : index
    %5 = vector.load %arg4[%c0_3, %c0_4, %c0_5] : memref<1x64x256xf32, #tpu.memory_space<vmem>>, vector<1x64x256xf32>
    %6 = vector.shape_cast %5 : vector<1x64x256xf32> to vector<64x256xf32>
    %c0_6 = arith.constant 0 : index
    %c0_7 = arith.constant 0 : index
    %c0_8 = arith.constant 0 : index
    %7 = vector.load %arg5[%c0_6, %c0_7, %c0_8] : memref<1x256x128xf32, #tpu.memory_space<vmem>>, vector<1x256x128xf32>
    %8 = vector.shape_cast %7 : vector<1x256x128xf32> to vector<256x128xf32>
    %cst = arith.constant dense<0.000000e+00> : vector<32x128xf32>
    %9 = tpu.matmul %4, %8, %cst {dimension_numbers = #tpu.dot_dimension_numbers<[1], [0], [0], [1], [0, 0, 1, 1], [], []>} : vector<32x256xf32>, vector<256x128xf32>, vector<32x128xf32> -> vector<32x128xf32>
    %c0_9 = arith.constant 0 : index
    %c0_10 = arith.constant 0 : index
    %c0_11 = arith.constant 0 : index
    %10 = vector.load %arg6[%c0_9, %c0_10, %c0_11] : memref<1x1x128xf32, #tpu.memory_space<vmem>>, vector<1x1x128xf32>
    %11 = vector.shape_cast %10 : vector<1x1x128xf32> to vector<1x128xf32>
    %12 = vector.broadcast %11 : vector<1x128xf32> to vector<32x128xf32>
    %13 = arith.addf %9, %12 : vector<32x128xf32>
    %c0_12 = arith.constant 0 : index
    %c0_13 = arith.constant 0 : index
    %c0_14 = arith.constant 0 : index
    %14 = vector.load %arg7[%c0_12, %c0_13, %c0_14] : memref<1x256x256xf32, #tpu.memory_space<vmem>>, vector<1x256x256xf32>
    %15 = vector.shape_cast %14 : vector<1x256x256xf32> to vector<256x256xf32>
    %cst_15 = arith.constant dense<0.000000e+00> : vector<64x256xf32>
    %16 = tpu.matmul %6, %15, %cst_15 {dimension_numbers = #tpu.dot_dimension_numbers<[1], [0], [0], [1], [0, 0, 1, 1], [], []>} : vector<64x256xf32>, vector<256x256xf32>, vector<64x256xf32> -> vector<64x256xf32>
    %c0_16 = arith.constant 0 : index
    %c0_17 = arith.constant 0 : index
    %c0_18 = arith.constant 0 : index
    %17 = vector.load %arg8[%c0_16, %c0_17, %c0_18] : memref<1x1x256xf32, #tpu.memory_space<vmem>>, vector<1x1x256xf32>
    %18 = vector.shape_cast %17 : vector<1x1x256xf32> to vector<1x256xf32>
    %19 = vector.broadcast %18 : vector<1x256xf32> to vector<64x256xf32>
    %20 = arith.addf %16, %19 : vector<64x256xf32>
    %21 = vector.extract_strided_slice %20 {offsets = [0, 0], sizes = [64, 128], strides = [1, 1]} : vector<64x256xf32> to vector<64x128xf32>
    %22 = vector.extract_strided_slice %20 {offsets = [0, 128], sizes = [64, 128], strides = [1, 1]} : vector<64x256xf32> to vector<64x128xf32>
    %cst_19 = arith.constant 0.0883883461 : f32
    %23 = vector.broadcast %cst_19 : f32 to vector<32x128xf32>
    %24 = arith.mulf %13, %23 : vector<32x128xf32>
    %cst_20 = arith.constant dense<0.000000e+00> : vector<32x64xf32>
    %25 = tpu.matmul %24, %21, %cst_20 {dimension_numbers = #tpu.dot_dimension_numbers<[1], [1], [0], [0], [0, 0, 1, 0], [], []>} : vector<32x128xf32>, vector<64x128xf32>, vector<32x64xf32> -> vector<32x64xf32>
    %cst_21 = arith.constant dense<0xFF800000> : vector<32xf32>
    %26 = vector.multi_reduction <maximumf>, %25, %cst_21 [1] : vector<32x64xf32> to vector<32xf32>
    %27 = vector.shape_cast %26 : vector<32xf32> to vector<32x1xf32>
    %28 = vector.broadcast %27 : vector<32x1xf32> to vector<32x64xf32>
    %29 = arith.subf %25, %28 : vector<32x64xf32>
    %30 = math.exp %29 : vector<32x64xf32>
    %cst_22 = arith.constant dense<0.000000e+00> : vector<32xf32>
    %31 = vector.multi_reduction <add>, %30, %cst_22 [1] : vector<32x64xf32> to vector<32xf32>
    %32 = vector.shape_cast %31 : vector<32xf32> to vector<32x1xf32>
    %cst_23 = arith.constant dense<0.000000e+00> : vector<32x128xf32>
    %33 = tpu.matmul %30, %22, %cst_23 {dimension_numbers = #tpu.dot_dimension_numbers<[1], [0], [0], [1], [0, 0, 1, 1], [], []>} : vector<32x64xf32>, vector<64x128xf32>, vector<32x128xf32> -> vector<32x128xf32>
    %34 = tpu.reciprocal %32 {approx = true} : vector<32x1xf32> -> vector<32x1xf32>
    %35 = vector.broadcast %34 : vector<32x1xf32> to vector<32x128xf32>
    %36 = arith.mulf %33, %35 : vector<32x128xf32>
    %c0_24 = arith.constant 0 : index
    %c0_25 = arith.constant 0 : index
    %37 = vector.load %arg14[%c0_24, %c0_25] : memref<32x256xf32, #tpu.memory_space<vmem>>, vector<32x256xf32>
    %c0_26 = arith.constant 0 : index
    %c0_27 = arith.constant 0 : index
    %c0_28 = arith.constant 0 : index
    %38 = vector.load %arg9[%c0_26, %c0_27, %c0_28] : memref<1x128x256xf32, #tpu.memory_space<vmem>>, vector<1x128x256xf32>
    %39 = vector.shape_cast %38 : vector<1x128x256xf32> to vector<128x256xf32>
    %cst_29 = arith.constant dense<0.000000e+00> : vector<32x256xf32>
    %40 = tpu.matmul %36, %39, %cst_29 {dimension_numbers = #tpu.dot_dimension_numbers<[1], [0], [0], [1], [0, 0, 1, 1], [], []>} : vector<32x128xf32>, vector<128x256xf32>, vector<32x256xf32> -> vector<32x256xf32>
    %41 = arith.addf %37, %40 : vector<32x256xf32>
    %c0_30 = arith.constant 0 : index
    %c0_31 = arith.constant 0 : index
    %42 = vector.load %arg14[%c0_30, %c0_31] : memref<32x256xf32, #tpu.memory_space<vmem>>, vector<32x256xf32>
    tpu.vector_store %arg14[%c0_30, %c0_31], %41 {strides = array<i32>} : memref<32x256xf32, #tpu.memory_space<vmem>>, vector<32x256xf32>,
    %c1_i32 = arith.constant 1 : i32
    %43 = arith.cmpi eq, %arg2, %c1_i32 : i32
    %44 = arith.extui %43 : i1 to i32
    %c0_i32_32 = arith.constant 0 : i32
    %45 = arith.cmpi ne, %44, %c0_i32_32 : i32
    scf.if %45 {
      %c0_33 = arith.constant 0 : index
      %c0_34 = arith.constant 0 : index
      %46 = vector.load %arg14[%c0_33, %c0_34] : memref<32x256xf32, #tpu.memory_space<vmem>>, vector<32x256xf32>
      %47 = arith.addf %4, %46 : vector<32x256xf32>
      %c0_35 = arith.constant 0 : index
      %c0_36 = arith.constant 0 : index
      %48 = vector.load %arg10[%c0_35, %c0_36] : memref<1x256xf32, #tpu.memory_space<vmem>>, vector<1x256xf32>
      %49 = vector.broadcast %48 : vector<1x256xf32> to vector<32x256xf32>
      %50 = arith.addf %47, %49 : vector<32x256xf32>
      %c0_37 = arith.constant 0 : index
      %c0_38 = arith.constant 0 : index
      %51 = vector.load %arg11[%c0_37, %c0_38] : memref<1x256xf32, #tpu.memory_space<vmem>>, vector<1x256xf32>
      %c0_39 = arith.constant 0 : index
      %c0_40 = arith.constant 0 : index
      %52 = vector.load %arg12[%c0_39, %c0_40] : memref<1x256xf32, #tpu.memory_space<vmem>>, vector<1x256xf32>
      %cst_41 = arith.constant dense<0.000000e+00> : vector<32xf32>
      %53 = vector.multi_reduction <add>, %50, %cst_41 [1] : vector<32x256xf32> to vector<32xf32>
      %54 = vector.shape_cast %53 : vector<32xf32> to vector<32x1xf32>
      %cst_42 = arith.constant 2.560000e+02 : f32
      %55 = vector.broadcast %cst_42 : f32 to vector<32x1xf32>
      %56 = arith.divf %54, %55 : vector<32x1xf32>
      %57 = vector.broadcast %56 : vector<32x1xf32> to vector<32x256xf32>
      %58 = arith.subf %50, %57 : vector<32x256xf32>
      %59 = arith.mulf %58, %58 : vector<32x256xf32>
      %cst_43 = arith.constant dense<0.000000e+00> : vector<32xf32>
      %60 = vector.multi_reduction <add>, %59, %cst_43 [1] : vector<32x256xf32> to vector<32xf32>
      %61 = vector.shape_cast %60 : vector<32xf32> to vector<32x1xf32>
      %cst_44 = arith.constant 2.560000e+02 : f32
      %62 = vector.broadcast %cst_44 : f32 to vector<32x1xf32>
      %63 = arith.divf %61, %62 : vector<32x1xf32>
      %64 = vector.broadcast %56 : vector<32x1xf32> to vector<32x256xf32>
      %65 = arith.subf %50, %64 : vector<32x256xf32>
      %cst_45 = arith.constant 9.99999974E-6 : f32
      %66 = vector.broadcast %cst_45 : f32 to vector<32x1xf32>
      %67 = arith.addf %63, %66 : vector<32x1xf32>
      %68 = math.rsqrt %67 : vector<32x1xf32>
      %69 = vector.broadcast %68 : vector<32x1xf32> to vector<32x256xf32>
      %70 = arith.mulf %65, %69 : vector<32x256xf32>
      %71 = vector.broadcast %51 : vector<1x256xf32> to vector<32x256xf32>
      %72 = arith.mulf %70, %71 : vector<32x256xf32>
      %73 = vector.broadcast %52 : vector<1x256xf32> to vector<32x256xf32>
      %74 = arith.addf %72, %73 : vector<32x256xf32>
      %c0_46 = arith.constant 0 : index
      %c0_47 = arith.constant 0 : index
      %c0_48 = arith.constant 0 : index
      %75 = vector.load %arg13[%c0_46, %c0_47, %c0_48] : memref<1x32x256xf32, #tpu.memory_space<vmem>>, vector<1x32x256xf32>
      %76 = vector.shape_cast %75 : vector<1x32x256xf32> to vector<32x256xf32>
      %77 = vector.shape_cast %74 : vector<32x256xf32> to vector<1x32x256xf32>
      tpu.vector_store %arg13[%c0_46, %c0_47, %c0_48], %77 {strides = array<i32>} : memref<1x32x256xf32, #tpu.memory_space<vmem>>, vector<1x32x256xf32>,
    } else {
    }
    return
  }
  func.func @transform_0(%arg0: i32, %arg1: i32, %arg2: i32) -> (i32, i32, i32) {
    %c0_i32 = arith.constant 0 : i32
    %c0_i32_0 = arith.constant 0 : i32
    return %arg0, %arg1, %c0_i32 : i32, i32, i32
  }
  func.func @transform_1(%arg0: i32, %arg1: i32, %arg2: i32) -> (i32, i32, i32) {
    %c0_i32 = arith.constant 0 : i32
    %c0_i32_0 = arith.constant 0 : i32
    %c0_i32_1 = arith.constant 0 : i32
    return %arg0, %c0_i32, %c0_i32_0 : i32, i32, i32
  }
  func.func @transform_2(%arg0: i32, %arg1: i32, %arg2: i32) -> (i32, i32, i32) {
    %c0_i32 = arith.constant 0 : i32
    %c0_i32_0 = arith.constant 0 : i32
    %c0_i32_1 = arith.constant 0 : i32
    return %arg2, %c0_i32, %c0_i32_0 : i32, i32, i32
  }
  func.func @transform_3(%arg0: i32, %arg1: i32, %arg2: i32) -> (i32, i32, i32) {
    %c0_i32 = arith.constant 0 : i32
    %c0_i32_0 = arith.constant 0 : i32
    %c0_i32_1 = arith.constant 0 : i32
    return %arg2, %c0_i32, %c0_i32_0 : i32, i32, i32
  }
  func.func @transform_4(%arg0: i32, %arg1: i32, %arg2: i32) -> (i32, i32, i32) {
    %c0_i32 = arith.constant 0 : i32
    %c0_i32_0 = arith.constant 0 : i32
    %c0_i32_1 = arith.constant 0 : i32
    return %arg2, %c0_i32, %c0_i32_0 : i32, i32, i32
  }
  func.func @transform_5(%arg0: i32, %arg1: i32, %arg2: i32) -> (i32, i32, i32) {
    %c0_i32 = arith.constant 0 : i32
    %c0_i32_0 = arith.constant 0 : i32
    %c0_i32_1 = arith.constant 0 : i32
    return %arg2, %c0_i32, %c0_i32_0 : i32, i32, i32
  }
  func.func @transform_6(%arg0: i32, %arg1: i32, %arg2: i32) -> (i32, i32, i32) {
    %c0_i32 = arith.constant 0 : i32
    %c0_i32_0 = arith.constant 0 : i32
    %c0_i32_1 = arith.constant 0 : i32
    return %arg2, %c0_i32, %c0_i32_0 : i32, i32, i32
  }
  func.func @transform_7(%arg0: i32, %arg1: i32, %arg2: i32) -> (i32, i32) {
    %c0_i32 = arith.constant 0 : i32
    %c0_i32_0 = arith.constant 0 : i32
    %c0_i32_1 = arith.constant 0 : i32
    return %c0_i32, %c0_i32_0 : i32, i32
  }
  func.func @transform_8(%arg0: i32, %arg1: i32, %arg2: i32) -> (i32, i32) {
    %c0_i32 = arith.constant 0 : i32
    %c0_i32_0 = arith.constant 0 : i32
    %c0_i32_1 = arith.constant 0 : i32
    return %c0_i32, %c0_i32_0 : i32, i32
  }
  func.func @transform_9(%arg0: i32, %arg1: i32, %arg2: i32) -> (i32, i32) {
    %c0_i32 = arith.constant 0 : i32
    %c0_i32_0 = arith.constant 0 : i32
    %c0_i32_1 = arith.constant 0 : i32
    return %c0_i32, %c0_i32_0 : i32, i32
  }
  func.func @transform_10(%arg0: i32, %arg1: i32, %arg2: i32) -> (i32, i32, i32) {
    %c0_i32 = arith.constant 0 : i32
    %c0_i32_0 = arith.constant 0 : i32
    return %arg0, %arg1, %c0_i32 : i32, i32, i32
  }
}

</mosaic_0001>

<llo_original>
// kernel: tpu_custom_call.1
$region0: #{tpu_custom_call.1}
  #allocation0 [shape = 'u32[]', space=smem, size = 0x4, offset = 0x4, fixed_abs, tag = 'smem constant byte address 0x4 - core index']
  #allocation1 [shape = 'u32[144,128]{1,0:T(1,128)}', space=vmem, size = 0x12000, scoped, tag = 'internal scratch']
  %s0 = inlined_call_operand.hbm [shape: f32[8,128], index: 0, kind: input, shape index: {}]
  %s1 = inlined_call_operand.hbm [shape: f32[16,128], index: 1, kind: output, shape index: {}]
  %s2 = sld [smem:[#allocation0]]
  $region41: #{tpu_custom_call.1} parent=0
    _
  %s4 = ssub.s32 1, %s2
  %s5 = scalar_select 0, %s4, %s2
  $region1: #{tpu_custom_call.1} parent=0
    #allocation2 [shape = 'u8[4096]{0}', space=vmem, size = 0x1000, scoped, tag = 'input window, operand 0, single buffered']
    #allocation3 [shape = 's32[2]{0}', space=sflag, size = 0x8, scoped, tag = 'scoped memory for tpu_custom_call.1']
    #allocation4 [shape = 's32[2]{0}', space=sflag, size = 0x8, scoped, tag = 'scoped memory for tpu_custom_call.1']
    #allocation5 [shape = 'u8[8192]{0}', space=vmem, size = 0x2000, scoped, tag = 'output window, operand 0']
    %6 = vsyncpa [#allocation3], 0
    %7 = vsyncpa [#allocation4], 0
    %s8 = scalar_lea.sflag [#allocation4], 1
    %9 = vsyncpa %s8, 0
    loop: start=0, step=1, limit=4
    $region2: #{tpu_custom_call.1} parent=1 // loop_pre_header
      _
    $region3: #{tpu_custom_call.1} parent=1 // loop_header
      %s11 = sphi 0, %s15
      %p12 = scmp.ge.s32.totalorder %s11, 4
      %s19 = sphi 0, %s19
      %s21 = sphi 0, %s19
      %s22 = sphi 0, %s21
      %s36 = sphi 0, %s22
      %s42 = sphi 0, %s44
      %s45 = sphi 0, %s42
      %s46 = sphi 0, %s45
      %s62 = sphi 0, %s46
    $region4: #{tpu_custom_call.1} parent=1 // loop_header_branch
      %14 = sbr.rel (%p12) target = $region8
    $region5: #{tpu_custom_call.1} parent=1 // loop_body
      %s16 = ssub.s32 %s11, 1
      %s17 = ssub.s32 %s11, 2
      %s18 = sadd.s32 %s11, 1
      %s20 = sadd.s32 %s19, 1
      %p23 = scmp.eq.s32.totalorder %s11, 1
      %p24 = scmp.ne.s32.totalorder %s19, %s21
      %p25 = scmp.eq.s32.totalorder %s11, 0
      %p26 = por %p24, %p25
      %p27 = scmp.ne.s32.totalorder %s19, %s21
      %p28 = scmp.eq.s32.totalorder %s16, 1
      %p29 = por %p27, %p28
      %p30 = scmp.ne.s32.totalorder %s21, %s22
      %p31 = scmp.eq.s32.totalorder %s16, 0
      %p32 = por %p30, %p31
      %p33 = scmp.ne.s32.totalorder %s21, %s22
      %p34 = scmp.eq.s32.totalorder %s17, 1
      %p35 = por %p33, %p34
      %p37 = scmp.ne.s32.totalorder %s22, %s36
      %p38 = scmp.eq.s32.totalorder %s17, 0
      %p39 = por %p37, %p38
      %s40 = ssub.s32 %s11, %s18
      %p41 = scmp.eq.s32.totalorder %s40, 0
      %s43 = sadd.s32 %s42, 1
      %s44 = scalar_select %p41, %s42, %s43
      %p47 = pneg %p41
      %p48 = scmp.eq.s32.totalorder %s11, 1
      %p49 = por %p47, %p48
      %p50 = scmp.ne.s32.totalorder %s42, %s45
      %p51 = scmp.eq.s32.totalorder %s11, 0
      %p52 = por %p50, %p51
      %p53 = scmp.ne.s32.totalorder %s42, %s45
      %p54 = scmp.eq.s32.totalorder %s16, 1
      %p55 = por %p53, %p54
      %p56 = scmp.ne.s32.totalorder %s45, %s46
      %p57 = scmp.eq.s32.totalorder %s16, 0
      %p58 = por %p56, %p57
      %p59 = scmp.ne.s32.totalorder %s45, %s46
      %p60 = scmp.eq.s32.totalorder %s17, 1
      %p61 = por %p59, %p60
      %p63 = scmp.ne.s32.totalorder %s46, %s62
      %p64 = scmp.eq.s32.totalorder %s17, 0
      %p65 = por %p63, %p64
      %p66 = scmp.le.s32.totalorder 1, %s11
      %p67 = scmp.lt.s32.totalorder %s11, 3
      %p68 = pnand %p66, %p67
      %p69 = pneg %p68
      // Predicated region
      $region9: #{tpu_custom_call.1} parent=5 // pred_check
        _
      $region10: #{tpu_custom_call.1} parent=5 // pred_check_branch
        %71 = sbr.rel (%p68) target = $region12
      $region11: #{tpu_custom_call.1} parent=5 // pred_region
        %s72 = ssub.s32 %s11, 1
        // Predicated region
        $region13: #{tpu_custom_call.1} parent=11 // pred_check
          %p73 = pneg %p32
        $region14: #{tpu_custom_call.1} parent=11 // pred_check_branch
          %75 = sbr.rel (%p73) target = $region16
        $region15: #{tpu_custom_call.1} parent=11 // pred_region
          %s77 = ssub.s32 128, 128
          %78 = vsyncadd [#allocation3], %s77
          %s80 = sshll.u32 [#allocation2], 4
          %s81 = int_to_ptr.vmem [resolvable:$true] %s80
          %83 = dma.hbm_to_vmem [thread:$0]  %s0, 128, %s81, [#allocation3]
        $region16: #{tpu_custom_call.1} parent=11 // pred_fallthru
          _
      $region12: #{tpu_custom_call.1} parent=5 // pred_fallthru
        _
      %p84 = scmp.lt.s32.totalorder %s11, 2
      // Predicated region
      $region17: #{tpu_custom_call.1} parent=5 // pred_check
        %p85 = pneg %p84
      $region18: #{tpu_custom_call.1} parent=5 // pred_check_branch
        %87 = sbr.rel (%p85) target = $region20
      $region19: #{tpu_custom_call.1} parent=5 // pred_region
        _
      $region20: #{tpu_custom_call.1} parent=5 // pred_fallthru
        _
      %p88 = scmp.le.s32.totalorder 1, %s11
      %p89 = scmp.lt.s32.totalorder %s11, 3
      %p90 = pnand %p88, %p89
      %p91 = pneg %p90
      // Predicated region
      $region21: #{tpu_custom_call.1} parent=5 // pred_check
        _
      $region22: #{tpu_custom_call.1} parent=5 // pred_check_branch
        %93 = sbr.rel (%p90) target = $region24
      $region23: #{tpu_custom_call.1} parent=5 // pred_region
        %s94 = ssub.s32 %s11, 1
        // Predicated region
        $region25: #{tpu_custom_call.1} parent=23 // pred_check
          %p95 = pneg %p32
        $region26: #{tpu_custom_call.1} parent=23 // pred_check_branch
          %97 = sbr.rel (%p95) target = $region28
        $region27: #{tpu_custom_call.1} parent=23 // pred_region
          %98 = dma.done [#allocation3], 128
        $region28: #{tpu_custom_call.1} parent=23 // pred_fallthru
          _
        %p99 = pneg %p32
        %p100 = pneg %p29
        %p101 = pneg %p58
        %p102 = pneg %p55
        %s103 = sand.u32 %s45, 1
        %s104 = scalar_lea.sflag [#allocation4], %s103
        %s105 = sand.u32 %s45, 1
        %s106 = smul.addr %s105, 8
        %s107 = scalar_lea.vmem [#allocation5], %s106
        %v108 = vld [vmem:[#allocation2] sm:$0xff]
        %109 = vst [vmem:[%s107] sm:$0xff] %v108
        %s110 = sand.u32 %s45, 1
        %s111 = scalar_lea.sflag [#allocation4], %s110
        %s112 = sand.u32 %s45, 1
        %s113 = smul.addr %s112, 8
        %s114 = scalar_lea.vmem [#allocation5], %s113
        // Predicated region
        $region29: #{tpu_custom_call.1} parent=23 // pred_check
          %p115 = pneg %p55
        $region30: #{tpu_custom_call.1} parent=23 // pred_check_branch
          %117 = sbr.rel (%p115) target = $region32
        $region31: #{tpu_custom_call.1} parent=23 // pred_region
          %s119 = ssub.s32 128, 128
          %120 = vsyncadd %s111, %s119
          %s121 = smul.addr %s16, 128
          %s122 = scalar_lea.hbm %s1, %s121
          %s124 = sshll.u32 %s114, 4
          %s125 = int_to_ptr.vmem [resolvable:$true] %s124
          %127 = dma.vmem_to_hbm [thread:$0]  %s125, 128, %s122, %s111
        $region32: #{tpu_custom_call.1} parent=23 // pred_fallthru
          _
      $region24: #{tpu_custom_call.1} parent=5 // pred_fallthru
        _
      %p128 = scmp.le.s32.totalorder 2, %s11
      // Predicated region
      $region33: #{tpu_custom_call.1} parent=5 // pred_check
        %p129 = pneg %p128
      $region34: #{tpu_custom_call.1} parent=5 // pred_check_branch
        %131 = sbr.rel (%p129) target = $region36
      $region35: #{tpu_custom_call.1} parent=5 // pred_region
        %s132 = ssub.s32 %s11, 2
        // Predicated region
        $region37: #{tpu_custom_call.1} parent=35 // pred_check
          %p133 = pneg %p61
        $region38: #{tpu_custom_call.1} parent=35 // pred_check_branch
          %135 = sbr.rel (%p133) target = $region40
        $region39: #{tpu_custom_call.1} parent=35 // pred_region
          %s136 = sand.u32 %s46, 1
          %s137 = scalar_lea.sflag [#allocation4], %s136
          %s138 = sand.u32 %s46, 1
          %s139 = smul.addr %s138, 8
          %s140 = scalar_lea.vmem [#allocation5], %s139
          %141 = dma.done %s137, 128
        $region40: #{tpu_custom_call.1} parent=35 // pred_fallthru
          _
      $region36: #{tpu_custom_call.1} parent=5 // pred_fallthru
        _
    $region6: #{tpu_custom_call.1} parent=1 // loop_footer
      %s15 = sadd.s32 1, %s11
    $region7: #{tpu_custom_call.1} parent=1 // loop_footer_branch
      %10 = sbr.rel target = $region3
    $region8: #{tpu_custom_call.1} parent=1 // loop_exit
      _
    %142 = vsyncpa [#allocation3], 1
    %s143 = scalar_lea.sflag [#allocation3], 1
    %144 = vsyncpa %s143, 1
    %145 = vsyncpa [#allocation4], 1
    %s146 = scalar_lea.sflag [#allocation4], 1
    %147 = vsyncpa %s146, 1

// kernel: transformer_encoder.9
$region0: #{transformer_encoder.9}
  #allocation0 [shape = 'u32[]', space=smem, size = 0x4, offset = 0x4, fixed_abs, tag = 'smem constant byte address 0x4 - core index']
  #allocation1 [shape = 'u32[144,128]{1,0:T(1,128)}', space=vmem, size = 0x12000, scoped, tag = 'internal scratch']
  %s0 = inlined_call_operand.vmem [shape: f32[128,256], index: 0, kind: input, shape index: {}]
  %s1 = inlined_call_operand.vmem [shape: f32[1,256], index: 1, kind: input, shape index: {}]
  %s2 = inlined_call_operand.vmem [shape: f32[1,256], index: 2, kind: input, shape index: {}]
  %s3 = inlined_call_operand.vmem [shape: f32[256,128], index: 3, kind: input, shape index: {}]
  %s4 = inlined_call_operand.vmem [shape: f32[1,128], index: 4, kind: input, shape index: {}]
  %s5 = inlined_call_operand.vmem [shape: f32[128,128], index: 5, kind: output, shape index: {}]
  %s6 = sld [smem:[#allocation0]]
  $region53: #{transformer_encoder.9} parent=0
    _
  %s8 = ssub.s32 1, %s6
  %s9 = scalar_select 0, %s8, %s6
  loop: start=0, step=1, limit=6
  $region2: #{transformer_encoder.9} parent=0 // loop_pre_header
    _
  $region3: #{transformer_encoder.9} parent=0 // loop_header
    %s11 = sphi 0, %s15
    %p12 = scmp.ge.s32.totalorder %s11, 6
    %s21 = sphi 0, %s23
    %s24 = sphi 0, %s21
    %s25 = sphi 0, %s24
    %s41 = sphi 0, %s25
    %s45 = sphi 0, %s45
    %s47 = sphi 0, %s45
    %s48 = sphi 0, %s47
    %s62 = sphi 0, %s48
    %s66 = sphi 0, %s66
    %s68 = sphi 0, %s66
    %s69 = sphi 0, %s68
    %s83 = sphi 0, %s69
    %s87 = sphi 0, %s87
    %s89 = sphi 0, %s87
    %s90 = sphi 0, %s89
    %s104 = sphi 0, %s90
    %s108 = sphi 0, %s108
    %s110 = sphi 0, %s108
    %s111 = sphi 0, %s110
    %s125 = sphi 0, %s111
    %s131 = sphi 0, %s133
    %s134 = sphi 0, %s131
    %s135 = sphi 0, %s134
    %s151 = sphi 0, %s135
  $region4: #{transformer_encoder.9} parent=0 // loop_header_branch
    %14 = sbr.rel (%p12) target = $region8
  $region5: #{transformer_encoder.9} parent=0 // loop_body
    %s16 = ssub.s32 %s11, 1
    %s17 = ssub.s32 %s11, 2
    %s18 = sadd.s32 %s11, 1
    %s19 = ssub.s32 %s11, %s18
    %p20 = scmp.eq.s32.totalorder %s19, 0
    %s22 = sadd.s32 %s21, 1
    %s23 = scalar_select %p20, %s21, %s22
    %p26 = pneg %p20
    %p27 = scmp.eq.s32.totalorder %s11, 3
    %p28 = por %p26, %p27
    %p29 = scmp.ne.s32.totalorder %s21, %s24
    %p30 = scmp.eq.s32.totalorder %s11, 0
    %p31 = por %p29, %p30
    %p32 = scmp.ne.s32.totalorder %s21, %s24
    %p33 = scmp.eq.s32.totalorder %s16, 3
    %p34 = por %p32, %p33
    %p35 = scmp.ne.s32.totalorder %s24, %s25
    %p36 = scmp.eq.s32.totalorder %s16, 0
    %p37 = por %p35, %p36
    %p38 = scmp.ne.s32.totalorder %s24, %s25
    %p39 = scmp.eq.s32.totalorder %s17, 3
    %p40 = por %p38, %p39
    %p42 = scmp.ne.s32.totalorder %s25, %s41
    %p43 = scmp.eq.s32.totalorder %s17, 0
    %p44 = por %p42, %p43
    %s46 = sadd.s32 %s45, 1
    %p49 = scmp.eq.s32.totalorder %s11, 3
    %p50 = scmp.ne.s32.totalorder %s45, %s47
    %p51 = scmp.eq.s32.totalorder %s11, 0
    %p52 = por %p50, %p51
    %p53 = scmp.ne.s32.totalorder %s45, %s47
    %p54 = scmp.eq.s32.totalorder %s16, 3
    %p55 = por %p53, %p54
    %p56 = scmp.ne.s32.totalorder %s47, %s48
    %p57 = scmp.eq.s32.totalorder %s16, 0
    %p58 = por %p56, %p57
    %p59 = scmp.ne.s32.totalorder %s47, %s48
    %p60 = scmp.eq.s32.totalorder %s17, 3
    %p61 = por %p59, %p60
    %p63 = scmp.ne.s32.totalorder %s48, %s62
    %p64 = scmp.eq.s32.totalorder %s17, 0
    %p65 = por %p63, %p64
    %s67 = sadd.s32 %s66, 1
    %p70 = scmp.eq.s32.totalorder %s11, 3
    %p71 = scmp.ne.s32.totalorder %s66, %s68
    %p72 = scmp.eq.s32.totalorder %s11, 0
    %p73 = por %p71, %p72
    %p74 = scmp.ne.s32.totalorder %s66, %s68
    %p75 = scmp.eq.s32.totalorder %s16, 3
    %p76 = por %p74, %p75
    %p77 = scmp.ne.s32.totalorder %s68, %s69
    %p78 = scmp.eq.s32.totalorder %s16, 0
    %p79 = por %p77, %p78
    %p80 = scmp.ne.s32.totalorder %s68, %s69
    %p81 = scmp.eq.s32.totalorder %s17, 3
    %p82 = por %p80, %p81
    %p84 = scmp.ne.s32.totalorder %s69, %s83
    %p85 = scmp.eq.s32.totalorder %s17, 0
    %p86 = por %p84, %p85
    %s88 = sadd.s32 %s87, 1
    %p91 = scmp.eq.s32.totalorder %s11, 3
    %p92 = scmp.ne.s32.totalorder %s87, %s89
    %p93 = scmp.eq.s32.totalorder %s11, 0
    %p94 = por %p92, %p93
    %p95 = scmp.ne.s32.totalorder %s87, %s89
    %p96 = scmp.eq.s32.totalorder %s16, 3
    %p97 = por %p95, %p96
    %p98 = scmp.ne.s32.totalorder %s89, %s90
    %p99 = scmp.eq.s32.totalorder %s16, 0
    %p100 = por %p98, %p99
    %p101 = scmp.ne.s32.totalorder %s89, %s90
    %p102 = scmp.eq.s32.totalorder %s17, 3
    %p103 = por %p101, %p102
    %p105 = scmp.ne.s32.totalorder %s90, %s104
    %p106 = scmp.eq.s32.totalorder %s17, 0
    %p107 = por %p105, %p106
    %s109 = sadd.s32 %s108, 1
    %p112 = scmp.eq.s32.totalorder %s11, 3
    %p113 = scmp.ne.s32.totalorder %s108, %s110
    %p114 = scmp.eq.s32.totalorder %s11, 0
    %p115 = por %p113, %p114
    %p116 = scmp.ne.s32.totalorder %s108, %s110
    %p117 = scmp.eq.s32.totalorder %s16, 3
    %p118 = por %p116, %p117
    %p119 = scmp.ne.s32.totalorder %s110, %s111
    %p120 = scmp.eq.s32.totalorder %s16, 0
    %p121 = por %p119, %p120
    %p122 = scmp.ne.s32.totalorder %s110, %s111
    %p123 = scmp.eq.s32.totalorder %s17, 3
    %p124 = por %p122, %p123
    %p126 = scmp.ne.s32.totalorder %s111, %s125
    %p127 = scmp.eq.s32.totalorder %s17, 0
    %p128 = por %p126, %p127
    %s129 = ssub.s32 %s11, %s18
    %p130 = scmp.eq.s32.totalorder %s129, 0
    %s132 = sadd.s32 %s131, 1
    %s133 = scalar_select %p130, %s131, %s132
    %p136 = pneg %p130
    %p137 = scmp.eq.s32.totalorder %s11, 3
    %p138 = por %p136, %p137
    %p139 = scmp.ne.s32.totalorder %s131, %s134
    %p140 = scmp.eq.s32.totalorder %s11, 0
    %p141 = por %p139, %p140
    %p142 = scmp.ne.s32.totalorder %s131, %s134
    %p143 = scmp.eq.s32.totalorder %s16, 3
    %p144 = por %p142, %p143
    %p145 = scmp.ne.s32.totalorder %s134, %s135
    %p146 = scmp.eq.s32.totalorder %s16, 0
    %p147 = por %p145, %p146
    %p148 = scmp.ne.s32.totalorder %s134, %s135
    %p149 = scmp.eq.s32.totalorder %s17, 3
    %p150 = por %p148, %p149
    %p152 = scmp.ne.s32.totalorder %s135, %s151
    %p153 = scmp.eq.s32.totalorder %s17, 0
    %p154 = por %p152, %p153
    %p155 = scmp.le.s32.totalorder 1, %s11
    %p156 = scmp.lt.s32.totalorder %s11, 5
    %p157 = pnand %p155, %p156
    %p158 = pneg %p157
    // Predicated region
    $region9: #{transformer_encoder.9} parent=5 // pred_check
      _
    $region10: #{transformer_encoder.9} parent=5 // pred_check_branch
      %160 = sbr.rel (%p157) target = $region12
    $region11: #{transformer_encoder.9} parent=5 // pred_region
      %s161 = ssub.s32 %s11, 1
      // Predicated region
      $region13: #{transformer_encoder.9} parent=11 // pred_check
        %p162 = pneg %p58
      $region14: #{transformer_encoder.9} parent=11 // pred_check_branch
        %164 = sbr.rel (%p162) target = $region16
      $region15: #{transformer_encoder.9} parent=11 // pred_region
        _
      $region16: #{transformer_encoder.9} parent=11 // pred_fallthru
        _
      // Predicated region
      $region17: #{transformer_encoder.9} parent=11 // pred_check
        %p165 = pneg %p79
      $region18: #{transformer_encoder.9} parent=11 // pred_check_branch
        %167 = sbr.rel (%p165) target = $region20
      $region19: #{transformer_encoder.9} parent=11 // pred_region
        _
      $region20: #{transformer_encoder.9} parent=11 // pred_fallthru
        _
      // Predicated region
      $region21: #{transformer_encoder.9} parent=11 // pred_check
        %p168 = pneg %p100
      $region22: #{transformer_encoder.9} parent=11 // pred_check_branch
        %170 = sbr.rel (%p168) target = $region24
      $region23: #{transformer_encoder.9} parent=11 // pred_region
        _
      $region24: #{transformer_encoder.9} parent=11 // pred_fallthru
        _
      // Predicated region
      $region25: #{transformer_encoder.9} parent=11 // pred_check
        %p171 = pneg %p121
      $region26: #{transformer_encoder.9} parent=11 // pred_check_branch
        %173 = sbr.rel (%p171) target = $region28
      $region27: #{transformer_encoder.9} parent=11 // pred_region
        _
      $region28: #{transformer_encoder.9} parent=11 // pred_fallthru
        _
    $region12: #{transformer_encoder.9} parent=5 // pred_fallthru
      _
    %p174 = scmp.lt.s32.totalorder %s11, 4
    // Predicated region
    $region29: #{transformer_encoder.9} parent=5 // pred_check
      %p175 = pneg %p174
    $region30: #{transformer_encoder.9} parent=5 // pred_check_branch
      %177 = sbr.rel (%p175) target = $region32
    $region31: #{transformer_encoder.9} parent=5 // pred_region
      // Predicated region
      $region33: #{transformer_encoder.9} parent=31 // pred_check
        %p178 = pneg %p31
      $region34: #{transformer_encoder.9} parent=31 // pred_check_branch
        %180 = sbr.rel (%p178) target = $region36
      $region35: #{transformer_encoder.9} parent=31 // pred_region
        %s181 = smul.u32 4, %s11
        %p182 = scmp.lt.s32.totalorder %s181, 15
        %s183 = scalar_select %p182, %s181, 15
        %s184 = smul.addr %s183, 2
        %s185 = smul.addr %s184, 8
        %s186 = scalar_lea.vmem %s0, %s185
        %s187 = smul.u32 4, %s11
      $region36: #{transformer_encoder.9} parent=31 // pred_fallthru
        _
    $region32: #{transformer_encoder.9} parent=5 // pred_fallthru
      _
    %p188 = scmp.le.s32.totalorder 1, %s11
    %p189 = scmp.lt.s32.totalorder %s11, 5
    %p190 = pnand %p188, %p189
    %p191 = pneg %p190
    // Predicated region
    $region37: #{transformer_encoder.9} parent=5 // pred_check
      _
    $region38: #{transformer_encoder.9} parent=5 // pred_check_branch
      %193 = sbr.rel (%p190) target = $region40
    $region39: #{transformer_encoder.9} parent=5 // pred_region
      %s194 = ssub.s32 %s11, 1
      %s195 = smul.u32 4, %s16
      %p196 = scmp.lt.s32.totalorder %s195, 15
      %s197 = scalar_select %p196, %s195, 15
      %s198 = smul.addr %s197, 2
      %s199 = smul.addr %s198, 8
      %s200 = scalar_lea.vmem %s0, %s199
      %p201 = pneg %p37
      %p202 = pneg %p34
      %p203 = pneg %p58
      %p204 = pneg %p55
      %p205 = pneg %p79
      %p206 = pneg %p76
      %p207 = pneg %p100
      %p208 = pneg %p97
      %p209 = pneg %p121
      %p210 = pneg %p118
      %p211 = pneg %p147
      %p212 = pneg %p144
      %s213 = smul.u32 4, %s16
      %p214 = scmp.lt.s32.totalorder %s213, 15
      %s215 = scalar_select %p214, %s213, 15
      %s216 = smul.addr %s215, 8
      %s217 = scalar_lea.vmem %s5, %s216
      %s218 = smul.u32 4, %s16
      %p219 = scmp.lt.s32.totalorder %s218, 15
      %s220 = scalar_select %p219, %s218, 15
      %s221 = smul.addr %s220, 2
      %s222 = smul.addr %s221, 8
      %s223 = scalar_lea.vmem %s0, %s222
      %s224 = smul.u32 4, %s16
      %s225 = smul.u32 4, %s16
      %p226 = scmp.lt.s32.totalorder %s225, 15
      %s227 = scalar_select %p226, %s225, 15
      %s228 = smul.addr %s227, 8
      %s229 = scalar_lea.vmem %s5, %s228
      %s230 = smul.u32 4, %s16
      %v231 = vld [vmem:[%s223] sm:$0xff]
      %v232 = vld [vmem:[%s223 + $0x8] sm:$0xff]
      %v233 = vld [vmem:[%s223 + $0x10] sm:$0xff]
      %v234 = vld [vmem:[%s223 + $0x18] sm:$0xff]
      %v235 = vld [vmem:[%s223 + $0x20] sm:$0xff]
      %v236 = vld [vmem:[%s223 + $0x28] sm:$0xff]
      %v237 = vld [vmem:[%s223 + $0x30] sm:$0xff]
      %v238 = vld [vmem:[%s223 + $0x38] sm:$0xff]
      %v239 = vld [vmem:[%s1] sm:$0x3]
      %v240 = vld [vmem:[%s2] sm:$0x3]
      %v241 = vadd.f32 %v231, %v232
      %242 = vadd.xlane.f32.xlu0 %v241
      %v243 = vpop.xlane.xlu0 %242
      %v244 = vadd.f32 %v233, %v234
      %245 = vadd.xlane.f32.xlu0 %v244
      %v246 = vpop.xlane.xlu0 %245
      %v247 = vadd.f32 %v235, %v236
      %248 = vadd.xlane.f32.xlu0 %v247
      %v249 = vpop.xlane.xlu0 %248
      %v250 = vadd.f32 %v237, %v238
      %251 = vadd.xlane.f32.xlu0 %v250
      %v252 = vpop.xlane.xlu0 %251
      %v253 = vrcp.pop 256.0
      %v254 = vmul.f32 %v243, %v253
      %v255 = vmul.f32 %v246, %v253
      %v256 = vmul.f32 %v249, %v253
      %v257 = vmul.f32 %v252, %v253
      %v258 = vsub.f32 %v231, %v254
      %v259 = vsub.f32 %v232, %v254
      %v260 = vsub.f32 %v233, %v255
      %v261 = vsub.f32 %v234, %v255
      %v262 = vsub.f32 %v235, %v256
      %v263 = vsub.f32 %v236, %v256
      %v264 = vsub.f32 %v237, %v257
      %v265 = vsub.f32 %v238, %v257
      %v266 = vmul.f32 %v258, %v258
      %v267 = vmul.f32 %v259, %v259
      %v268 = vmul.f32 %v260, %v260
      %v269 = vmul.f32 %v261, %v261
      %v270 = vmul.f32 %v262, %v262
      %v271 = vmul.f32 %v263, %v263
      %v272 = vmul.f32 %v264, %v264
      %v273 = vmul.f32 %v265, %v265
      %v274 = vadd.f32 %v266, %v267
      %275 = vadd.xlane.f32.xlu0 %v274
      %v276 = vpop.xlane.xlu0 %275
      %v277 = vadd.f32 %v268, %v269
      %278 = vadd.xlane.f32.xlu0 %v277
      %v279 = vpop.xlane.xlu0 %278
      %v280 = vadd.f32 %v270, %v271
      %281 = vadd.xlane.f32.xlu0 %v280
      %v282 = vpop.xlane.xlu0 %281
      %v283 = vadd.f32 %v272, %v273
      %284 = vadd.xlane.f32.xlu0 %v283
      %v285 = vpop.xlane.xlu0 %284
      %v286 = vmul.f32 %v276, %v253
      %v287 = vmul.f32 %v279, %v253
      %v288 = vmul.f32 %v282, %v253
      %v289 = vmul.f32 %v285, %v253
      %v290 = vadd.f32 %v286, 1e-05
      %v291 = vadd.f32 %v287, 1e-05
      %v292 = vadd.f32 %v288, 1e-05
      %v293 = vadd.f32 %v289, 1e-05
      %v294 = vrsqrt.pop %v290
      %v295 = vrsqrt.pop %v291
      %v296 = vrsqrt.pop %v292
      %v297 = vrsqrt.pop %v293
      %v298 = vmul.f32 %v258, %v294
      %v299 = vmul.f32 %v259, %v294
      %v300 = vmul.f32 %v260, %v295
      %v301 = vmul.f32 %v261, %v295
      %v302 = vmul.f32 %v262, %v296
      %v303 = vmul.f32 %v263, %v296
      %v304 = vmul.f32 %v264, %v297
      %v305 = vmul.f32 %v265, %v297
      %v307 = vlaneseq
      %v308 = vshrl.u32 %v307, 7
      %v309 = vsub.s32 0, %v308
      %v310 = vrot.slane %v239, %v309
      %v311 = vlaneseq
      %v312 = vshrl.u32 %v311, 7
      %v313 = vsub.s32 1, %v312
      %v314 = vrot.slane %v239, %v313
      %v317 = vmul.f32 %v298, %v310
      %v318 = vmul.f32 %v299, %v314
      %v319 = vmul.f32 %v300, %v310
      %v320 = vmul.f32 %v301, %v314
      %v321 = vmul.f32 %v302, %v310
      %v322 = vmul.f32 %v303, %v314
      %v323 = vmul.f32 %v304, %v310
      %v324 = vmul.f32 %v305, %v314
      %v326 = vlaneseq
      %v327 = vshrl.u32 %v326, 7
      %v328 = vsub.s32 0, %v327
      %v329 = vrot.slane %v240, %v328
      %v330 = vlaneseq
      %v331 = vshrl.u32 %v330, 7
      %v332 = vsub.s32 1, %v331
      %v333 = vrot.slane %v240, %v332
      %v336 = vadd.f32 %v317, %v329
      %v337 = vadd.f32 %v318, %v333
      %v338 = vadd.f32 %v319, %v329
      %v339 = vadd.f32 %v320, %v333
      %v340 = vadd.f32 %v321, %v329
      %v341 = vadd.f32 %v322, %v333
      %v342 = vadd.f32 %v323, %v329
      %v343 = vadd.f32 %v324, %v333
      %v344 = vld [vmem:[%s3] sm:$0xff]
      %v345 = vld [vmem:[%s3 + $0x8] sm:$0xff]
      %v346 = vld [vmem:[%s3 + $0x10] sm:$0xff]
      %v347 = vld [vmem:[%s3 + $0x18] sm:$0xff]
      %v348 = vld [vmem:[%s3 + $0x20] sm:$0xff]
      %v349 = vld [vmem:[%s3 + $0x28] sm:$0xff]
      %v350 = vld [vmem:[%s3 + $0x30] sm:$0xff]
      %v351 = vld [vmem:[%s3 + $0x38] sm:$0xff]
      %v352 = vld [vmem:[%s3 + $0x40] sm:$0xff]
      %v353 = vld [vmem:[%s3 + $0x48] sm:$0xff]
      %v354 = vld [vmem:[%s3 + $0x50] sm:$0xff]
      %v355 = vld [vmem:[%s3 + $0x58] sm:$0xff]
      %v356 = vld [vmem:[%s3 + $0x60] sm:$0xff]
      %v357 = vld [vmem:[%s3 + $0x68] sm:$0xff]
      %v358 = vld [vmem:[%s3 + $0x70] sm:$0xff]
      %v359 = vld [vmem:[%s3 + $0x78] sm:$0xff]
      %v360 = vld [vmem:[%s3 + $0x80] sm:$0xff]
      %v361 = vld [vmem:[%s3 + $0x88] sm:$0xff]
      %v362 = vld [vmem:[%s3 + $0x90] sm:$0xff]
      %v363 = vld [vmem:[%s3 + $0x98] sm:$0xff]
      %v364 = vld [vmem:[%s3 + $0xa0] sm:$0xff]
      %v365 = vld [vmem:[%s3 + $0xa8] sm:$0xff]
      %v366 = vld [vmem:[%s3 + $0xb0] sm:$0xff]
      %v367 = vld [vmem:[%s3 + $0xb8] sm:$0xff]
      %v368 = vld [vmem:[%s3 + $0xc0] sm:$0xff]
      %v369 = vld [vmem:[%s3 + $0xc8] sm:$0xff]
      %v370 = vld [vmem:[%s3 + $0xd0] sm:$0xff]
      %v371 = vld [vmem:[%s3 + $0xd8] sm:$0xff]
      %v372 = vld [vmem:[%s3 + $0xe0] sm:$0xff]
      %v373 = vld [vmem:[%s3 + $0xe8] sm:$0xff]
      %v374 = vld [vmem:[%s3 + $0xf0] sm:$0xff]
      %v375 = vld [vmem:[%s3 + $0xf8] sm:$0xff]
      %v376 = vld [vmem:[%s4] sm:$0x1]
      %v378 = vlaneseq
      %v379 = vshrl.u32 %v378, 7
      %v380 = vsub.s32 0, %v379
      %v381 = vrot.slane %v376, %v380
      %383 = vmatprep.subr.mxu0 0.0
      %384 = vmatpush1.msra.mxu0 %v359
      %385 = vmatprep.subr.mxu0 0.0
      %386 = vmatpush1.msra.mxu0 %v358
      %387 = vmatprep.subr.mxu0 0.0
      %388 = vmatpush1.msra.mxu0 %v357
      %389 = vmatprep.subr.mxu0 0.0
      %390 = vmatpush1.msra.mxu0 %v356
      %391 = vmatprep.subr.mxu0 0.0
      %392 = vmatpush1.msra.mxu0 %v355
      %393 = vmatprep.subr.mxu0 0.0
      %394 = vmatpush1.msra.mxu0 %v354
      %395 = vmatprep.subr.mxu0 0.0
      %396 = vmatpush1.msra.mxu0 %v353
      %397 = vmatprep.subr.mxu0 0.0
      %398 = vmatpush1.msra.mxu0 %v352
      %399 = vmatprep.subr.mxu0 0.0
      %400 = vmatpush1.msra.mxu0 %v351
      %401 = vmatprep.subr.mxu0 0.0
      %402 = vmatpush1.msra.mxu0 %v350
      %403 = vmatprep.subr.mxu0 0.0
      %404 = vmatpush1.msra.mxu0 %v349
      %405 = vmatprep.subr.mxu0 0.0
      %406 = vmatpush1.msra.mxu0 %v348
      %407 = vmatprep.subr.mxu0 0.0
      %408 = vmatpush1.msra.mxu0 %v347
      %409 = vmatprep.subr.mxu0 0.0
      %410 = vmatpush1.msra.mxu0 %v346
      %411 = vmatprep.subr.mxu0 0.0
      %412 = vmatpush1.msra.mxu0 %v345
      %413 = vmatprep.subr.mxu0 0.0
      %414 = vmatpush1.msra.mxu0 %v344
      %415 = vmatprep.subr.mxu0 0.0
      %416 = vmatpush2.msra.mxu0 %v375
      %417 = vmatprep.subr.mxu0 0.0
      %418 = vmatpush2.msra.mxu0 %v374
      %419 = vmatprep.subr.mxu0 0.0
      %420 = vmatpush2.msra.mxu0 %v373
      %421 = vmatprep.subr.mxu0 0.0
      %422 = vmatpush2.msra.mxu0 %v372
      %423 = vmatprep.subr.mxu0 0.0
      %424 = vmatpush2.msra.mxu0 %v371
      %425 = vmatprep.subr.mxu0 0.0
      %426 = vmatpush2.msra.mxu0 %v370
      %427 = vmatprep.subr.mxu0 0.0
      %428 = vmatpush2.msra.mxu0 %v369
      %429 = vmatprep.subr.mxu0 0.0
      %430 = vmatpush2.msra.mxu0 %v368
      %431 = vmatprep.subr.mxu0 0.0
      %432 = vmatpush2.msra.mxu0 %v367
      %433 = vmatprep.subr.mxu0 0.0
      %434 = vmatpush2.msra.mxu0 %v366
      %435 = vmatprep.subr.mxu0 0.0
      %436 = vmatpush2.msra.mxu0 %v365
      %437 = vmatprep.subr.mxu0 0.0
      %438 = vmatpush2.msra.mxu0 %v364
      %439 = vmatprep.subr.mxu0 0.0
      %440 = vmatpush2.msra.mxu0 %v363
      %441 = vmatprep.subr.mxu0 0.0
      %442 = vmatpush2.msra.mxu0 %v362
      %443 = vmatprep.subr.mxu0 0.0
      %444 = vmatpush2.msra.mxu0 %v361
      %445 = vmatprep.subr.mxu0 0.0
      %446 = vmatpush2.msra.mxu0 %v360
      %447 = vmatprep.mubr.f32.mxu0 %v337
      %448 = vmatmul.mubr.f32.gmra.mxu0 %v336
      %v449 = vpop.f32.mrf.mxu0
      %v450 = vadd.f32 %v381, %v449
      %v451 = vpop.f32.mrf.mxu0
      %452 = vmatprep.mubr.f32.mxu0 %v339
      %453 = vmatmul.mubr.f32.gmra.mxu0 %v338
      %v454 = vpop.f32.mrf.mxu0
      %v455 = vadd.f32 %v381, %v454
      %v456 = vpop.f32.mrf.mxu0
      %457 = vmatprep.mubr.f32.mxu0 %v341
      %458 = vmatmul.mubr.f32.gmra.mxu0 %v340
      %v459 = vpop.f32.mrf.mxu0
      %v460 = vadd.f32 %v381, %v459
      %v461 = vpop.f32.mrf.mxu0
      %462 = vmatprep.mubr.f32.mxu0 %v343
      %463 = vmatmul.mubr.f32.gmra.mxu0 %v342
      %v464 = vpop.f32.mrf.mxu0
      %v465 = vadd.f32 %v381, %v464
      %v466 = vpop.f32.mrf.mxu0
      %467 = vdwg.mxu0
      %468 = vst [vmem:[%s229] sm:$0xff] %v450
      %469 = vst [vmem:[%s229 + $0x8] sm:$0xff] %v455
      %470 = vst [vmem:[%s229 + $0x10] sm:$0xff] %v460
      %471 = vst [vmem:[%s229 + $0x18] sm:$0xff] %v465
      %s472 = smul.u32 4, %s16
      %p473 = scmp.lt.s32.totalorder %s472, 15
      %s474 = scalar_select %p473, %s472, 15
      %s475 = smul.addr %s474, 8
      %s476 = scalar_lea.vmem %s5, %s475
      // Predicated region
      $region41: #{transformer_encoder.9} parent=39 // pred_check
        %p477 = pneg %p144
      $region42: #{transformer_encoder.9} parent=39 // pred_check_branch
        %479 = sbr.rel (%p477) target = $region44
      $region43: #{transformer_encoder.9} parent=39 // pred_region
        %s480 = smul.u32 4, %s16
      $region44: #{transformer_encoder.9} parent=39 // pred_fallthru
        _
    $region40: #{transformer_encoder.9} parent=5 // pred_fallthru
      _
    %p481 = scmp.le.s32.totalorder 2, %s11
    // Predicated region
    $region45: #{transformer_encoder.9} parent=5 // pred_check
      %p482 = pneg %p481
    $region46: #{transformer_encoder.9} parent=5 // pred_check_branch
      %484 = sbr.rel (%p482) target = $region48
    $region47: #{transformer_encoder.9} parent=5 // pred_region
      %s485 = ssub.s32 %s11, 2
      // Predicated region
      $region49: #{transformer_encoder.9} parent=47 // pred_check
        %p486 = pneg %p150
      $region50: #{transformer_encoder.9} parent=47 // pred_check_branch
        %488 = sbr.rel (%p486) target = $region52
      $region51: #{transformer_encoder.9} parent=47 // pred_region
        %s489 = smul.u32 4, %s17
        %p490 = scmp.lt.s32.totalorder %s489, 15
        %s491 = scalar_select %p490, %s489, 15
        %s492 = smul.addr %s491, 8
        %s493 = scalar_lea.vmem %s5, %s492
      $region52: #{transformer_encoder.9} parent=47 // pred_fallthru
        _
    $region48: #{transformer_encoder.9} parent=5 // pred_fallthru
      _
  $region6: #{transformer_encoder.9} parent=0 // loop_footer
    %s15 = sadd.s32 1, %s11
  $region7: #{transformer_encoder.9} parent=0 // loop_footer_branch
    %10 = sbr.rel target = $region3
  $region8: #{transformer_encoder.9} parent=0 // loop_exit
    _

// kernel: transformer_encoder.6
$region0: #{transformer_encoder.6}
  #allocation0 [shape = 'u32[]', space=smem, size = 0x4, offset = 0x4, fixed_abs, tag = 'smem constant byte address 0x4 - core index']
  #allocation1 [shape = 'u32[144,128]{1,0:T(1,128)}', space=vmem, size = 0x12000, scoped, tag = 'internal scratch']
  #allocation2 [shape = 'f32[32,256]{1,0:T(8,128)}', space=vmem, size = 0x8000, scoped, tag = 'scratch operand']
  %s0 = inlined_call_operand.vmem [shape: f32[128,256], index: 0, kind: input, shape index: {}]
  %s1 = inlined_call_operand.vmem [shape: f32[256,512], index: 1, kind: input, shape index: {}]
  %s2 = inlined_call_operand.vmem [shape: f32[1,512], index: 2, kind: input, shape index: {}]
  %s3 = inlined_call_operand.vmem [shape: f32[512,256], index: 3, kind: input, shape index: {}]
  %s4 = inlined_call_operand.vmem [shape: f32[1,256], index: 4, kind: input, shape index: {}]
  %s5 = inlined_call_operand.vmem [shape: f32[1,256], index: 5, kind: input, shape index: {}]
  %s6 = inlined_call_operand.vmem [shape: f32[1,256], index: 6, kind: input, shape index: {}]
  %s7 = inlined_call_operand.vmem [shape: f32[128,256], index: 7, kind: output, shape index: {}]
  %s8 = sld [smem:[#allocation0]]
  $region92: #{transformer_encoder.6} parent=0
    _
  %s10 = ssub.s32 1, %s8
  %s11 = scalar_select 0, %s10, %s8
  $region1: #{transformer_encoder.6} parent=0
    #allocation3 [shape = 'u8[524288]{0}', space=vmem, size = 0x80000, scoped, tag = 'input window, operand 1']
    loop: start=0, step=1, limit=10
    $region2: #{transformer_encoder.6} parent=1 // loop_pre_header
      _
    $region3: #{transformer_encoder.6} parent=1 // loop_header
      %s13 = sphi 0, %s17
      %p14 = scmp.ge.s32.totalorder %s13, 10
      %s20 = sphi 0, %s32
      %s21 = sphi 0, %s28
      %s22 = sphi 0, %s20
      %s23 = sphi 0, %s21
      %s24 = sphi 0, %s22
      %s25 = sphi 0, %s23
      %s35 = sphi 0, %s37
      %s38 = sphi 0, %s35
      %s39 = sphi 0, %s38
      %s55 = sphi 0, %s39
      %s61 = sphi 0, %s63
      %s64 = sphi 0, %s61
      %s65 = sphi 0, %s64
      %s81 = sphi 0, %s65
      %s87 = sphi 0, %s89
      %s90 = sphi 0, %s87
      %s91 = sphi 0, %s90
      %s107 = sphi 0, %s91
      %s113 = sphi 0, %s115
      %s116 = sphi 0, %s113
      %s117 = sphi 0, %s116
      %s133 = sphi 0, %s117
      %s137 = sphi 0, %s137
      %s139 = sphi 0, %s137
      %s140 = sphi 0, %s139
      %s154 = sphi 0, %s140
      %s158 = sphi 0, %s158
      %s160 = sphi 0, %s158
      %s161 = sphi 0, %s160
      %s175 = sphi 0, %s161
      %s179 = sphi 0, %s179
      %s181 = sphi 0, %s179
      %s182 = sphi 0, %s181
      %s196 = sphi 0, %s182
      %s202 = sphi 0, %s204
      %s205 = sphi 0, %s202
      %s206 = sphi 0, %s205
      %s222 = sphi 0, %s206
    $region4: #{transformer_encoder.6} parent=1 // loop_header_branch
      %16 = sbr.rel (%p14) target = $region8
    $region5: #{transformer_encoder.6} parent=1 // loop_body
      %s18 = ssub.s32 %s13, 1
      %s19 = ssub.s32 %s13, 2
      %s26 = sadd.s32 1, %s21
      %p27 = scmp.ge.s32.totalorder %s26, 2
      %s28 = scalar_select %p27, 0, %s26
      %s29 = sadd.s32 1, %s20
      %s30 = scalar_select %p27, %s29, %s20
      %p31 = scmp.ge.s32.totalorder %s30, 4
      %s32 = scalar_select %p31, 0, %s30
      %s33 = ssub.s32 %s20, %s32
      %p34 = scmp.eq.s32.totalorder %s33, 0
      %s36 = sadd.s32 %s35, 1
      %s37 = scalar_select %p34, %s35, %s36
      %p40 = pneg %p34
      %p41 = scmp.eq.s32.totalorder %s13, 7
      %p42 = por %p40, %p41
      %p43 = scmp.ne.s32.totalorder %s35, %s38
      %p44 = scmp.eq.s32.totalorder %s13, 0
      %p45 = por %p43, %p44
      %p46 = scmp.ne.s32.totalorder %s35, %s38
      %p47 = scmp.eq.s32.totalorder %s18, 7
      %p48 = por %p46, %p47
      %p49 = scmp.ne.s32.totalorder %s38, %s39
      %p50 = scmp.eq.s32.totalorder %s18, 0
      %p51 = por %p49, %p50
      %p52 = scmp.ne.s32.totalorder %s38, %s39
      %p53 = scmp.eq.s32.totalorder %s19, 7
      %p54 = por %p52, %p53
      %p56 = scmp.ne.s32.totalorder %s39, %s55
      %p57 = scmp.eq.s32.totalorder %s19, 0
      %p58 = por %p56, %p57
      %s59 = ssub.s32 %s21, %s28
      %p60 = scmp.eq.s32.totalorder %s59, 0
      %s62 = sadd.s32 %s61, 1
      %s63 = scalar_select %p60, %s61, %s62
      %p66 = pneg %p60
      %p67 = scmp.eq.s32.totalorder %s13, 7
      %p68 = por %p66, %p67
      %p69 = scmp.ne.s32.totalorder %s61, %s64
      %p70 = scmp.eq.s32.totalorder %s13, 0
      %p71 = por %p69, %p70
      %p72 = scmp.ne.s32.totalorder %s61, %s64
      %p73 = scmp.eq.s32.totalorder %s18, 7
      %p74 = por %p72, %p73
      %p75 = scmp.ne.s32.totalorder %s64, %s65
      %p76 = scmp.eq.s32.totalorder %s18, 0
      %p77 = por %p75, %p76
      %p78 = scmp.ne.s32.totalorder %s64, %s65
      %p79 = scmp.eq.s32.totalorder %s19, 7
      %p80 = por %p78, %p79
      %p82 = scmp.ne.s32.totalorder %s65, %s81
      %p83 = scmp.eq.s32.totalorder %s19, 0
      %p84 = por %p82, %p83
      %s85 = ssub.s32 %s21, %s28
      %p86 = scmp.eq.s32.totalorder %s85, 0
      %s88 = sadd.s32 %s87, 1
      %s89 = scalar_select %p86, %s87, %s88
      %p92 = pneg %p86
      %p93 = scmp.eq.s32.totalorder %s13, 7
      %p94 = por %p92, %p93
      %p95 = scmp.ne.s32.totalorder %s87, %s90
      %p96 = scmp.eq.s32.totalorder %s13, 0
      %p97 = por %p95, %p96
      %p98 = scmp.ne.s32.totalorder %s87, %s90
      %p99 = scmp.eq.s32.totalorder %s18, 7
      %p100 = por %p98, %p99
      %p101 = scmp.ne.s32.totalorder %s90, %s91
      %p102 = scmp.eq.s32.totalorder %s18, 0
      %p103 = por %p101, %p102
      %p104 = scmp.ne.s32.totalorder %s90, %s91
      %p105 = scmp.eq.s32.totalorder %s19, 7
      %p106 = por %p104, %p105
      %p108 = scmp.ne.s32.totalorder %s91, %s107
      %p109 = scmp.eq.s32.totalorder %s19, 0
      %p110 = por %p108, %p109
      %s111 = ssub.s32 %s21, %s28
      %p112 = scmp.eq.s32.totalorder %s111, 0
      %s114 = sadd.s32 %s113, 1
      %s115 = scalar_select %p112, %s113, %s114
      %p118 = pneg %p112
      %p119 = scmp.eq.s32.totalorder %s13, 7
      %p120 = por %p118, %p119
      %p121 = scmp.ne.s32.totalorder %s113, %s116
      %p122 = scmp.eq.s32.totalorder %s13, 0
      %p123 = por %p121, %p122
      %p124 = scmp.ne.s32.totalorder %s113, %s116
      %p125 = scmp.eq.s32.totalorder %s18, 7
      %p126 = por %p124, %p125
      %p127 = scmp.ne.s32.totalorder %s116, %s117
      %p128 = scmp.eq.s32.totalorder %s18, 0
      %p129 = por %p127, %p128
      %p130 = scmp.ne.s32.totalorder %s116, %s117
      %p131 = scmp.eq.s32.totalorder %s19, 7
      %p132 = por %p130, %p131
      %p134 = scmp.ne.s32.totalorder %s117, %s133
      %p135 = scmp.eq.s32.totalorder %s19, 0
      %p136 = por %p134, %p135
      %s138 = sadd.s32 %s137, 1
      %p141 = scmp.eq.s32.totalorder %s13, 7
      %p142 = scmp.ne.s32.totalorder %s137, %s139
      %p143 = scmp.eq.s32.totalorder %s13, 0
      %p144 = por %p142, %p143
      %p145 = scmp.ne.s32.totalorder %s137, %s139
      %p146 = scmp.eq.s32.totalorder %s18, 7
      %p147 = por %p145, %p146
      %p148 = scmp.ne.s32.totalorder %s139, %s140
      %p149 = scmp.eq.s32.totalorder %s18, 0
      %p150 = por %p148, %p149
      %p151 = scmp.ne.s32.totalorder %s139, %s140
      %p152 = scmp.eq.s32.totalorder %s19, 7
      %p153 = por %p151, %p152
      %p155 = scmp.ne.s32.totalorder %s140, %s154
      %p156 = scmp.eq.s32.totalorder %s19, 0
      %p157 = por %p155, %p156
      %s159 = sadd.s32 %s158, 1
      %p162 = scmp.eq.s32.totalorder %s13, 7
      %p163 = scmp.ne.s32.totalorder %s158, %s160
      %p164 = scmp.eq.s32.totalorder %s13, 0
      %p165 = por %p163, %p164
      %p166 = scmp.ne.s32.totalorder %s158, %s160
      %p167 = scmp.eq.s32.totalorder %s18, 7
      %p168 = por %p166, %p167
      %p169 = scmp.ne.s32.totalorder %s160, %s161
      %p170 = scmp.eq.s32.totalorder %s18, 0
      %p171 = por %p169, %p170
      %p172 = scmp.ne.s32.totalorder %s160, %s161
      %p173 = scmp.eq.s32.totalorder %s19, 7
      %p174 = por %p172, %p173
      %p176 = scmp.ne.s32.totalorder %s161, %s175
      %p177 = scmp.eq.s32.totalorder %s19, 0
      %p178 = por %p176, %p177
      %s180 = sadd.s32 %s179, 1
      %p183 = scmp.eq.s32.totalorder %s13, 7
      %p184 = scmp.ne.s32.totalorder %s179, %s181
      %p185 = scmp.eq.s32.totalorder %s13, 0
      %p186 = por %p184, %p185
      %p187 = scmp.ne.s32.totalorder %s179, %s181
      %p188 = scmp.eq.s32.totalorder %s18, 7
      %p189 = por %p187, %p188
      %p190 = scmp.ne.s32.totalorder %s181, %s182
      %p191 = scmp.eq.s32.totalorder %s18, 0
      %p192 = por %p190, %p191
      %p193 = scmp.ne.s32.totalorder %s181, %s182
      %p194 = scmp.eq.s32.totalorder %s19, 7
      %p195 = por %p193, %p194
      %p197 = scmp.ne.s32.totalorder %s182, %s196
      %p198 = scmp.eq.s32.totalorder %s19, 0
      %p199 = por %p197, %p198
      %s200 = ssub.s32 %s20, %s32
      %p201 = scmp.eq.s32.totalorder %s200, 0
      %s203 = sadd.s32 %s202, 1
      %s204 = scalar_select %p201, %s202, %s203
      %p207 = pneg %p201
      %p208 = scmp.eq.s32.totalorder %s13, 7
      %p209 = por %p207, %p208
      %p210 = scmp.ne.s32.totalorder %s202, %s205
      %p211 = scmp.eq.s32.totalorder %s13, 0
      %p212 = por %p210, %p211
      %p213 = scmp.ne.s32.totalorder %s202, %s205
      %p214 = scmp.eq.s32.totalorder %s18, 7
      %p215 = por %p213, %p214
      %p216 = scmp.ne.s32.totalorder %s205, %s206
      %p217 = scmp.eq.s32.totalorder %s18, 0
      %p218 = por %p216, %p217
      %p219 = scmp.ne.s32.totalorder %s205, %s206
      %p220 = scmp.eq.s32.totalorder %s19, 7
      %p221 = por %p219, %p220
      %p223 = scmp.ne.s32.totalorder %s206, %s222
      %p224 = scmp.eq.s32.totalorder %s19, 0
      %p225 = por %p223, %p224
      %p226 = scmp.le.s32.totalorder 1, %s13
      %p227 = scmp.lt.s32.totalorder %s13, 9
      %p228 = pnand %p226, %p227
      %p229 = pneg %p228
      // Predicated region
      $region9: #{transformer_encoder.6} parent=5 // pred_check
        _
      $region10: #{transformer_encoder.6} parent=5 // pred_check_branch
        %231 = sbr.rel (%p228) target = $region12
      $region11: #{transformer_encoder.6} parent=5 // pred_region
        %s232 = ssub.s32 %s13, 1
        // Predicated region
        $region13: #{transformer_encoder.6} parent=11 // pred_check
          %p233 = pneg %p150
        $region14: #{transformer_encoder.6} parent=11 // pred_check_branch
          %235 = sbr.rel (%p233) target = $region16
        $region15: #{transformer_encoder.6} parent=11 // pred_region
          _
        $region16: #{transformer_encoder.6} parent=11 // pred_fallthru
          _
        // Predicated region
        $region17: #{transformer_encoder.6} parent=11 // pred_check
          %p236 = pneg %p171
        $region18: #{transformer_encoder.6} parent=11 // pred_check_branch
          %238 = sbr.rel (%p236) target = $region20
        $region19: #{transformer_encoder.6} parent=11 // pred_region
          _
        $region20: #{transformer_encoder.6} parent=11 // pred_fallthru
          _
        // Predicated region
        $region21: #{transformer_encoder.6} parent=11 // pred_check
          %p239 = pneg %p192
        $region22: #{transformer_encoder.6} parent=11 // pred_check_branch
          %241 = sbr.rel (%p239) target = $region24
        $region23: #{transformer_encoder.6} parent=11 // pred_region
          _
        $region24: #{transformer_encoder.6} parent=11 // pred_fallthru
          _
      $region12: #{transformer_encoder.6} parent=5 // pred_fallthru
        _
      %p242 = scmp.lt.s32.totalorder %s13, 8
      // Predicated region
      $region25: #{transformer_encoder.6} parent=5 // pred_check
        %p243 = pneg %p242
      $region26: #{transformer_encoder.6} parent=5 // pred_check_branch
        %245 = sbr.rel (%p243) target = $region28
      $region27: #{transformer_encoder.6} parent=5 // pred_region
        // Predicated region
        $region29: #{transformer_encoder.6} parent=27 // pred_check
          %p246 = pneg %p45
        $region30: #{transformer_encoder.6} parent=27 // pred_check_branch
          %248 = sbr.rel (%p246) target = $region32
        $region31: #{transformer_encoder.6} parent=27 // pred_region
          %s249 = smul.u32 4, %s20
          %p250 = scmp.lt.s32.totalorder %s249, 15
          %s251 = scalar_select %p250, %s249, 15
          %s252 = smul.addr %s251, 2
          %s253 = smul.addr %s252, 8
          %s254 = scalar_lea.vmem %s0, %s253
          %s255 = smul.u32 4, %s20
        $region32: #{transformer_encoder.6} parent=27 // pred_fallthru
          _
        // Predicated region
        $region33: #{transformer_encoder.6} parent=27 // pred_check
          %p256 = pneg %p71
        $region34: #{transformer_encoder.6} parent=27 // pred_check_branch
          %258 = sbr.rel (%p256) target = $region36
        $region35: #{transformer_encoder.6} parent=27 // pred_region
          %s259 = sand.u32 %s61, 1
          %s260 = sand.u32 %s61, 1
          %s261 = smul.addr %s260, 512
          %s262 = scalar_lea.vmem [#allocation3], %s261
          %s263 = smul.u32 2, %s21
          %s264 = smul.addr %s263, 8
          %s265 = scalar_lea.vmem %s1, %s264
          // Predicated region
          $region37: #{transformer_encoder.6} parent=35 // pred_check
            _
          $region38: #{transformer_encoder.6} parent=35 // pred_check_branch
            %267 = sbr.rel (0) target = $region40
          $region39: #{transformer_encoder.6} parent=35 // pred_region
            // Predicated region
            $region41: #{transformer_encoder.6} parent=39 // pred_check
              _
            $region42: #{transformer_encoder.6} parent=39 // pred_check_branch
              %269 = sbr.rel (0) target = $region44
            $region43: #{transformer_encoder.6} parent=39 // pred_region
              loop: start=0, step=1, limit=1
              $region45: #{transformer_encoder.6} parent=43 // loop_pre_header
                _
              $region46: #{transformer_encoder.6} parent=43 // loop_header
                %s271 = sphi 0, %s275
                %p272 = scmp.ge.s32.totalorder %s271, 1
                %s276 = sphi %s265, %s265
                %s277 = sphi %s262, %s262
              $region47: #{transformer_encoder.6} parent=43 // loop_header_branch
                %274 = sbr.rel (%p272) target = $region51
              $region48: #{transformer_encoder.6} parent=43 // loop_body
                %v278 = vld [vmem:[%s276] sm:$0xff]
                %279 = vst [vmem:[%s277] sm:$0xff] %v278
                %v280 = vld [vmem:[%s276 + $0x8] sm:$0xff]
                %281 = vst [vmem:[%s277 + $0x8] sm:$0xff] %v280
                %v282 = vld [vmem:[%s276 + $0x20] sm:$0xff]
                %283 = vst [vmem:[%s277 + $0x10] sm:$0xff] %v282
                %v284 = vld [vmem:[%s276 + $0x28] sm:$0xff]
                %285 = vst [vmem:[%s277 + $0x18] sm:$0xff] %v284
                %v286 = vld [vmem:[%s276 + $0x40] sm:$0xff]
                %287 = vst [vmem:[%s277 + $0x20] sm:$0xff] %v286
                %v288 = vld [vmem:[%s276 + $0x48] sm:$0xff]
                %289 = vst [vmem:[%s277 + $0x28] sm:$0xff] %v288
                %v290 = vld [vmem:[%s276 + $0x60] sm:$0xff]
                %291 = vst [vmem:[%s277 + $0x30] sm:$0xff] %v290
                %v292 = vld [vmem:[%s276 + $0x68] sm:$0xff]
                %293 = vst [vmem:[%s277 + $0x38] sm:$0xff] %v292
                %v294 = vld [vmem:[%s276 + $0x80] sm:$0xff]
                %295 = vst [vmem:[%s277 + $0x40] sm:$0xff] %v294
                %v296 = vld [vmem:[%s276 + $0x88] sm:$0xff]
                %297 = vst [vmem:[%s277 + $0x48] sm:$0xff] %v296
                %v298 = vld [vmem:[%s276 + $0xa0] sm:$0xff]
                %299 = vst [vmem:[%s277 + $0x50] sm:$0xff] %v298
                %v300 = vld [vmem:[%s276 + $0xa8] sm:$0xff]
                %301 = vst [vmem:[%s277 + $0x58] sm:$0xff] %v300
                %v302 = vld [vmem:[%s276 + $0xc0] sm:$0xff]
                %303 = vst [vmem:[%s277 + $0x60] sm:$0xff] %v302
                %v304 = vld [vmem:[%s276 + $0xc8] sm:$0xff]
                %305 = vst [vmem:[%s277 + $0x68] sm:$0xff] %v304
                %v306 = vld [vmem:[%s276 + $0xe0] sm:$0xff]
                %307 = vst [vmem:[%s277 + $0x70] sm:$0xff] %v306
                %v308 = vld [vmem:[%s276 + $0xe8] sm:$0xff]
                %309 = vst [vmem:[%s277 + $0x78] sm:$0xff] %v308
                %v310 = vld [vmem:[%s276 + $0x100] sm:$0xff]
                %311 = vst [vmem:[%s277 + $0x80] sm:$0xff] %v310
                %v312 = vld [vmem:[%s276 + $0x108] sm:$0xff]
                %313 = vst [vmem:[%s277 + $0x88] sm:$0xff] %v312
                %v314 = vld [vmem:[%s276 + $0x120] sm:$0xff]
                %315 = vst [vmem:[%s277 + $0x90] sm:$0xff] %v314
                %v316 = vld [vmem:[%s276 + $0x128] sm:$0xff]
                %317 = vst [vmem:[%s277 + $0x98] sm:$0xff] %v316
                %v318 = vld [vmem:[%s276 + $0x140] sm:$0xff]
                %319 = vst [vmem:[%s277 + $0xa0] sm:$0xff] %v318
                %v320 = vld [vmem:[%s276 + $0x148] sm:$0xff]
                %321 = vst [vmem:[%s277 + $0xa8] sm:$0xff] %v320
                %v322 = vld [vmem:[%s276 + $0x160] sm:$0xff]
                %323 = vst [vmem:[%s277 + $0xb0] sm:$0xff] %v322
                %v324 = vld [vmem:[%s276 + $0x168] sm:$0xff]
                %325 = vst [vmem:[%s277 + $0xb8] sm:$0xff] %v324
                %v326 = vld [vmem:[%s276 + $0x180] sm:$0xff]
                %327 = vst [vmem:[%s277 + $0xc0] sm:$0xff] %v326
                %v328 = vld [vmem:[%s276 + $0x188] sm:$0xff]
                %329 = vst [vmem:[%s277 + $0xc8] sm:$0xff] %v328
                %v330 = vld [vmem:[%s276 + $0x1a0] sm:$0xff]
                %331 = vst [vmem:[%s277 + $0xd0] sm:$0xff] %v330
                %v332 = vld [vmem:[%s276 + $0x1a8] sm:$0xff]
                %333 = vst [vmem:[%s277 + $0xd8] sm:$0xff] %v332
                %v334 = vld [vmem:[%s276 + $0x1c0] sm:$0xff]
                %335 = vst [vmem:[%s277 + $0xe0] sm:$0xff] %v334
                %v336 = vld [vmem:[%s276 + $0x1c8] sm:$0xff]
                %337 = vst [vmem:[%s277 + $0xe8] sm:$0xff] %v336
                %v338 = vld [vmem:[%s276 + $0x1e0] sm:$0xff]
                %339 = vst [vmem:[%s277 + $0xf0] sm:$0xff] %v338
                %v340 = vld [vmem:[%s276 + $0x1e8] sm:$0xff]
                %341 = vst [vmem:[%s277 + $0xf8] sm:$0xff] %v340
                %v342 = vld [vmem:[%s276 + $0x200] sm:$0xff]
                %343 = vst [vmem:[%s277 + $0x100] sm:$0xff] %v342
                %v344 = vld [vmem:[%s276 + $0x208] sm:$0xff]
                %345 = vst [vmem:[%s277 + $0x108] sm:$0xff] %v344
                %v346 = vld [vmem:[%s276 + $0x220] sm:$0xff]
                %347 = vst [vmem:[%s277 + $0x110] sm:$0xff] %v346
                %v348 = vld [vmem:[%s276 + $0x228] sm:$0xff]
                %349 = vst [vmem:[%s277 + $0x118] sm:$0xff] %v348
                %v350 = vld [vmem:[%s276 + $0x240] sm:$0xff]
                %351 = vst [vmem:[%s277 + $0x120] sm:$0xff] %v350
                %v352 = vld [vmem:[%s276 + $0x248] sm:$0xff]
                %353 = vst [vmem:[%s277 + $0x128] sm:$0xff] %v352
                %v354 = vld [vmem:[%s276 + $0x260] sm:$0xff]
                %355 = vst [vmem:[%s277 + $0x130] sm:$0xff] %v354
                %v356 = vld [vmem:[%s276 + $0x268] sm:$0xff]
                %357 = vst [vmem:[%s277 + $0x138] sm:$0xff] %v356
                %v358 = vld [vmem:[%s276 + $0x280] sm:$0xff]
                %359 = vst [vmem:[%s277 + $0x140] sm:$0xff] %v358
                %v360 = vld [vmem:[%s276 + $0x288] sm:$0xff]
                %361 = vst [vmem:[%s277 + $0x148] sm:$0xff] %v360
                %v362 = vld [vmem:[%s276 + $0x2a0] sm:$0xff]
                %363 = vst [vmem:[%s277 + $0x150] sm:$0xff] %v362
                %v364 = vld [vmem:[%s276 + $0x2a8] sm:$0xff]
                %365 = vst [vmem:[%s277 + $0x158] sm:$0xff] %v364
                %v366 = vld [vmem:[%s276 + $0x2c0] sm:$0xff]
                %367 = vst [vmem:[%s277 + $0x160] sm:$0xff] %v366
                %v368 = vld [vmem:[%s276 + $0x2c8] sm:$0xff]
                %369 = vst [vmem:[%s277 + $0x168] sm:$0xff] %v368
                %v370 = vld [vmem:[%s276 + $0x2e0] sm:$0xff]
                %371 = vst [vmem:[%s277 + $0x170] sm:$0xff] %v370
                %v372 = vld [vmem:[%s276 + $0x2e8] sm:$0xff]
                %373 = vst [vmem:[%s277 + $0x178] sm:$0xff] %v372
                %v374 = vld [vmem:[%s276 + $0x300] sm:$0xff]
                %375 = vst [vmem:[%s277 + $0x180] sm:$0xff] %v374
                %v376 = vld [vmem:[%s276 + $0x308] sm:$0xff]
                %377 = vst [vmem:[%s277 + $0x188] sm:$0xff] %v376
                %v378 = vld [vmem:[%s276 + $0x320] sm:$0xff]
                %379 = vst [vmem:[%s277 + $0x190] sm:$0xff] %v378
                %v380 = vld [vmem:[%s276 + $0x328] sm:$0xff]
                %381 = vst [vmem:[%s277 + $0x198] sm:$0xff] %v380
                %v382 = vld [vmem:[%s276 + $0x340] sm:$0xff]
                %383 = vst [vmem:[%s277 + $0x1a0] sm:$0xff] %v382
                %v384 = vld [vmem:[%s276 + $0x348] sm:$0xff]
                %385 = vst [vmem:[%s277 + $0x1a8] sm:$0xff] %v384
                %v386 = vld [vmem:[%s276 + $0x360] sm:$0xff]
                %387 = vst [vmem:[%s277 + $0x1b0] sm:$0xff] %v386
                %v388 = vld [vmem:[%s276 + $0x368] sm:$0xff]
                %389 = vst [vmem:[%s277 + $0x1b8] sm:$0xff] %v388
                %v390 = vld [vmem:[%s276 + $0x380] sm:$0xff]
                %391 = vst [vmem:[%s277 + $0x1c0] sm:$0xff] %v390
                %v392 = vld [vmem:[%s276 + $0x388] sm:$0xff]
                %393 = vst [vmem:[%s277 + $0x1c8] sm:$0xff] %v392
                %v394 = vld [vmem:[%s276 + $0x3a0] sm:$0xff]
                %395 = vst [vmem:[%s277 + $0x1d0] sm:$0xff] %v394
                %v396 = vld [vmem:[%s276 + $0x3a8] sm:$0xff]
                %397 = vst [vmem:[%s277 + $0x1d8] sm:$0xff] %v396
                %v398 = vld [vmem:[%s276 + $0x3c0] sm:$0xff]
                %399 = vst [vmem:[%s277 + $0x1e0] sm:$0xff] %v398
                %v400 = vld [vmem:[%s276 + $0x3c8] sm:$0xff]
                %401 = vst [vmem:[%s277 + $0x1e8] sm:$0xff] %v400
                %v402 = vld [vmem:[%s276 + $0x3e0] sm:$0xff]
                %403 = vst [vmem:[%s277 + $0x1f0] sm:$0xff] %v402
                %v404 = vld [vmem:[%s276 + $0x3e8] sm:$0xff]
                %405 = vst [vmem:[%s277 + $0x1f8] sm:$0xff] %v404
              $region49: #{transformer_encoder.6} parent=43 // loop_footer
                %s275 = sadd.s32 1, %s271
              $region50: #{transformer_encoder.6} parent=43 // loop_footer_branch
                %270 = sbr.rel target = $region46
              $region51: #{transformer_encoder.6} parent=43 // loop_exit
                _
            $region44: #{transformer_encoder.6} parent=39 // pred_fallthru
              _
            // Predicated region
            $region52: #{transformer_encoder.6} parent=39 // pred_check
              _
            $region53: #{transformer_encoder.6} parent=39 // pred_check_branch
              %407 = sbr.rel target = $region55
            $region54: #{transformer_encoder.6} parent=39 // pred_region
              _
            $region55: #{transformer_encoder.6} parent=39 // pred_fallthru
              _
          $region40: #{transformer_encoder.6} parent=35 // pred_fallthru
            _
          %408 = vnop
        $region36: #{transformer_encoder.6} parent=27 // pred_fallthru
          _
        // Predicated region
        $region56: #{transformer_encoder.6} parent=27 // pred_check
          %p409 = pneg %p97
        $region57: #{transformer_encoder.6} parent=27 // pred_check_branch
          %411 = sbr.rel (%p409) target = $region59
        $region58: #{transformer_encoder.6} parent=27 // pred_region
          %s412 = smul.u32 2, %s21
          %p413 = scmp.lt.s32.totalorder %s412, 3
          %s414 = scalar_select %p413, %s412, 3
          %s415 = scalar_lea.vmem %s2, %s414
          %s416 = smul.u32 2, %s21
        $region59: #{transformer_encoder.6} parent=27 // pred_fallthru
          _
        // Predicated region
        $region60: #{transformer_encoder.6} parent=27 // pred_check
          %p417 = pneg %p123
        $region61: #{transformer_encoder.6} parent=27 // pred_check_branch
          %419 = sbr.rel (%p417) target = $region63
        $region62: #{transformer_encoder.6} parent=27 // pred_region
          %s420 = smul.u32 32, %s21
          %p421 = scmp.lt.s32.totalorder %s420, 63
          %s422 = scalar_select %p421, %s420, 63
          %s423 = smul.addr %s422, 2
          %s424 = smul.addr %s423, 8
          %s425 = scalar_lea.vmem %s3, %s424
          %s426 = smul.u32 32, %s21
        $region63: #{transformer_encoder.6} parent=27 // pred_fallthru
          _
      $region28: #{transformer_encoder.6} parent=5 // pred_fallthru
        _
      %p427 = scmp.le.s32.totalorder 1, %s13
      %p428 = scmp.lt.s32.totalorder %s13, 9
      %p429 = pnand %p427, %p428
      %p430 = pneg %p429
      // Predicated region
      $region64: #{transformer_encoder.6} parent=5 // pred_check
        _
      $region65: #{transformer_encoder.6} parent=5 // pred_check_branch
        %432 = sbr.rel (%p429) target = $region67
      $region66: #{transformer_encoder.6} parent=5 // pred_region
        %s433 = ssub.s32 %s13, 1
        %s434 = sand.u32 %s64, 1
        %s435 = sand.u32 %s64, 1
        %s436 = smul.addr %s435, 512
        %s437 = scalar_lea.vmem [#allocation3], %s436
        // Predicated region
        $region68: #{transformer_encoder.6} parent=66 // pred_check
          %p438 = pneg %p77
        $region69: #{transformer_encoder.6} parent=66 // pred_check_branch
          %440 = sbr.rel (%p438) target = $region71
        $region70: #{transformer_encoder.6} parent=66 // pred_region
          _
        $region71: #{transformer_encoder.6} parent=66 // pred_fallthru
          _
        %s441 = smul.u32 4, %s22
        %p442 = scmp.lt.s32.totalorder %s441, 15
        %s443 = scalar_select %p442, %s441, 15
        %s444 = smul.addr %s443, 2
        %s445 = smul.addr %s444, 8
        %s446 = scalar_lea.vmem %s0, %s445
        %p447 = pneg %p51
        %p448 = pneg %p48
        %s449 = sand.u32 %s64, 1
        %s450 = sand.u32 %s64, 1
        %s451 = smul.addr %s450, 512
        %s452 = scalar_lea.vmem [#allocation3], %s451
        %p453 = pneg %p77
        %p454 = pneg %p74
        %s455 = smul.u32 2, %s23
        %p456 = scmp.lt.s32.totalorder %s455, 3
        %s457 = scalar_select %p456, %s455, 3
        %s458 = scalar_lea.vmem %s2, %s457
        %p459 = pneg %p103
        %p460 = pneg %p100
        %s461 = smul.u32 32, %s23
        %p462 = scmp.lt.s32.totalorder %s461, 63
        %s463 = scalar_select %p462, %s461, 63
        %s464 = smul.addr %s463, 2
        %s465 = smul.addr %s464, 8
        %s466 = scalar_lea.vmem %s3, %s465
        %p467 = pneg %p129
        %p468 = pneg %p126
        %p469 = pneg %p150
        %p470 = pneg %p147
        %p471 = pneg %p171
        %p472 = pneg %p168
        %p473 = pneg %p192
        %p474 = pneg %p189
        %p475 = pneg %p218
        %p476 = pneg %p215
        %s477 = smul.u32 4, %s22
        %p478 = scmp.lt.s32.totalorder %s477, 15
        %s479 = scalar_select %p478, %s477, 15
        %s480 = smul.addr %s479, 2
        %s481 = smul.addr %s480, 8
        %s482 = scalar_lea.vmem %s7, %s481
        %s483 = smul.u32 4, %s22
        %p484 = scmp.lt.s32.totalorder %s483, 15
        %s485 = scalar_select %p484, %s483, 15
        %s486 = smul.addr %s485, 2
        %s487 = smul.addr %s486, 8
        %s488 = scalar_lea.vmem %s0, %s487
        %s489 = smul.u32 4, %s22
        %s490 = smul.u32 2, %s23
        %s491 = smul.u32 2, %s23
        %p492 = scmp.lt.s32.totalorder %s491, 3
        %s493 = scalar_select %p492, %s491, 3
        %s494 = scalar_lea.vmem %s2, %s493
        %s495 = smul.u32 2, %s23
        %s496 = smul.u32 32, %s23
        %p497 = scmp.lt.s32.totalorder %s496, 63
        %s498 = scalar_select %p497, %s496, 63
        %s499 = smul.addr %s498, 2
        %s500 = smul.addr %s499, 8
        %s501 = scalar_lea.vmem %s3, %s500
        %s502 = smul.u32 32, %s23
        %s503 = smul.u32 4, %s22
        %p504 = scmp.lt.s32.totalorder %s503, 15
        %s505 = scalar_select %p504, %s503, 15
        %s506 = smul.addr %s505, 2
        %s507 = smul.addr %s506, 8
        %s508 = scalar_lea.vmem %s7, %s507
        %s509 = smul.u32 4, %s22
        %p510 = scmp.eq.s32.totalorder %s23, 0
        // Predicated region
        $region72: #{transformer_encoder.6} parent=66 // pred_check
          %p511 = pneg %p510
        $region73: #{transformer_encoder.6} parent=66 // pred_check_branch
          %513 = sbr.rel (%p511) target = $region75
        $region74: #{transformer_encoder.6} parent=66 // pred_region
          %514 = vst [vmem:[#allocation2] sm:$0xff] 0.0
          %515 = vst [vmem:[#allocation2 + $0x8] sm:$0xff] 0.0
          %516 = vst [vmem:[#allocation2 + $0x10] sm:$0xff] 0.0
          %517 = vst [vmem:[#allocation2 + $0x18] sm:$0xff] 0.0
          %518 = vst [vmem:[#allocation2 + $0x20] sm:$0xff] 0.0
          %519 = vst [vmem:[#allocation2 + $0x28] sm:$0xff] 0.0
          %520 = vst [vmem:[#allocation2 + $0x30] sm:$0xff] 0.0
          %521 = vst [vmem:[#allocation2 + $0x38] sm:$0xff] 0.0
        $region75: #{transformer_encoder.6} parent=66 // pred_fallthru
          _
        %v522 = vld [vmem:[%s488] sm:$0xff]
        %v523 = vld [vmem:[%s488 + $0x8] sm:$0xff]
        %v524 = vld [vmem:[%s488 + $0x10] sm:$0xff]
        %v525 = vld [vmem:[%s488 + $0x18] sm:$0xff]
        %v526 = vld [vmem:[%s488 + $0x20] sm:$0xff]
        %v527 = vld [vmem:[%s488 + $0x28] sm:$0xff]
        %v528 = vld [vmem:[%s488 + $0x30] sm:$0xff]
        %v529 = vld [vmem:[%s488 + $0x38] sm:$0xff]
        %v530 = vld [vmem:[%s437] sm:$0xff]
        %v531 = vld [vmem:[%s437 + $0x8] sm:$0xff]
        %v532 = vld [vmem:[%s437 + $0x10] sm:$0xff]
        %v533 = vld [vmem:[%s437 + $0x18] sm:$0xff]
        %v534 = vld [vmem:[%s437 + $0x20] sm:$0xff]
        %v535 = vld [vmem:[%s437 + $0x28] sm:$0xff]
        %v536 = vld [vmem:[%s437 + $0x30] sm:$0xff]
        %v537 = vld [vmem:[%s437 + $0x38] sm:$0xff]
        %v538 = vld [vmem:[%s437 + $0x40] sm:$0xff]
        %v539 = vld [vmem:[%s437 + $0x48] sm:$0xff]
        %v540 = vld [vmem:[%s437 + $0x50] sm:$0xff]
        %v541 = vld [vmem:[%s437 + $0x58] sm:$0xff]
        %v542 = vld [vmem:[%s437 + $0x60] sm:$0xff]
        %v543 = vld [vmem:[%s437 + $0x68] sm:$0xff]
        %v544 = vld [vmem:[%s437 + $0x70] sm:$0xff]
        %v545 = vld [vmem:[%s437 + $0x78] sm:$0xff]
        %v546 = vld [vmem:[%s437 + $0x80] sm:$0xff]
        %v547 = vld [vmem:[%s437 + $0x88] sm:$0xff]
        %v548 = vld [vmem:[%s437 + $0x90] sm:$0xff]
        %v549 = vld [vmem:[%s437 + $0x98] sm:$0xff]
        %v550 = vld [vmem:[%s437 + $0xa0] sm:$0xff]
        %v551 = vld [vmem:[%s437 + $0xa8] sm:$0xff]
        %v552 = vld [vmem:[%s437 + $0xb0] sm:$0xff]
        %v553 = vld [vmem:[%s437 + $0xb8] sm:$0xff]
        %v554 = vld [vmem:[%s437 + $0xc0] sm:$0xff]
        %v555 = vld [vmem:[%s437 + $0xc8] sm:$0xff]
        %v556 = vld [vmem:[%s437 + $0xd0] sm:$0xff]
        %v557 = vld [vmem:[%s437 + $0xd8] sm:$0xff]
        %v558 = vld [vmem:[%s437 + $0xe0] sm:$0xff]
        %v559 = vld [vmem:[%s437 + $0xe8] sm:$0xff]
        %v560 = vld [vmem:[%s437 + $0xf0] sm:$0xff]
        %v561 = vld [vmem:[%s437 + $0xf8] sm:$0xff]
        %v562 = vld [vmem:[%s437 + $0x100] sm:$0xff]
        %v563 = vld [vmem:[%s437 + $0x108] sm:$0xff]
        %v564 = vld [vmem:[%s437 + $0x110] sm:$0xff]
        %v565 = vld [vmem:[%s437 + $0x118] sm:$0xff]
        %v566 = vld [vmem:[%s437 + $0x120] sm:$0xff]
        %v567 = vld [vmem:[%s437 + $0x128] sm:$0xff]
        %v568 = vld [vmem:[%s437 + $0x130] sm:$0xff]
        %v569 = vld [vmem:[%s437 + $0x138] sm:$0xff]
        %v570 = vld [vmem:[%s437 + $0x140] sm:$0xff]
        %v571 = vld [vmem:[%s437 + $0x148] sm:$0xff]
        %v572 = vld [vmem:[%s437 + $0x150] sm:$0xff]
        %v573 = vld [vmem:[%s437 + $0x158] sm:$0xff]
        %v574 = vld [vmem:[%s437 + $0x160] sm:$0xff]
        %v575 = vld [vmem:[%s437 + $0x168] sm:$0xff]
        %v576 = vld [vmem:[%s437 + $0x170] sm:$0xff]
        %v577 = vld [vmem:[%s437 + $0x178] sm:$0xff]
        %v578 = vld [vmem:[%s437 + $0x180] sm:$0xff]
        %v579 = vld [vmem:[%s437 + $0x188] sm:$0xff]
        %v580 = vld [vmem:[%s437 + $0x190] sm:$0xff]
        %v581 = vld [vmem:[%s437 + $0x198] sm:$0xff]
        %v582 = vld [vmem:[%s437 + $0x1a0] sm:$0xff]
        %v583 = vld [vmem:[%s437 + $0x1a8] sm:$0xff]
        %v584 = vld [vmem:[%s437 + $0x1b0] sm:$0xff]
        %v585 = vld [vmem:[%s437 + $0x1b8] sm:$0xff]
        %v586 = vld [vmem:[%s437 + $0x1c0] sm:$0xff]
        %v587 = vld [vmem:[%s437 + $0x1c8] sm:$0xff]
        %v588 = vld [vmem:[%s437 + $0x1d0] sm:$0xff]
        %v589 = vld [vmem:[%s437 + $0x1d8] sm:$0xff]
        %v590 = vld [vmem:[%s437 + $0x1e0] sm:$0xff]
        %v591 = vld [vmem:[%s437 + $0x1e8] sm:$0xff]
        %v592 = vld [vmem:[%s437 + $0x1f0] sm:$0xff]
        %v593 = vld [vmem:[%s437 + $0x1f8] sm:$0xff]
        %v594 = vld [vmem:[%s494] sm:$0x3]
        %v596 = vlaneseq
        %v597 = vshrl.u32 %v596, 7
        %v598 = vsub.s32 0, %v597
        %v599 = vrot.slane %v594, %v598
        %v600 = vlaneseq
        %v601 = vshrl.u32 %v600, 7
        %v602 = vsub.s32 1, %v601
        %v603 = vrot.slane %v594, %v602
        %606 = vmatprep.subr.mxu0 %v561
        %607 = vmatpush1.msra.mxu0 %v560
        %608 = vmatprep.subr.mxu0 %v559
        %609 = vmatpush1.msra.mxu0 %v558
        %610 = vmatprep.subr.mxu0 %v557
        %611 = vmatpush1.msra.mxu0 %v556
        %612 = vmatprep.subr.mxu0 %v555
        %613 = vmatpush1.msra.mxu0 %v554
        %614 = vmatprep.subr.mxu0 %v553
        %615 = vmatpush1.msra.mxu0 %v552
        %616 = vmatprep.subr.mxu0 %v551
        %617 = vmatpush1.msra.mxu0 %v550
        %618 = vmatprep.subr.mxu0 %v549
        %619 = vmatpush1.msra.mxu0 %v548
        %620 = vmatprep.subr.mxu0 %v547
        %621 = vmatpush1.msra.mxu0 %v546
        %622 = vmatprep.subr.mxu0 %v545
        %623 = vmatpush1.msra.mxu0 %v544
        %624 = vmatprep.subr.mxu0 %v543
        %625 = vmatpush1.msra.mxu0 %v542
        %626 = vmatprep.subr.mxu0 %v541
        %627 = vmatpush1.msra.mxu0 %v540
        %628 = vmatprep.subr.mxu0 %v539
        %629 = vmatpush1.msra.mxu0 %v538
        %630 = vmatprep.subr.mxu0 %v537
        %631 = vmatpush1.msra.mxu0 %v536
        %632 = vmatprep.subr.mxu0 %v535
        %633 = vmatpush1.msra.mxu0 %v534
        %634 = vmatprep.subr.mxu0 %v533
        %635 = vmatpush1.msra.mxu0 %v532
        %636 = vmatprep.subr.mxu0 %v531
        %637 = vmatpush1.msra.mxu0 %v530
        %638 = vmatprep.subr.mxu0 %v593
        %639 = vmatpush2.msra.mxu0 %v592
        %640 = vmatprep.subr.mxu0 %v591
        %641 = vmatpush2.msra.mxu0 %v590
        %642 = vmatprep.subr.mxu0 %v589
        %643 = vmatpush2.msra.mxu0 %v588
        %644 = vmatprep.subr.mxu0 %v587
        %645 = vmatpush2.msra.mxu0 %v586
        %646 = vmatprep.subr.mxu0 %v585
        %647 = vmatpush2.msra.mxu0 %v584
        %648 = vmatprep.subr.mxu0 %v583
        %649 = vmatpush2.msra.mxu0 %v582
        %650 = vmatprep.subr.mxu0 %v581
        %651 = vmatpush2.msra.mxu0 %v580
        %652 = vmatprep.subr.mxu0 %v579
        %653 = vmatpush2.msra.mxu0 %v578
        %654 = vmatprep.subr.mxu0 %v577
        %655 = vmatpush2.msra.mxu0 %v576
        %656 = vmatprep.subr.mxu0 %v575
        %657 = vmatpush2.msra.mxu0 %v574
        %658 = vmatprep.subr.mxu0 %v573
        %659 = vmatpush2.msra.mxu0 %v572
        %660 = vmatprep.subr.mxu0 %v571
        %661 = vmatpush2.msra.mxu0 %v570
        %662 = vmatprep.subr.mxu0 %v569
        %663 = vmatpush2.msra.mxu0 %v568
        %664 = vmatprep.subr.mxu0 %v567
        %665 = vmatpush2.msra.mxu0 %v566
        %666 = vmatprep.subr.mxu0 %v565
        %667 = vmatpush2.msra.mxu0 %v564
        %668 = vmatprep.subr.mxu0 %v563
        %669 = vmatpush2.msra.mxu0 %v562
        %670 = vmatprep.mubr.f32.mxu0 %v523
        %671 = vmatmul.mubr.f32.gmra.mxu0 %v522
        %v672 = vpop.f32.mrf.mxu0
        %v673 = vadd.f32 %v599, %v672
        %v674 = vpop.f32.mrf.mxu0
        %v675 = vadd.f32 %v603, %v674
        %676 = vmatprep.mubr.f32.mxu0 %v525
        %677 = vmatmul.mubr.f32.gmra.mxu0 %v524
        %v678 = vpop.f32.mrf.mxu0
        %v679 = vadd.f32 %v599, %v678
        %v680 = vpop.f32.mrf.mxu0
        %v681 = vadd.f32 %v603, %v680
        %682 = vmatprep.mubr.f32.mxu0 %v527
        %683 = vmatmul.mubr.f32.gmra.mxu0 %v526
        %v684 = vpop.f32.mrf.mxu0
        %v685 = vadd.f32 %v599, %v684
        %v686 = vpop.f32.mrf.mxu0
        %v687 = vadd.f32 %v603, %v686
        %688 = vmatprep.mubr.f32.mxu0 %v529
        %689 = vmatmul.mubr.f32.gmra.mxu0 %v528
        %v690 = vpop.f32.mrf.mxu0
        %v691 = vadd.f32 %v599, %v690
        %v692 = vpop.f32.mrf.mxu0
        %v693 = vadd.f32 %v603, %v692
        %694 = vdwg.mxu0
        %v695 = vmax.f32 %v673, 0.0
        %v696 = vmax.f32 %v675, 0.0
        %v697 = vmax.f32 %v679, 0.0
        %v698 = vmax.f32 %v681, 0.0
        %v699 = vmax.f32 %v685, 0.0
        %v700 = vmax.f32 %v687, 0.0
        %v701 = vmax.f32 %v691, 0.0
        %v702 = vmax.f32 %v693, 0.0
        %v703 = vld [vmem:[#allocation2] sm:$0xff]
        %v704 = vld [vmem:[#allocation2 + $0x8] sm:$0xff]
        %v705 = vld [vmem:[#allocation2 + $0x10] sm:$0xff]
        %v706 = vld [vmem:[#allocation2 + $0x18] sm:$0xff]
        %v707 = vld [vmem:[#allocation2 + $0x20] sm:$0xff]
        %v708 = vld [vmem:[#allocation2 + $0x28] sm:$0xff]
        %v709 = vld [vmem:[#allocation2 + $0x30] sm:$0xff]
        %v710 = vld [vmem:[#allocation2 + $0x38] sm:$0xff]
        %v711 = vld [vmem:[%s501] sm:$0xff]
        %v712 = vld [vmem:[%s501 + $0x8] sm:$0xff]
        %v713 = vld [vmem:[%s501 + $0x10] sm:$0xff]
        %v714 = vld [vmem:[%s501 + $0x18] sm:$0xff]
        %v715 = vld [vmem:[%s501 + $0x20] sm:$0xff]
        %v716 = vld [vmem:[%s501 + $0x28] sm:$0xff]
        %v717 = vld [vmem:[%s501 + $0x30] sm:$0xff]
        %v718 = vld [vmem:[%s501 + $0x38] sm:$0xff]
        %v719 = vld [vmem:[%s501 + $0x40] sm:$0xff]
        %v720 = vld [vmem:[%s501 + $0x48] sm:$0xff]
        %v721 = vld [vmem:[%s501 + $0x50] sm:$0xff]
        %v722 = vld [vmem:[%s501 + $0x58] sm:$0xff]
        %v723 = vld [vmem:[%s501 + $0x60] sm:$0xff]
        %v724 = vld [vmem:[%s501 + $0x68] sm:$0xff]
        %v725 = vld [vmem:[%s501 + $0x70] sm:$0xff]
        %v726 = vld [vmem:[%s501 + $0x78] sm:$0xff]
        %v727 = vld [vmem:[%s501 + $0x80] sm:$0xff]
        %v728 = vld [vmem:[%s501 + $0x88] sm:$0xff]
        %v729 = vld [vmem:[%s501 + $0x90] sm:$0xff]
        %v730 = vld [vmem:[%s501 + $0x98] sm:$0xff]
        %v731 = vld [vmem:[%s501 + $0xa0] sm:$0xff]
        %v732 = vld [vmem:[%s501 + $0xa8] sm:$0xff]
        %v733 = vld [vmem:[%s501 + $0xb0] sm:$0xff]
        %v734 = vld [vmem:[%s501 + $0xb8] sm:$0xff]
        %v735 = vld [vmem:[%s501 + $0xc0] sm:$0xff]
        %v736 = vld [vmem:[%s501 + $0xc8] sm:$0xff]
        %v737 = vld [vmem:[%s501 + $0xd0] sm:$0xff]
        %v738 = vld [vmem:[%s501 + $0xd8] sm:$0xff]
        %v739 = vld [vmem:[%s501 + $0xe0] sm:$0xff]
        %v740 = vld [vmem:[%s501 + $0xe8] sm:$0xff]
        %v741 = vld [vmem:[%s501 + $0xf0] sm:$0xff]
        %v742 = vld [vmem:[%s501 + $0xf8] sm:$0xff]
        %v743 = vld [vmem:[%s501 + $0x100] sm:$0xff]
        %v744 = vld [vmem:[%s501 + $0x108] sm:$0xff]
        %v745 = vld [vmem:[%s501 + $0x110] sm:$0xff]
        %v746 = vld [vmem:[%s501 + $0x118] sm:$0xff]
        %v747 = vld [vmem:[%s501 + $0x120] sm:$0xff]
        %v748 = vld [vmem:[%s501 + $0x128] sm:$0xff]
        %v749 = vld [vmem:[%s501 + $0x130] sm:$0xff]
        %v750 = vld [vmem:[%s501 + $0x138] sm:$0xff]
        %v751 = vld [vmem:[%s501 + $0x140] sm:$0xff]
        %v752 = vld [vmem:[%s501 + $0x148] sm:$0xff]
        %v753 = vld [vmem:[%s501 + $0x150] sm:$0xff]
        %v754 = vld [vmem:[%s501 + $0x158] sm:$0xff]
        %v755 = vld [vmem:[%s501 + $0x160] sm:$0xff]
        %v756 = vld [vmem:[%s501 + $0x168] sm:$0xff]
        %v757 = vld [vmem:[%s501 + $0x170] sm:$0xff]
        %v758 = vld [vmem:[%s501 + $0x178] sm:$0xff]
        %v759 = vld [vmem:[%s501 + $0x180] sm:$0xff]
        %v760 = vld [vmem:[%s501 + $0x188] sm:$0xff]
        %v761 = vld [vmem:[%s501 + $0x190] sm:$0xff]
        %v762 = vld [vmem:[%s501 + $0x198] sm:$0xff]
        %v763 = vld [vmem:[%s501 + $0x1a0] sm:$0xff]
        %v764 = vld [vmem:[%s501 + $0x1a8] sm:$0xff]
        %v765 = vld [vmem:[%s501 + $0x1b0] sm:$0xff]
        %v766 = vld [vmem:[%s501 + $0x1b8] sm:$0xff]
        %v767 = vld [vmem:[%s501 + $0x1c0] sm:$0xff]
        %v768 = vld [vmem:[%s501 + $0x1c8] sm:$0xff]
        %v769 = vld [vmem:[%s501 + $0x1d0] sm:$0xff]
        %v770 = vld [vmem:[%s501 + $0x1d8] sm:$0xff]
        %v771 = vld [vmem:[%s501 + $0x1e0] sm:$0xff]
        %v772 = vld [vmem:[%s501 + $0x1e8] sm:$0xff]
        %v773 = vld [vmem:[%s501 + $0x1f0] sm:$0xff]
        %v774 = vld [vmem:[%s501 + $0x1f8] sm:$0xff]
        %775 = vmatprep.subr.mxu0 %v742
        %776 = vmatpush1.msra.mxu0 %v741
        %777 = vmatprep.subr.mxu0 %v740
        %778 = vmatpush1.msra.mxu0 %v739
        %779 = vmatprep.subr.mxu0 %v738
        %780 = vmatpush1.msra.mxu0 %v737
        %781 = vmatprep.subr.mxu0 %v736
        %782 = vmatpush1.msra.mxu0 %v735
        %783 = vmatprep.subr.mxu0 %v734
        %784 = vmatpush1.msra.mxu0 %v733
        %785 = vmatprep.subr.mxu0 %v732
        %786 = vmatpush1.msra.mxu0 %v731
        %787 = vmatprep.subr.mxu0 %v730
        %788 = vmatpush1.msra.mxu0 %v729
        %789 = vmatprep.subr.mxu0 %v728
        %790 = vmatpush1.msra.mxu0 %v727
        %791 = vmatprep.subr.mxu0 %v726
        %792 = vmatpush1.msra.mxu0 %v725
        %793 = vmatprep.subr.mxu0 %v724
        %794 = vmatpush1.msra.mxu0 %v723
        %795 = vmatprep.subr.mxu0 %v722
        %796 = vmatpush1.msra.mxu0 %v721
        %797 = vmatprep.subr.mxu0 %v720
        %798 = vmatpush1.msra.mxu0 %v719
        %799 = vmatprep.subr.mxu0 %v718
        %800 = vmatpush1.msra.mxu0 %v717
        %801 = vmatprep.subr.mxu0 %v716
        %802 = vmatpush1.msra.mxu0 %v715
        %803 = vmatprep.subr.mxu0 %v714
        %804 = vmatpush1.msra.mxu0 %v713
        %805 = vmatprep.subr.mxu0 %v712
        %806 = vmatpush1.msra.mxu0 %v711
        %807 = vmatprep.subr.mxu0 %v774
        %808 = vmatpush2.msra.mxu0 %v773
        %809 = vmatprep.subr.mxu0 %v772
        %810 = vmatpush2.msra.mxu0 %v771
        %811 = vmatprep.subr.mxu0 %v770
        %812 = vmatpush2.msra.mxu0 %v769
        %813 = vmatprep.subr.mxu0 %v768
        %814 = vmatpush2.msra.mxu0 %v767
        %815 = vmatprep.subr.mxu0 %v766
        %816 = vmatpush2.msra.mxu0 %v765
        %817 = vmatprep.subr.mxu0 %v764
        %818 = vmatpush2.msra.mxu0 %v763
        %819 = vmatprep.subr.mxu0 %v762
        %820 = vmatpush2.msra.mxu0 %v761
        %821 = vmatprep.subr.mxu0 %v760
        %822 = vmatpush2.msra.mxu0 %v759
        %823 = vmatprep.subr.mxu0 %v758
        %824 = vmatpush2.msra.mxu0 %v757
        %825 = vmatprep.subr.mxu0 %v756
        %826 = vmatpush2.msra.mxu0 %v755
        %827 = vmatprep.subr.mxu0 %v754
        %828 = vmatpush2.msra.mxu0 %v753
        %829 = vmatprep.subr.mxu0 %v752
        %830 = vmatpush2.msra.mxu0 %v751
        %831 = vmatprep.subr.mxu0 %v750
        %832 = vmatpush2.msra.mxu0 %v749
        %833 = vmatprep.subr.mxu0 %v748
        %834 = vmatpush2.msra.mxu0 %v747
        %835 = vmatprep.subr.mxu0 %v746
        %836 = vmatpush2.msra.mxu0 %v745
        %837 = vmatprep.subr.mxu0 %v744
        %838 = vmatpush2.msra.mxu0 %v743
        %839 = vmatprep.mubr.f32.mxu0 %v696
        %840 = vmatmul.mubr.f32.gmra.mxu0 %v695
        %v841 = vpop.f32.mrf.mxu0
        %v842 = vadd.f32 0.0, %v841
        %v843 = vpop.f32.mrf.mxu0
        %v844 = vadd.f32 0.0, %v843
        %845 = vmatprep.mubr.f32.mxu0 %v698
        %846 = vmatmul.mubr.f32.gmra.mxu0 %v697
        %v847 = vpop.f32.mrf.mxu0
        %v848 = vadd.f32 0.0, %v847
        %v849 = vpop.f32.mrf.mxu0
        %v850 = vadd.f32 0.0, %v849
        %851 = vmatprep.mubr.f32.mxu0 %v700
        %852 = vmatmul.mubr.f32.gmra.mxu0 %v699
        %v853 = vpop.f32.mrf.mxu0
        %v854 = vadd.f32 0.0, %v853
        %v855 = vpop.f32.mrf.mxu0
        %v856 = vadd.f32 0.0, %v855
        %857 = vmatprep.mubr.f32.mxu0 %v702
        %858 = vmatmul.mubr.f32.gmra.mxu0 %v701
        %v859 = vpop.f32.mrf.mxu0
        %v860 = vadd.f32 0.0, %v859
        %v861 = vpop.f32.mrf.mxu0
        %v862 = vadd.f32 0.0, %v861
        %863 = vdwg.mxu0
        %v864 = vadd.f32 %v703, %v842
        %v865 = vadd.f32 %v704, %v844
        %v866 = vadd.f32 %v705, %v848
        %v867 = vadd.f32 %v706, %v850
        %v868 = vadd.f32 %v707, %v854
        %v869 = vadd.f32 %v708, %v856
        %v870 = vadd.f32 %v709, %v860
        %v871 = vadd.f32 %v710, %v862
        %872 = vst [vmem:[#allocation2] sm:$0xff] %v864
        %873 = vst [vmem:[#allocation2 + $0x8] sm:$0xff] %v865
        %874 = vst [vmem:[#allocation2 + $0x10] sm:$0xff] %v866
        %875 = vst [vmem:[#allocation2 + $0x18] sm:$0xff] %v867
        %876 = vst [vmem:[#allocation2 + $0x20] sm:$0xff] %v868
        %877 = vst [vmem:[#allocation2 + $0x28] sm:$0xff] %v869
        %878 = vst [vmem:[#allocation2 + $0x30] sm:$0xff] %v870
        %879 = vst [vmem:[#allocation2 + $0x38] sm:$0xff] %v871
        %p880 = scmp.eq.s32.totalorder %s23, 1
        // Predicated region
        $region76: #{transformer_encoder.6} parent=66 // pred_check
          %p881 = pneg %p880
        $region77: #{transformer_encoder.6} parent=66 // pred_check_branch
          %883 = sbr.rel (%p881) target = $region79
        $region78: #{transformer_encoder.6} parent=66 // pred_region
          %v884 = vld [vmem:[#allocation2] sm:$0xff]
          %v885 = vld [vmem:[#allocation2 + $0x8] sm:$0xff]
          %v886 = vld [vmem:[#allocation2 + $0x10] sm:$0xff]
          %v887 = vld [vmem:[#allocation2 + $0x18] sm:$0xff]
          %v888 = vld [vmem:[#allocation2 + $0x20] sm:$0xff]
          %v889 = vld [vmem:[#allocation2 + $0x28] sm:$0xff]
          %v890 = vld [vmem:[#allocation2 + $0x30] sm:$0xff]
          %v891 = vld [vmem:[#allocation2 + $0x38] sm:$0xff]
          %v892 = vadd.f32 %v522, %v884
          %v893 = vadd.f32 %v523, %v885
          %v894 = vadd.f32 %v524, %v886
          %v895 = vadd.f32 %v525, %v887
          %v896 = vadd.f32 %v526, %v888
          %v897 = vadd.f32 %v527, %v889
          %v898 = vadd.f32 %v528, %v890
          %v899 = vadd.f32 %v529, %v891
          %v900 = vld [vmem:[%s4] sm:$0x3]
          %v902 = vlaneseq
          %v903 = vshrl.u32 %v902, 7
          %v904 = vsub.s32 0, %v903
          %v905 = vrot.slane %v900, %v904
          %v906 = vlaneseq
          %v907 = vshrl.u32 %v906, 7
          %v908 = vsub.s32 1, %v907
          %v909 = vrot.slane %v900, %v908
          %v912 = vadd.f32 %v892, %v905
          %v913 = vadd.f32 %v893, %v909
          %v914 = vadd.f32 %v894, %v905
          %v915 = vadd.f32 %v895, %v909
          %v916 = vadd.f32 %v896, %v905
          %v917 = vadd.f32 %v897, %v909
          %v918 = vadd.f32 %v898, %v905
          %v919 = vadd.f32 %v899, %v909
          %v920 = vld [vmem:[%s5] sm:$0x3]
          %v921 = vld [vmem:[%s6] sm:$0x3]
          %v922 = vadd.f32 %v912, %v913
          %923 = vadd.xlane.f32.xlu0 %v922
          %v924 = vpop.xlane.xlu0 %923
          %v925 = vadd.f32 %v914, %v915
          %926 = vadd.xlane.f32.xlu0 %v925
          %v927 = vpop.xlane.xlu0 %926
          %v928 = vadd.f32 %v916, %v917
          %929 = vadd.xlane.f32.xlu0 %v928
          %v930 = vpop.xlane.xlu0 %929
          %v931 = vadd.f32 %v918, %v919
          %932 = vadd.xlane.f32.xlu0 %v931
          %v933 = vpop.xlane.xlu0 %932
          %v934 = vrcp.pop 256.0
          %v935 = vmul.f32 %v924, %v934
          %v936 = vmul.f32 %v927, %v934
          %v937 = vmul.f32 %v930, %v934
          %v938 = vmul.f32 %v933, %v934
          %v939 = vsub.f32 %v912, %v935
          %v940 = vsub.f32 %v913, %v935
          %v941 = vsub.f32 %v914, %v936
          %v942 = vsub.f32 %v915, %v936
          %v943 = vsub.f32 %v916, %v937
          %v944 = vsub.f32 %v917, %v937
          %v945 = vsub.f32 %v918, %v938
          %v946 = vsub.f32 %v919, %v938
          %v947 = vmul.f32 %v939, %v939
          %v948 = vmul.f32 %v940, %v940
          %v949 = vmul.f32 %v941, %v941
          %v950 = vmul.f32 %v942, %v942
          %v951 = vmul.f32 %v943, %v943
          %v952 = vmul.f32 %v944, %v944
          %v953 = vmul.f32 %v945, %v945
          %v954 = vmul.f32 %v946, %v946
          %v955 = vadd.f32 %v947, %v948
          %956 = vadd.xlane.f32.xlu0 %v955
          %v957 = vpop.xlane.xlu0 %956
          %v958 = vadd.f32 %v949, %v950
          %959 = vadd.xlane.f32.xlu0 %v958
          %v960 = vpop.xlane.xlu0 %959
          %v961 = vadd.f32 %v951, %v952
          %962 = vadd.xlane.f32.xlu0 %v961
          %v963 = vpop.xlane.xlu0 %962
          %v964 = vadd.f32 %v953, %v954
          %965 = vadd.xlane.f32.xlu0 %v964
          %v966 = vpop.xlane.xlu0 %965
          %v967 = vmul.f32 %v957, %v934
          %v968 = vmul.f32 %v960, %v934
          %v969 = vmul.f32 %v963, %v934
          %v970 = vmul.f32 %v966, %v934
          %v971 = vadd.f32 %v967, 1e-05
          %v972 = vadd.f32 %v968, 1e-05
          %v973 = vadd.f32 %v969, 1e-05
          %v974 = vadd.f32 %v970, 1e-05
          %v975 = vrsqrt.pop %v971
          %v976 = vrsqrt.pop %v972
          %v977 = vrsqrt.pop %v973
          %v978 = vrsqrt.pop %v974
          %v979 = vmul.f32 %v939, %v975
          %v980 = vmul.f32 %v940, %v975
          %v981 = vmul.f32 %v941, %v976
          %v982 = vmul.f32 %v942, %v976
          %v983 = vmul.f32 %v943, %v977
          %v984 = vmul.f32 %v944, %v977
          %v985 = vmul.f32 %v945, %v978
          %v986 = vmul.f32 %v946, %v978
          %v988 = vlaneseq
          %v989 = vshrl.u32 %v988, 7
          %v990 = vsub.s32 0, %v989
          %v991 = vrot.slane %v920, %v990
          %v992 = vlaneseq
          %v993 = vshrl.u32 %v992, 7
          %v994 = vsub.s32 1, %v993
          %v995 = vrot.slane %v920, %v994
          %v998 = vmul.f32 %v979, %v991
          %v999 = vmul.f32 %v980, %v995
          %v1000 = vmul.f32 %v981, %v991
          %v1001 = vmul.f32 %v982, %v995
          %v1002 = vmul.f32 %v983, %v991
          %v1003 = vmul.f32 %v984, %v995
          %v1004 = vmul.f32 %v985, %v991
          %v1005 = vmul.f32 %v986, %v995
          %v1007 = vlaneseq
          %v1008 = vshrl.u32 %v1007, 7
          %v1009 = vsub.s32 0, %v1008
          %v1010 = vrot.slane %v921, %v1009
          %v1011 = vlaneseq
          %v1012 = vshrl.u32 %v1011, 7
          %v1013 = vsub.s32 1, %v1012
          %v1014 = vrot.slane %v921, %v1013
          %v1017 = vadd.f32 %v998, %v1010
          %v1018 = vadd.f32 %v999, %v1014
          %v1019 = vadd.f32 %v1000, %v1010
          %v1020 = vadd.f32 %v1001, %v1014
          %v1021 = vadd.f32 %v1002, %v1010
          %v1022 = vadd.f32 %v1003, %v1014
          %v1023 = vadd.f32 %v1004, %v1010
          %v1024 = vadd.f32 %v1005, %v1014
          %1025 = vst [vmem:[%s508] sm:$0xff] %v1017
          %1026 = vst [vmem:[%s508 + $0x8] sm:$0xff] %v1018
          %1027 = vst [vmem:[%s508 + $0x10] sm:$0xff] %v1019
          %1028 = vst [vmem:[%s508 + $0x18] sm:$0xff] %v1020
          %1029 = vst [vmem:[%s508 + $0x20] sm:$0xff] %v1021
          %1030 = vst [vmem:[%s508 + $0x28] sm:$0xff] %v1022
          %1031 = vst [vmem:[%s508 + $0x30] sm:$0xff] %v1023
          %1032 = vst [vmem:[%s508 + $0x38] sm:$0xff] %v1024
        $region79: #{transformer_encoder.6} parent=66 // pred_fallthru
          _
        %s1033 = smul.u32 4, %s22
        %p1034 = scmp.lt.s32.totalorder %s1033, 15
        %s1035 = scalar_select %p1034, %s1033, 15
        %s1036 = smul.addr %s1035, 2
        %s1037 = smul.addr %s1036, 8
        %s1038 = scalar_lea.vmem %s7, %s1037
        // Predicated region
        $region80: #{transformer_encoder.6} parent=66 // pred_check
          %p1039 = pneg %p215
        $region81: #{transformer_encoder.6} parent=66 // pred_check_branch
          %1041 = sbr.rel (%p1039) target = $region83
        $region82: #{transformer_encoder.6} parent=66 // pred_region
          %s1042 = smul.u32 4, %s22
        $region83: #{transformer_encoder.6} parent=66 // pred_fallthru
          _
      $region67: #{transformer_encoder.6} parent=5 // pred_fallthru
        _
      %p1043 = scmp.le.s32.totalorder 2, %s13
      // Predicated region
      $region84: #{transformer_encoder.6} parent=5 // pred_check
        %p1044 = pneg %p1043
      $region85: #{transformer_encoder.6} parent=5 // pred_check_branch
        %1046 = sbr.rel (%p1044) target = $region87
      $region86: #{transformer_encoder.6} parent=5 // pred_region
        %s1047 = ssub.s32 %s13, 2
        // Predicated region
        $region88: #{transformer_encoder.6} parent=86 // pred_check
          %p1048 = pneg %p221
        $region89: #{transformer_encoder.6} parent=86 // pred_check_branch
          %1050 = sbr.rel (%p1048) target = $region91
        $region90: #{transformer_encoder.6} parent=86 // pred_region
          %s1051 = smul.u32 4, %s24
          %p1052 = scmp.lt.s32.totalorder %s1051, 15
          %s1053 = scalar_select %p1052, %s1051, 15
          %s1054 = smul.addr %s1053, 2
          %s1055 = smul.addr %s1054, 8
          %s1056 = scalar_lea.vmem %s7, %s1055
        $region91: #{transformer_encoder.6} parent=86 // pred_fallthru
          _
      $region87: #{transformer_encoder.6} parent=5 // pred_fallthru
        _
    $region6: #{transformer_encoder.6} parent=1 // loop_footer
      %s17 = sadd.s32 1, %s13
    $region7: #{transformer_encoder.6} parent=1 // loop_footer_branch
      %12 = sbr.rel target = $region3
    $region8: #{transformer_encoder.6} parent=1 // loop_exit
      _

// kernel: transformer_encoder.5
$region0: #{transformer_encoder.5}
  #allocation0 [shape = 'u32[]', space=smem, size = 0x4, offset = 0x4, fixed_abs, tag = 'smem constant byte address 0x4 - core index']
  #allocation1 [shape = 'u32[144,128]{1,0:T(1,128)}', space=vmem, size = 0x12000, scoped, tag = 'internal scratch']
  #allocation2 [shape = 'f32[32,256]{1,0:T(8,128)}', space=vmem, size = 0x8000, scoped, tag = 'scratch operand']
  %s0 = inlined_call_operand.vmem [shape: f32[2,64,256], index: 0, kind: input, shape index: {}, may-alias: {0,1}]
  %s1 = inlined_call_operand.vmem [shape: f32[2,64,256], index: 1, kind: input, shape index: {}, may-alias: {0,1}]
  %s2 = inlined_call_operand.vmem [shape: f32[2,256,128], index: 2, kind: input, shape index: {}]
  %s3 = inlined_call_operand.vmem [shape: f32[2,1,128], index: 3, kind: input, shape index: {}]
  %s4 = inlined_call_operand.vmem [shape: f32[2,256,256], index: 4, kind: input, shape index: {}]
  %s5 = inlined_call_operand.vmem [shape: f32[2,1,256], index: 5, kind: input, shape index: {}]
  %s6 = inlined_call_operand.vmem [shape: f32[2,128,256], index: 6, kind: input, shape index: {}]
  %s7 = inlined_call_operand.vmem [shape: f32[1,256], index: 7, kind: input, shape index: {}]
  %s8 = inlined_call_operand.vmem [shape: f32[1,256], index: 8, kind: input, shape index: {}]
  %s9 = inlined_call_operand.vmem [shape: f32[1,256], index: 9, kind: input, shape index: {}]
  %s10 = inlined_call_operand.vmem [shape: f32[2,64,256], index: 10, kind: output, shape index: {}]
  %s11 = sld [smem:[#allocation0]]
  $region81: #{transformer_encoder.5} parent=0
    _
  %s13 = ssub.s32 1, %s11
  %s14 = scalar_select 0, %s13, %s11
  loop: start=0, step=1, limit=10
  $region2: #{transformer_encoder.5} parent=0 // loop_pre_header
    _
  $region3: #{transformer_encoder.5} parent=0 // loop_header
    %s16 = sphi 0, %s20
    %p17 = scmp.ge.s32.totalorder %s16, 10
    %s23 = sphi 0, %s42
    %s24 = sphi 0, %s38
    %s25 = sphi 0, %s34
    %s26 = sphi 0, %s23
    %s27 = sphi 0, %s24
    %s28 = sphi 0, %s25
    %s29 = sphi 0, %s26
    %s30 = sphi 0, %s27
    %s31 = sphi 0, %s28
    %s47 = sphi 0, %s49
    %s50 = sphi 0, %s47
    %s51 = sphi 0, %s50
    %s67 = sphi 0, %s51
    %s73 = sphi 0, %s75
    %s76 = sphi 0, %s73
    %s77 = sphi 0, %s76
    %s93 = sphi 0, %s77
    %s99 = sphi 0, %s101
    %s102 = sphi 0, %s99
    %s103 = sphi 0, %s102
    %s119 = sphi 0, %s103
    %s125 = sphi 0, %s127
    %s128 = sphi 0, %s125
    %s129 = sphi 0, %s128
    %s145 = sphi 0, %s129
    %s151 = sphi 0, %s153
    %s154 = sphi 0, %s151
    %s155 = sphi 0, %s154
    %s171 = sphi 0, %s155
    %s177 = sphi 0, %s179
    %s180 = sphi 0, %s177
    %s181 = sphi 0, %s180
    %s197 = sphi 0, %s181
    %s203 = sphi 0, %s205
    %s206 = sphi 0, %s203
    %s207 = sphi 0, %s206
    %s223 = sphi 0, %s207
    %s227 = sphi 0, %s227
    %s229 = sphi 0, %s227
    %s230 = sphi 0, %s229
    %s244 = sphi 0, %s230
    %s248 = sphi 0, %s248
    %s250 = sphi 0, %s248
    %s251 = sphi 0, %s250
    %s265 = sphi 0, %s251
    %s269 = sphi 0, %s269
    %s271 = sphi 0, %s269
    %s272 = sphi 0, %s271
    %s286 = sphi 0, %s272
    %s294 = sphi 0, %s296
    %s297 = sphi 0, %s294
    %s298 = sphi 0, %s297
    %s314 = sphi 0, %s298
  $region4: #{transformer_encoder.5} parent=0 // loop_header_branch
    %19 = sbr.rel (%p17) target = $region8
  $region5: #{transformer_encoder.5} parent=0 // loop_body
    %s21 = ssub.s32 %s16, 1
    %s22 = ssub.s32 %s16, 2
    %s32 = sadd.s32 1, %s25
    %p33 = scmp.ge.s32.totalorder %s32, 2
    %s34 = scalar_select %p33, 0, %s32
    %s35 = sadd.s32 1, %s24
    %s36 = scalar_select %p33, %s35, %s24
    %p37 = scmp.ge.s32.totalorder %s36, 2
    %s38 = scalar_select %p37, 0, %s36
    %s39 = sadd.s32 1, %s23
    %s40 = scalar_select %p37, %s39, %s23
    %p41 = scmp.ge.s32.totalorder %s40, 2
    %s42 = scalar_select %p41, 0, %s40
    %s43 = ssub.s32 %s23, %s42
    %s44 = ssub.s32 %s24, %s38
    %s45 = sor.u32 %s43, %s44
    %p46 = scmp.eq.s32.totalorder %s45, 0
    %s48 = sadd.s32 %s47, 1
    %s49 = scalar_select %p46, %s47, %s48
    %p52 = pneg %p46
    %p53 = scmp.eq.s32.totalorder %s16, 7
    %p54 = por %p52, %p53
    %p55 = scmp.ne.s32.totalorder %s47, %s50
    %p56 = scmp.eq.s32.totalorder %s16, 0
    %p57 = por %p55, %p56
    %p58 = scmp.ne.s32.totalorder %s47, %s50
    %p59 = scmp.eq.s32.totalorder %s21, 7
    %p60 = por %p58, %p59
    %p61 = scmp.ne.s32.totalorder %s50, %s51
    %p62 = scmp.eq.s32.totalorder %s21, 0
    %p63 = por %p61, %p62
    %p64 = scmp.ne.s32.totalorder %s50, %s51
    %p65 = scmp.eq.s32.totalorder %s22, 7
    %p66 = por %p64, %p65
    %p68 = scmp.ne.s32.totalorder %s51, %s67
    %p69 = scmp.eq.s32.totalorder %s22, 0
    %p70 = por %p68, %p69
    %s71 = ssub.s32 %s23, %s42
    %p72 = scmp.eq.s32.totalorder %s71, 0
    %s74 = sadd.s32 %s73, 1
    %s75 = scalar_select %p72, %s73, %s74
    %p78 = pneg %p72
    %p79 = scmp.eq.s32.totalorder %s16, 7
    %p80 = por %p78, %p79
    %p81 = scmp.ne.s32.totalorder %s73, %s76
    %p82 = scmp.eq.s32.totalorder %s16, 0
    %p83 = por %p81, %p82
    %p84 = scmp.ne.s32.totalorder %s73, %s76
    %p85 = scmp.eq.s32.totalorder %s21, 7
    %p86 = por %p84, %p85
    %p87 = scmp.ne.s32.totalorder %s76, %s77
    %p88 = scmp.eq.s32.totalorder %s21, 0
    %p89 = por %p87, %p88
    %p90 = scmp.ne.s32.totalorder %s76, %s77
    %p91 = scmp.eq.s32.totalorder %s22, 7
    %p92 = por %p90, %p91
    %p94 = scmp.ne.s32.totalorder %s77, %s93
    %p95 = scmp.eq.s32.totalorder %s22, 0
    %p96 = por %p94, %p95
    %s97 = ssub.s32 %s25, %s34
    %p98 = scmp.eq.s32.totalorder %s97, 0
    %s100 = sadd.s32 %s99, 1
    %s101 = scalar_select %p98, %s99, %s100
    %p104 = pneg %p98
    %p105 = scmp.eq.s32.totalorder %s16, 7
    %p106 = por %p104, %p105
    %p107 = scmp.ne.s32.totalorder %s99, %s102
    %p108 = scmp.eq.s32.totalorder %s16, 0
    %p109 = por %p107, %p108
    %p110 = scmp.ne.s32.totalorder %s99, %s102
    %p111 = scmp.eq.s32.totalorder %s21, 7
    %p112 = por %p110, %p111
    %p113 = scmp.ne.s32.totalorder %s102, %s103
    %p114 = scmp.eq.s32.totalorder %s21, 0
    %p115 = por %p113, %p114
    %p116 = scmp.ne.s32.totalorder %s102, %s103
    %p117 = scmp.eq.s32.totalorder %s22, 7
    %p118 = por %p116, %p117
    %p120 = scmp.ne.s32.totalorder %s103, %s119
    %p121 = scmp.eq.s32.totalorder %s22, 0
    %p122 = por %p120, %p121
    %s123 = ssub.s32 %s25, %s34
    %p124 = scmp.eq.s32.totalorder %s123, 0
    %s126 = sadd.s32 %s125, 1
    %s127 = scalar_select %p124, %s125, %s126
    %p130 = pneg %p124
    %p131 = scmp.eq.s32.totalorder %s16, 7
    %p132 = por %p130, %p131
    %p133 = scmp.ne.s32.totalorder %s125, %s128
    %p134 = scmp.eq.s32.totalorder %s16, 0
    %p135 = por %p133, %p134
    %p136 = scmp.ne.s32.totalorder %s125, %s128
    %p137 = scmp.eq.s32.totalorder %s21, 7
    %p138 = por %p136, %p137
    %p139 = scmp.ne.s32.totalorder %s128, %s129
    %p140 = scmp.eq.s32.totalorder %s21, 0
    %p141 = por %p139, %p140
    %p142 = scmp.ne.s32.totalorder %s128, %s129
    %p143 = scmp.eq.s32.totalorder %s22, 7
    %p144 = por %p142, %p143
    %p146 = scmp.ne.s32.totalorder %s129, %s145
    %p147 = scmp.eq.s32.totalorder %s22, 0
    %p148 = por %p146, %p147
    %s149 = ssub.s32 %s25, %s34
    %p150 = scmp.eq.s32.totalorder %s149, 0
    %s152 = sadd.s32 %s151, 1
    %s153 = scalar_select %p150, %s151, %s152
    %p156 = pneg %p150
    %p157 = scmp.eq.s32.totalorder %s16, 7
    %p158 = por %p156, %p157
    %p159 = scmp.ne.s32.totalorder %s151, %s154
    %p160 = scmp.eq.s32.totalorder %s16, 0
    %p161 = por %p159, %p160
    %p162 = scmp.ne.s32.totalorder %s151, %s154
    %p163 = scmp.eq.s32.totalorder %s21, 7
    %p164 = por %p162, %p163
    %p165 = scmp.ne.s32.totalorder %s154, %s155
    %p166 = scmp.eq.s32.totalorder %s21, 0
    %p167 = por %p165, %p166
    %p168 = scmp.ne.s32.totalorder %s154, %s155
    %p169 = scmp.eq.s32.totalorder %s22, 7
    %p170 = por %p168, %p169
    %p172 = scmp.ne.s32.totalorder %s155, %s171
    %p173 = scmp.eq.s32.totalorder %s22, 0
    %p174 = por %p172, %p173
    %s175 = ssub.s32 %s25, %s34
    %p176 = scmp.eq.s32.totalorder %s175, 0
    %s178 = sadd.s32 %s177, 1
    %s179 = scalar_select %p176, %s177, %s178
    %p182 = pneg %p176
    %p183 = scmp.eq.s32.totalorder %s16, 7
    %p184 = por %p182, %p183
    %p185 = scmp.ne.s32.totalorder %s177, %s180
    %p186 = scmp.eq.s32.totalorder %s16, 0
    %p187 = por %p185, %p186
    %p188 = scmp.ne.s32.totalorder %s177, %s180
    %p189 = scmp.eq.s32.totalorder %s21, 7
    %p190 = por %p188, %p189
    %p191 = scmp.ne.s32.totalorder %s180, %s181
    %p192 = scmp.eq.s32.totalorder %s21, 0
    %p193 = por %p191, %p192
    %p194 = scmp.ne.s32.totalorder %s180, %s181
    %p195 = scmp.eq.s32.totalorder %s22, 7
    %p196 = por %p194, %p195
    %p198 = scmp.ne.s32.totalorder %s181, %s197
    %p199 = scmp.eq.s32.totalorder %s22, 0
    %p200 = por %p198, %p199
    %s201 = ssub.s32 %s25, %s34
    %p202 = scmp.eq.s32.totalorder %s201, 0
    %s204 = sadd.s32 %s203, 1
    %s205 = scalar_select %p202, %s203, %s204
    %p208 = pneg %p202
    %p209 = scmp.eq.s32.totalorder %s16, 7
    %p210 = por %p208, %p209
    %p211 = scmp.ne.s32.totalorder %s203, %s206
    %p212 = scmp.eq.s32.totalorder %s16, 0
    %p213 = por %p211, %p212
    %p214 = scmp.ne.s32.totalorder %s203, %s206
    %p215 = scmp.eq.s32.totalorder %s21, 7
    %p216 = por %p214, %p215
    %p217 = scmp.ne.s32.totalorder %s206, %s207
    %p218 = scmp.eq.s32.totalorder %s21, 0
    %p219 = por %p217, %p218
    %p220 = scmp.ne.s32.totalorder %s206, %s207
    %p221 = scmp.eq.s32.totalorder %s22, 7
    %p222 = por %p220, %p221
    %p224 = scmp.ne.s32.totalorder %s207, %s223
    %p225 = scmp.eq.s32.totalorder %s22, 0
    %p226 = por %p224, %p225
    %s228 = sadd.s32 %s227, 1
    %p231 = scmp.eq.s32.totalorder %s16, 7
    %p232 = scmp.ne.s32.totalorder %s227, %s229
    %p233 = scmp.eq.s32.totalorder %s16, 0
    %p234 = por %p232, %p233
    %p235 = scmp.ne.s32.totalorder %s227, %s229
    %p236 = scmp.eq.s32.totalorder %s21, 7
    %p237 = por %p235, %p236
    %p238 = scmp.ne.s32.totalorder %s229, %s230
    %p239 = scmp.eq.s32.totalorder %s21, 0
    %p240 = por %p238, %p239
    %p241 = scmp.ne.s32.totalorder %s229, %s230
    %p242 = scmp.eq.s32.totalorder %s22, 7
    %p243 = por %p241, %p242
    %p245 = scmp.ne.s32.totalorder %s230, %s244
    %p246 = scmp.eq.s32.totalorder %s22, 0
    %p247 = por %p245, %p246
    %s249 = sadd.s32 %s248, 1
    %p252 = scmp.eq.s32.totalorder %s16, 7
    %p253 = scmp.ne.s32.totalorder %s248, %s250
    %p254 = scmp.eq.s32.totalorder %s16, 0
    %p255 = por %p253, %p254
    %p256 = scmp.ne.s32.totalorder %s248, %s250
    %p257 = scmp.eq.s32.totalorder %s21, 7
    %p258 = por %p256, %p257
    %p259 = scmp.ne.s32.totalorder %s250, %s251
    %p260 = scmp.eq.s32.totalorder %s21, 0
    %p261 = por %p259, %p260
    %p262 = scmp.ne.s32.totalorder %s250, %s251
    %p263 = scmp.eq.s32.totalorder %s22, 7
    %p264 = por %p262, %p263
    %p266 = scmp.ne.s32.totalorder %s251, %s265
    %p267 = scmp.eq.s32.totalorder %s22, 0
    %p268 = por %p266, %p267
    %s270 = sadd.s32 %s269, 1
    %p273 = scmp.eq.s32.totalorder %s16, 7
    %p274 = scmp.ne.s32.totalorder %s269, %s271
    %p275 = scmp.eq.s32.totalorder %s16, 0
    %p276 = por %p274, %p275
    %p277 = scmp.ne.s32.totalorder %s269, %s271
    %p278 = scmp.eq.s32.totalorder %s21, 7
    %p279 = por %p277, %p278
    %p280 = scmp.ne.s32.totalorder %s271, %s272
    %p281 = scmp.eq.s32.totalorder %s21, 0
    %p282 = por %p280, %p281
    %p283 = scmp.ne.s32.totalorder %s271, %s272
    %p284 = scmp.eq.s32.totalorder %s22, 7
    %p285 = por %p283, %p284
    %p287 = scmp.ne.s32.totalorder %s272, %s286
    %p288 = scmp.eq.s32.totalorder %s22, 0
    %p289 = por %p287, %p288
    %s290 = ssub.s32 %s23, %s42
    %s291 = ssub.s32 %s24, %s38
    %s292 = sor.u32 %s290, %s291
    %p293 = scmp.eq.s32.totalorder %s292, 0
    %s295 = sadd.s32 %s294, 1
    %s296 = scalar_select %p293, %s294, %s295
    %p299 = pneg %p293
    %p300 = scmp.eq.s32.totalorder %s16, 7
    %p301 = por %p299, %p300
    %p302 = scmp.ne.s32.totalorder %s294, %s297
    %p303 = scmp.eq.s32.totalorder %s16, 0
    %p304 = por %p302, %p303
    %p305 = scmp.ne.s32.totalorder %s294, %s297
    %p306 = scmp.eq.s32.totalorder %s21, 7
    %p307 = por %p305, %p306
    %p308 = scmp.ne.s32.totalorder %s297, %s298
    %p309 = scmp.eq.s32.totalorder %s21, 0
    %p310 = por %p308, %p309
    %p311 = scmp.ne.s32.totalorder %s297, %s298
    %p312 = scmp.eq.s32.totalorder %s22, 7
    %p313 = por %p311, %p312
    %p315 = scmp.ne.s32.totalorder %s298, %s314
    %p316 = scmp.eq.s32.totalorder %s22, 0
    %p317 = por %p315, %p316
    %p318 = scmp.le.s32.totalorder 1, %s16
    %p319 = scmp.lt.s32.totalorder %s16, 9
    %p320 = pnand %p318, %p319
    %p321 = pneg %p320
    // Predicated region
    $region9: #{transformer_encoder.5} parent=5 // pred_check
      _
    $region10: #{transformer_encoder.5} parent=5 // pred_check_branch
      %323 = sbr.rel (%p320) target = $region12
    $region11: #{transformer_encoder.5} parent=5 // pred_region
      %s324 = ssub.s32 %s16, 1
      // Predicated region
      $region13: #{transformer_encoder.5} parent=11 // pred_check
        %p325 = pneg %p240
      $region14: #{transformer_encoder.5} parent=11 // pred_check_branch
        %327 = sbr.rel (%p325) target = $region16
      $region15: #{transformer_encoder.5} parent=11 // pred_region
        _
      $region16: #{transformer_encoder.5} parent=11 // pred_fallthru
        _
      // Predicated region
      $region17: #{transformer_encoder.5} parent=11 // pred_check
        %p328 = pneg %p261
      $region18: #{transformer_encoder.5} parent=11 // pred_check_branch
        %330 = sbr.rel (%p328) target = $region20
      $region19: #{transformer_encoder.5} parent=11 // pred_region
        _
      $region20: #{transformer_encoder.5} parent=11 // pred_fallthru
        _
      // Predicated region
      $region21: #{transformer_encoder.5} parent=11 // pred_check
        %p331 = pneg %p282
      $region22: #{transformer_encoder.5} parent=11 // pred_check_branch
        %333 = sbr.rel (%p331) target = $region24
      $region23: #{transformer_encoder.5} parent=11 // pred_region
        _
      $region24: #{transformer_encoder.5} parent=11 // pred_fallthru
        _
    $region12: #{transformer_encoder.5} parent=5 // pred_fallthru
      _
    %p334 = scmp.lt.s32.totalorder %s16, 8
    // Predicated region
    $region25: #{transformer_encoder.5} parent=5 // pred_check
      %p335 = pneg %p334
    $region26: #{transformer_encoder.5} parent=5 // pred_check_branch
      %337 = sbr.rel (%p335) target = $region28
    $region27: #{transformer_encoder.5} parent=5 // pred_region
      // Predicated region
      $region29: #{transformer_encoder.5} parent=27 // pred_check
        %p338 = pneg %p57
      $region30: #{transformer_encoder.5} parent=27 // pred_check_branch
        %340 = sbr.rel (%p338) target = $region32
      $region31: #{transformer_encoder.5} parent=27 // pred_region
        %s341 = smul.u32 4, %s24
        %p342 = scmp.lt.s32.totalorder %s23, 1
        %s343 = scalar_select %p342, %s23, 1
        %p344 = scmp.lt.s32.totalorder %s341, 7
        %s345 = scalar_select %p344, %s341, 7
        %s346 = smul.addr %s345, 2
        %s347 = smul.addr %s343, 16
        %s348 = sadd.s32 %s346, %s347
        %s349 = smul.addr %s348, 8
        %s350 = scalar_lea.vmem %s0, %s349
        %s351 = smul.u32 4, %s24
      $region32: #{transformer_encoder.5} parent=27 // pred_fallthru
        _
      // Predicated region
      $region33: #{transformer_encoder.5} parent=27 // pred_check
        %p352 = pneg %p83
      $region34: #{transformer_encoder.5} parent=27 // pred_check_branch
        %354 = sbr.rel (%p352) target = $region36
      $region35: #{transformer_encoder.5} parent=27 // pred_region
        %p355 = scmp.lt.s32.totalorder %s23, 1
        %s356 = scalar_select %p355, %s23, 1
        %s357 = smul.addr %s356, 16
        %s358 = smul.addr %s357, 8
        %s359 = scalar_lea.vmem %s1, %s358
      $region36: #{transformer_encoder.5} parent=27 // pred_fallthru
        _
      // Predicated region
      $region37: #{transformer_encoder.5} parent=27 // pred_check
        %p360 = pneg %p109
      $region38: #{transformer_encoder.5} parent=27 // pred_check_branch
        %362 = sbr.rel (%p360) target = $region40
      $region39: #{transformer_encoder.5} parent=27 // pred_region
        %p363 = scmp.lt.s32.totalorder %s25, 1
        %s364 = scalar_select %p363, %s25, 1
        %s365 = smul.addr %s364, 32
        %s366 = smul.addr %s365, 8
        %s367 = scalar_lea.vmem %s2, %s366
      $region40: #{transformer_encoder.5} parent=27 // pred_fallthru
        _
      // Predicated region
      $region41: #{transformer_encoder.5} parent=27 // pred_check
        %p368 = pneg %p135
      $region42: #{transformer_encoder.5} parent=27 // pred_check_branch
        %370 = sbr.rel (%p368) target = $region44
      $region43: #{transformer_encoder.5} parent=27 // pred_region
        %p371 = scmp.lt.s32.totalorder %s25, 1
        %s372 = scalar_select %p371, %s25, 1
        %s373 = scalar_lea.vmem %s3, %s372
      $region44: #{transformer_encoder.5} parent=27 // pred_fallthru
        _
      // Predicated region
      $region45: #{transformer_encoder.5} parent=27 // pred_check
        %p374 = pneg %p161
      $region46: #{transformer_encoder.5} parent=27 // pred_check_branch
        %376 = sbr.rel (%p374) target = $region48
      $region47: #{transformer_encoder.5} parent=27 // pred_region
        %p377 = scmp.lt.s32.totalorder %s25, 1
        %s378 = scalar_select %p377, %s25, 1
        %s379 = smul.addr %s378, 64
        %s380 = smul.addr %s379, 8
        %s381 = scalar_lea.vmem %s4, %s380
      $region48: #{transformer_encoder.5} parent=27 // pred_fallthru
        _
      // Predicated region
      $region49: #{transformer_encoder.5} parent=27 // pred_check
        %p382 = pneg %p187
      $region50: #{transformer_encoder.5} parent=27 // pred_check_branch
        %384 = sbr.rel (%p382) target = $region52
      $region51: #{transformer_encoder.5} parent=27 // pred_region
        %p385 = scmp.lt.s32.totalorder %s25, 1
        %s386 = scalar_select %p385, %s25, 1
        %s387 = smul.addr %s386, 2
        %s388 = scalar_lea.vmem %s5, %s387
      $region52: #{transformer_encoder.5} parent=27 // pred_fallthru
        _
      // Predicated region
      $region53: #{transformer_encoder.5} parent=27 // pred_check
        %p389 = pneg %p213
      $region54: #{transformer_encoder.5} parent=27 // pred_check_branch
        %391 = sbr.rel (%p389) target = $region56
      $region55: #{transformer_encoder.5} parent=27 // pred_region
        %p392 = scmp.lt.s32.totalorder %s25, 1
        %s393 = scalar_select %p392, %s25, 1
        %s394 = smul.addr %s393, 32
        %s395 = smul.addr %s394, 8
        %s396 = scalar_lea.vmem %s6, %s395
      $region56: #{transformer_encoder.5} parent=27 // pred_fallthru
        _
    $region28: #{transformer_encoder.5} parent=5 // pred_fallthru
      _
    %p397 = scmp.le.s32.totalorder 1, %s16
    %p398 = scmp.lt.s32.totalorder %s16, 9
    %p399 = pnand %p397, %p398
    %p400 = pneg %p399
    // Predicated region
    $region57: #{transformer_encoder.5} parent=5 // pred_check
      _
    $region58: #{transformer_encoder.5} parent=5 // pred_check_branch
      %402 = sbr.rel (%p399) target = $region60
    $region59: #{transformer_encoder.5} parent=5 // pred_region
      %s403 = ssub.s32 %s16, 1
      %s404 = smul.u32 4, %s27
      %p405 = scmp.lt.s32.totalorder %s26, 1
      %s406 = scalar_select %p405, %s26, 1
      %p407 = scmp.lt.s32.totalorder %s404, 7
      %s408 = scalar_select %p407, %s404, 7
      %s409 = smul.addr %s408, 2
      %s410 = smul.addr %s406, 16
      %s411 = sadd.s32 %s409, %s410
      %s412 = smul.addr %s411, 8
      %s413 = scalar_lea.vmem %s0, %s412
      %p414 = pneg %p63
      %p415 = pneg %p60
      %p416 = scmp.lt.s32.totalorder %s26, 1
      %s417 = scalar_select %p416, %s26, 1
      %s418 = smul.addr %s417, 16
      %s419 = smul.addr %s418, 8
      %s420 = scalar_lea.vmem %s1, %s419
      %p421 = pneg %p89
      %p422 = pneg %p86
      %p423 = scmp.lt.s32.totalorder %s28, 1
      %s424 = scalar_select %p423, %s28, 1
      %s425 = smul.addr %s424, 32
      %s426 = smul.addr %s425, 8
      %s427 = scalar_lea.vmem %s2, %s426
      %p428 = pneg %p115
      %p429 = pneg %p112
      %p430 = scmp.lt.s32.totalorder %s28, 1
      %s431 = scalar_select %p430, %s28, 1
      %s432 = scalar_lea.vmem %s3, %s431
      %p433 = pneg %p141
      %p434 = pneg %p138
      %p435 = scmp.lt.s32.totalorder %s28, 1
      %s436 = scalar_select %p435, %s28, 1
      %s437 = smul.addr %s436, 64
      %s438 = smul.addr %s437, 8
      %s439 = scalar_lea.vmem %s4, %s438
      %p440 = pneg %p167
      %p441 = pneg %p164
      %p442 = scmp.lt.s32.totalorder %s28, 1
      %s443 = scalar_select %p442, %s28, 1
      %s444 = smul.addr %s443, 2
      %s445 = scalar_lea.vmem %s5, %s444
      %p446 = pneg %p193
      %p447 = pneg %p190
      %p448 = scmp.lt.s32.totalorder %s28, 1
      %s449 = scalar_select %p448, %s28, 1
      %s450 = smul.addr %s449, 32
      %s451 = smul.addr %s450, 8
      %s452 = scalar_lea.vmem %s6, %s451
      %p453 = pneg %p219
      %p454 = pneg %p216
      %p455 = pneg %p240
      %p456 = pneg %p237
      %p457 = pneg %p261
      %p458 = pneg %p258
      %p459 = pneg %p282
      %p460 = pneg %p279
      %p461 = pneg %p310
      %p462 = pneg %p307
      %s463 = smul.u32 4, %s27
      %p464 = scmp.lt.s32.totalorder %s26, 1
      %s465 = scalar_select %p464, %s26, 1
      %p466 = scmp.lt.s32.totalorder %s463, 7
      %s467 = scalar_select %p466, %s463, 7
      %s468 = smul.addr %s467, 2
      %s469 = smul.addr %s465, 16
      %s470 = sadd.s32 %s468, %s469
      %s471 = smul.addr %s470, 8
      %s472 = scalar_lea.vmem %s10, %s471
      %s473 = smul.u32 4, %s27
      %p474 = scmp.lt.s32.totalorder %s26, 1
      %s475 = scalar_select %p474, %s26, 1
      %p476 = scmp.lt.s32.totalorder %s473, 7
      %s477 = scalar_select %p476, %s473, 7
      %s478 = smul.addr %s477, 2
      %s479 = smul.addr %s475, 16
      %s480 = sadd.s32 %s478, %s479
      %s481 = smul.addr %s480, 8
      %s482 = scalar_lea.vmem %s0, %s481
      %s483 = smul.u32 4, %s27
      %p484 = scmp.lt.s32.totalorder %s26, 1
      %s485 = scalar_select %p484, %s26, 1
      %s486 = smul.addr %s485, 16
      %s487 = smul.addr %s486, 8
      %s488 = scalar_lea.vmem %s1, %s487
      %p489 = scmp.lt.s32.totalorder %s28, 1
      %s490 = scalar_select %p489, %s28, 1
      %s491 = smul.addr %s490, 32
      %s492 = smul.addr %s491, 8
      %s493 = scalar_lea.vmem %s2, %s492
      %p494 = scmp.lt.s32.totalorder %s28, 1
      %s495 = scalar_select %p494, %s28, 1
      %s496 = scalar_lea.vmem %s3, %s495
      %p497 = scmp.lt.s32.totalorder %s28, 1
      %s498 = scalar_select %p497, %s28, 1
      %s499 = smul.addr %s498, 64
      %s500 = smul.addr %s499, 8
      %s501 = scalar_lea.vmem %s4, %s500
      %p502 = scmp.lt.s32.totalorder %s28, 1
      %s503 = scalar_select %p502, %s28, 1
      %s504 = smul.addr %s503, 2
      %s505 = scalar_lea.vmem %s5, %s504
      %p506 = scmp.lt.s32.totalorder %s28, 1
      %s507 = scalar_select %p506, %s28, 1
      %s508 = smul.addr %s507, 32
      %s509 = smul.addr %s508, 8
      %s510 = scalar_lea.vmem %s6, %s509
      %s511 = smul.u32 4, %s27
      %p512 = scmp.lt.s32.totalorder %s26, 1
      %s513 = scalar_select %p512, %s26, 1
      %p514 = scmp.lt.s32.totalorder %s511, 7
      %s515 = scalar_select %p514, %s511, 7
      %s516 = smul.addr %s515, 2
      %s517 = smul.addr %s513, 16
      %s518 = sadd.s32 %s516, %s517
      %s519 = smul.addr %s518, 8
      %s520 = scalar_lea.vmem %s10, %s519
      %s521 = smul.u32 4, %s27
      %p522 = scmp.eq.s32.totalorder %s28, 0
      // Predicated region
      $region61: #{transformer_encoder.5} parent=59 // pred_check
        %p523 = pneg %p522
      $region62: #{transformer_encoder.5} parent=59 // pred_check_branch
        %525 = sbr.rel (%p523) target = $region64
      $region63: #{transformer_encoder.5} parent=59 // pred_region
        %526 = vst [vmem:[#allocation2] sm:$0xff] 0.0
        %527 = vst [vmem:[#allocation2 + $0x8] sm:$0xff] 0.0
        %528 = vst [vmem:[#allocation2 + $0x10] sm:$0xff] 0.0
        %529 = vst [vmem:[#allocation2 + $0x18] sm:$0xff] 0.0
        %530 = vst [vmem:[#allocation2 + $0x20] sm:$0xff] 0.0
        %531 = vst [vmem:[#allocation2 + $0x28] sm:$0xff] 0.0
        %532 = vst [vmem:[#allocation2 + $0x30] sm:$0xff] 0.0
        %533 = vst [vmem:[#allocation2 + $0x38] sm:$0xff] 0.0
      $region64: #{transformer_encoder.5} parent=59 // pred_fallthru
        _
      %v534 = vld [vmem:[%s482] sm:$0xff]
      %v535 = vld [vmem:[%s482 + $0x8] sm:$0xff]
      %v536 = vld [vmem:[%s482 + $0x10] sm:$0xff]
      %v537 = vld [vmem:[%s482 + $0x18] sm:$0xff]
      %v538 = vld [vmem:[%s482 + $0x20] sm:$0xff]
      %v539 = vld [vmem:[%s482 + $0x28] sm:$0xff]
      %v540 = vld [vmem:[%s482 + $0x30] sm:$0xff]
      %v541 = vld [vmem:[%s482 + $0x38] sm:$0xff]
      %v542 = vld [vmem:[%s488] sm:$0xff]
      %v543 = vld [vmem:[%s488 + $0x8] sm:$0xff]
      %v544 = vld [vmem:[%s488 + $0x10] sm:$0xff]
      %v545 = vld [vmem:[%s488 + $0x18] sm:$0xff]
      %v546 = vld [vmem:[%s488 + $0x20] sm:$0xff]
      %v547 = vld [vmem:[%s488 + $0x28] sm:$0xff]
      %v548 = vld [vmem:[%s488 + $0x30] sm:$0xff]
      %v549 = vld [vmem:[%s488 + $0x38] sm:$0xff]
      %v550 = vld [vmem:[%s488 + $0x40] sm:$0xff]
      %v551 = vld [vmem:[%s488 + $0x48] sm:$0xff]
      %v552 = vld [vmem:[%s488 + $0x50] sm:$0xff]
      %v553 = vld [vmem:[%s488 + $0x58] sm:$0xff]
      %v554 = vld [vmem:[%s488 + $0x60] sm:$0xff]
      %v555 = vld [vmem:[%s488 + $0x68] sm:$0xff]
      %v556 = vld [vmem:[%s488 + $0x70] sm:$0xff]
      %v557 = vld [vmem:[%s488 + $0x78] sm:$0xff]
      %v558 = vld [vmem:[%s493] sm:$0xff]
      %v559 = vld [vmem:[%s493 + $0x8] sm:$0xff]
      %v560 = vld [vmem:[%s493 + $0x10] sm:$0xff]
      %v561 = vld [vmem:[%s493 + $0x18] sm:$0xff]
      %v562 = vld [vmem:[%s493 + $0x20] sm:$0xff]
      %v563 = vld [vmem:[%s493 + $0x28] sm:$0xff]
      %v564 = vld [vmem:[%s493 + $0x30] sm:$0xff]
      %v565 = vld [vmem:[%s493 + $0x38] sm:$0xff]
      %v566 = vld [vmem:[%s493 + $0x40] sm:$0xff]
      %v567 = vld [vmem:[%s493 + $0x48] sm:$0xff]
      %v568 = vld [vmem:[%s493 + $0x50] sm:$0xff]
      %v569 = vld [vmem:[%s493 + $0x58] sm:$0xff]
      %v570 = vld [vmem:[%s493 + $0x60] sm:$0xff]
      %v571 = vld [vmem:[%s493 + $0x68] sm:$0xff]
      %v572 = vld [vmem:[%s493 + $0x70] sm:$0xff]
      %v573 = vld [vmem:[%s493 + $0x78] sm:$0xff]
      %v574 = vld [vmem:[%s493 + $0x80] sm:$0xff]
      %v575 = vld [vmem:[%s493 + $0x88] sm:$0xff]
      %v576 = vld [vmem:[%s493 + $0x90] sm:$0xff]
      %v577 = vld [vmem:[%s493 + $0x98] sm:$0xff]
      %v578 = vld [vmem:[%s493 + $0xa0] sm:$0xff]
      %v579 = vld [vmem:[%s493 + $0xa8] sm:$0xff]
      %v580 = vld [vmem:[%s493 + $0xb0] sm:$0xff]
      %v581 = vld [vmem:[%s493 + $0xb8] sm:$0xff]
      %v582 = vld [vmem:[%s493 + $0xc0] sm:$0xff]
      %v583 = vld [vmem:[%s493 + $0xc8] sm:$0xff]
      %v584 = vld [vmem:[%s493 + $0xd0] sm:$0xff]
      %v585 = vld [vmem:[%s493 + $0xd8] sm:$0xff]
      %v586 = vld [vmem:[%s493 + $0xe0] sm:$0xff]
      %v587 = vld [vmem:[%s493 + $0xe8] sm:$0xff]
      %v588 = vld [vmem:[%s493 + $0xf0] sm:$0xff]
      %v589 = vld [vmem:[%s493 + $0xf8] sm:$0xff]
      %v590 = vld [vmem:[%s496] sm:$0x1]
      %v592 = vlaneseq
      %v593 = vshrl.u32 %v592, 7
      %v594 = vsub.s32 0, %v593
      %v595 = vrot.slane %v590, %v594
      %597 = vmatprep.subr.mxu0 0.0
      %598 = vmatpush1.msra.mxu0 %v573
      %599 = vmatprep.subr.mxu0 0.0
      %600 = vmatpush1.msra.mxu0 %v572
      %601 = vmatprep.subr.mxu0 0.0
      %602 = vmatpush1.msra.mxu0 %v571
      %603 = vmatprep.subr.mxu0 0.0
      %604 = vmatpush1.msra.mxu0 %v570
      %605 = vmatprep.subr.mxu0 0.0
      %606 = vmatpush1.msra.mxu0 %v569
      %607 = vmatprep.subr.mxu0 0.0
      %608 = vmatpush1.msra.mxu0 %v568
      %609 = vmatprep.subr.mxu0 0.0
      %610 = vmatpush1.msra.mxu0 %v567
      %611 = vmatprep.subr.mxu0 0.0
      %612 = vmatpush1.msra.mxu0 %v566
      %613 = vmatprep.subr.mxu0 0.0
      %614 = vmatpush1.msra.mxu0 %v565
      %615 = vmatprep.subr.mxu0 0.0
      %616 = vmatpush1.msra.mxu0 %v564
      %617 = vmatprep.subr.mxu0 0.0
      %618 = vmatpush1.msra.mxu0 %v563
      %619 = vmatprep.subr.mxu0 0.0
      %620 = vmatpush1.msra.mxu0 %v562
      %621 = vmatprep.subr.mxu0 0.0
      %622 = vmatpush1.msra.mxu0 %v561
      %623 = vmatprep.subr.mxu0 0.0
      %624 = vmatpush1.msra.mxu0 %v560
      %625 = vmatprep.subr.mxu0 0.0
      %626 = vmatpush1.msra.mxu0 %v559
      %627 = vmatprep.subr.mxu0 0.0
      %628 = vmatpush1.msra.mxu0 %v558
      %629 = vmatprep.subr.mxu0 0.0
      %630 = vmatpush2.msra.mxu0 %v589
      %631 = vmatprep.subr.mxu0 0.0
      %632 = vmatpush2.msra.mxu0 %v588
      %633 = vmatprep.subr.mxu0 0.0
      %634 = vmatpush2.msra.mxu0 %v587
      %635 = vmatprep.subr.mxu0 0.0
      %636 = vmatpush2.msra.mxu0 %v586
      %637 = vmatprep.subr.mxu0 0.0
      %638 = vmatpush2.msra.mxu0 %v585
      %639 = vmatprep.subr.mxu0 0.0
      %640 = vmatpush2.msra.mxu0 %v584
      %641 = vmatprep.subr.mxu0 0.0
      %642 = vmatpush2.msra.mxu0 %v583
      %643 = vmatprep.subr.mxu0 0.0
      %644 = vmatpush2.msra.mxu0 %v582
      %645 = vmatprep.subr.mxu0 0.0
      %646 = vmatpush2.msra.mxu0 %v581
      %647 = vmatprep.subr.mxu0 0.0
      %648 = vmatpush2.msra.mxu0 %v580
      %649 = vmatprep.subr.mxu0 0.0
      %650 = vmatpush2.msra.mxu0 %v579
      %651 = vmatprep.subr.mxu0 0.0
      %652 = vmatpush2.msra.mxu0 %v578
      %653 = vmatprep.subr.mxu0 0.0
      %654 = vmatpush2.msra.mxu0 %v577
      %655 = vmatprep.subr.mxu0 0.0
      %656 = vmatpush2.msra.mxu0 %v576
      %657 = vmatprep.subr.mxu0 0.0
      %658 = vmatpush2.msra.mxu0 %v575
      %659 = vmatprep.subr.mxu0 0.0
      %660 = vmatpush2.msra.mxu0 %v574
      %661 = vmatprep.mubr.f32.mxu0 %v535
      %662 = vmatmul.mubr.f32.gmra.mxu0 %v534
      %v663 = vpop.f32.mrf.mxu0
      %v664 = vadd.f32 %v595, %v663
      %v665 = vpop.f32.mrf.mxu0
      %666 = vmatprep.mubr.f32.mxu0 %v537
      %667 = vmatmul.mubr.f32.gmra.mxu0 %v536
      %v668 = vpop.f32.mrf.mxu0
      %v669 = vadd.f32 %v595, %v668
      %v670 = vpop.f32.mrf.mxu0
      %671 = vmatprep.mubr.f32.mxu0 %v539
      %672 = vmatmul.mubr.f32.gmra.mxu0 %v538
      %v673 = vpop.f32.mrf.mxu0
      %v674 = vadd.f32 %v595, %v673
      %v675 = vpop.f32.mrf.mxu0
      %676 = vmatprep.mubr.f32.mxu0 %v541
      %677 = vmatmul.mubr.f32.gmra.mxu0 %v540
      %v678 = vpop.f32.mrf.mxu0
      %v679 = vadd.f32 %v595, %v678
      %v680 = vpop.f32.mrf.mxu0
      %681 = vdwg.mxu0
      %v682 = vld [vmem:[%s501] sm:$0xff]
      %v683 = vld [vmem:[%s501 + $0x8] sm:$0xff]
      %v684 = vld [vmem:[%s501 + $0x10] sm:$0xff]
      %v685 = vld [vmem:[%s501 + $0x18] sm:$0xff]
      %v686 = vld [vmem:[%s501 + $0x20] sm:$0xff]
      %v687 = vld [vmem:[%s501 + $0x28] sm:$0xff]
      %v688 = vld [vmem:[%s501 + $0x30] sm:$0xff]
      %v689 = vld [vmem:[%s501 + $0x38] sm:$0xff]
      %v690 = vld [vmem:[%s501 + $0x40] sm:$0xff]
      %v691 = vld [vmem:[%s501 + $0x48] sm:$0xff]
      %v692 = vld [vmem:[%s501 + $0x50] sm:$0xff]
      %v693 = vld [vmem:[%s501 + $0x58] sm:$0xff]
      %v694 = vld [vmem:[%s501 + $0x60] sm:$0xff]
      %v695 = vld [vmem:[%s501 + $0x68] sm:$0xff]
      %v696 = vld [vmem:[%s501 + $0x70] sm:$0xff]
      %v697 = vld [vmem:[%s501 + $0x78] sm:$0xff]
      %v698 = vld [vmem:[%s501 + $0x80] sm:$0xff]
      %v699 = vld [vmem:[%s501 + $0x88] sm:$0xff]
      %v700 = vld [vmem:[%s501 + $0x90] sm:$0xff]
      %v701 = vld [vmem:[%s501 + $0x98] sm:$0xff]
      %v702 = vld [vmem:[%s501 + $0xa0] sm:$0xff]
      %v703 = vld [vmem:[%s501 + $0xa8] sm:$0xff]
      %v704 = vld [vmem:[%s501 + $0xb0] sm:$0xff]
      %v705 = vld [vmem:[%s501 + $0xb8] sm:$0xff]
      %v706 = vld [vmem:[%s501 + $0xc0] sm:$0xff]
      %v707 = vld [vmem:[%s501 + $0xc8] sm:$0xff]
      %v708 = vld [vmem:[%s501 + $0xd0] sm:$0xff]
      %v709 = vld [vmem:[%s501 + $0xd8] sm:$0xff]
      %v710 = vld [vmem:[%s501 + $0xe0] sm:$0xff]
      %v711 = vld [vmem:[%s501 + $0xe8] sm:$0xff]
      %v712 = vld [vmem:[%s501 + $0xf0] sm:$0xff]
      %v713 = vld [vmem:[%s501 + $0xf8] sm:$0xff]
      %v714 = vld [vmem:[%s501 + $0x100] sm:$0xff]
      %v715 = vld [vmem:[%s501 + $0x108] sm:$0xff]
      %v716 = vld [vmem:[%s501 + $0x110] sm:$0xff]
      %v717 = vld [vmem:[%s501 + $0x118] sm:$0xff]
      %v718 = vld [vmem:[%s501 + $0x120] sm:$0xff]
      %v719 = vld [vmem:[%s501 + $0x128] sm:$0xff]
      %v720 = vld [vmem:[%s501 + $0x130] sm:$0xff]
      %v721 = vld [vmem:[%s501 + $0x138] sm:$0xff]
      %v722 = vld [vmem:[%s501 + $0x140] sm:$0xff]
      %v723 = vld [vmem:[%s501 + $0x148] sm:$0xff]
      %v724 = vld [vmem:[%s501 + $0x150] sm:$0xff]
      %v725 = vld [vmem:[%s501 + $0x158] sm:$0xff]
      %v726 = vld [vmem:[%s501 + $0x160] sm:$0xff]
      %v727 = vld [vmem:[%s501 + $0x168] sm:$0xff]
      %v728 = vld [vmem:[%s501 + $0x170] sm:$0xff]
      %v729 = vld [vmem:[%s501 + $0x178] sm:$0xff]
      %v730 = vld [vmem:[%s501 + $0x180] sm:$0xff]
      %v731 = vld [vmem:[%s501 + $0x188] sm:$0xff]
      %v732 = vld [vmem:[%s501 + $0x190] sm:$0xff]
      %v733 = vld [vmem:[%s501 + $0x198] sm:$0xff]
      %v734 = vld [vmem:[%s501 + $0x1a0] sm:$0xff]
      %v735 = vld [vmem:[%s501 + $0x1a8] sm:$0xff]
      %v736 = vld [vmem:[%s501 + $0x1b0] sm:$0xff]
      %v737 = vld [vmem:[%s501 + $0x1b8] sm:$0xff]
      %v738 = vld [vmem:[%s501 + $0x1c0] sm:$0xff]
      %v739 = vld [vmem:[%s501 + $0x1c8] sm:$0xff]
      %v740 = vld [vmem:[%s501 + $0x1d0] sm:$0xff]
      %v741 = vld [vmem:[%s501 + $0x1d8] sm:$0xff]
      %v742 = vld [vmem:[%s501 + $0x1e0] sm:$0xff]
      %v743 = vld [vmem:[%s501 + $0x1e8] sm:$0xff]
      %v744 = vld [vmem:[%s501 + $0x1f0] sm:$0xff]
      %v745 = vld [vmem:[%s501 + $0x1f8] sm:$0xff]
      %v746 = vld [vmem:[%s505] sm:$0x3]
      %v748 = vlaneseq
      %v749 = vshrl.u32 %v748, 7
      %v750 = vsub.s32 0, %v749
      %v751 = vrot.slane %v746, %v750
      %v752 = vlaneseq
      %v753 = vshrl.u32 %v752, 7
      %v754 = vsub.s32 1, %v753
      %v755 = vrot.slane %v746, %v754
      %758 = vmatprep.subr.mxu0 %v713
      %759 = vmatpush1.msra.mxu0 %v712
      %760 = vmatprep.subr.mxu0 %v711
      %761 = vmatpush1.msra.mxu0 %v710
      %762 = vmatprep.subr.mxu0 %v709
      %763 = vmatpush1.msra.mxu0 %v708
      %764 = vmatprep.subr.mxu0 %v707
      %765 = vmatpush1.msra.mxu0 %v706
      %766 = vmatprep.subr.mxu0 %v705
      %767 = vmatpush1.msra.mxu0 %v704
      %768 = vmatprep.subr.mxu0 %v703
      %769 = vmatpush1.msra.mxu0 %v702
      %770 = vmatprep.subr.mxu0 %v701
      %771 = vmatpush1.msra.mxu0 %v700
      %772 = vmatprep.subr.mxu0 %v699
      %773 = vmatpush1.msra.mxu0 %v698
      %774 = vmatprep.subr.mxu0 %v697
      %775 = vmatpush1.msra.mxu0 %v696
      %776 = vmatprep.subr.mxu0 %v695
      %777 = vmatpush1.msra.mxu0 %v694
      %778 = vmatprep.subr.mxu0 %v693
      %779 = vmatpush1.msra.mxu0 %v692
      %780 = vmatprep.subr.mxu0 %v691
      %781 = vmatpush1.msra.mxu0 %v690
      %782 = vmatprep.subr.mxu0 %v689
      %783 = vmatpush1.msra.mxu0 %v688
      %784 = vmatprep.subr.mxu0 %v687
      %785 = vmatpush1.msra.mxu0 %v686
      %786 = vmatprep.subr.mxu0 %v685
      %787 = vmatpush1.msra.mxu0 %v684
      %788 = vmatprep.subr.mxu0 %v683
      %789 = vmatpush1.msra.mxu0 %v682
      %790 = vmatprep.subr.mxu0 %v745
      %791 = vmatpush2.msra.mxu0 %v744
      %792 = vmatprep.subr.mxu0 %v743
      %793 = vmatpush2.msra.mxu0 %v742
      %794 = vmatprep.subr.mxu0 %v741
      %795 = vmatpush2.msra.mxu0 %v740
      %796 = vmatprep.subr.mxu0 %v739
      %797 = vmatpush2.msra.mxu0 %v738
      %798 = vmatprep.subr.mxu0 %v737
      %799 = vmatpush2.msra.mxu0 %v736
      %800 = vmatprep.subr.mxu0 %v735
      %801 = vmatpush2.msra.mxu0 %v734
      %802 = vmatprep.subr.mxu0 %v733
      %803 = vmatpush2.msra.mxu0 %v732
      %804 = vmatprep.subr.mxu0 %v731
      %805 = vmatpush2.msra.mxu0 %v730
      %806 = vmatprep.subr.mxu0 %v729
      %807 = vmatpush2.msra.mxu0 %v728
      %808 = vmatprep.subr.mxu0 %v727
      %809 = vmatpush2.msra.mxu0 %v726
      %810 = vmatprep.subr.mxu0 %v725
      %811 = vmatpush2.msra.mxu0 %v724
      %812 = vmatprep.subr.mxu0 %v723
      %813 = vmatpush2.msra.mxu0 %v722
      %814 = vmatprep.subr.mxu0 %v721
      %815 = vmatpush2.msra.mxu0 %v720
      %816 = vmatprep.subr.mxu0 %v719
      %817 = vmatpush2.msra.mxu0 %v718
      %818 = vmatprep.subr.mxu0 %v717
      %819 = vmatpush2.msra.mxu0 %v716
      %820 = vmatprep.subr.mxu0 %v715
      %821 = vmatpush2.msra.mxu0 %v714
      %822 = vmatprep.mubr.f32.mxu0 %v543
      %823 = vmatmul.mubr.f32.gmra.mxu0 %v542
      %v824 = vpop.f32.mrf.mxu0
      %v825 = vadd.f32 %v751, %v824
      %v826 = vpop.f32.mrf.mxu0
      %v827 = vadd.f32 %v755, %v826
      %828 = vmatprep.mubr.f32.mxu0 %v545
      %829 = vmatmul.mubr.f32.gmra.mxu0 %v544
      %v830 = vpop.f32.mrf.mxu0
      %v831 = vadd.f32 %v751, %v830
      %v832 = vpop.f32.mrf.mxu0
      %v833 = vadd.f32 %v755, %v832
      %834 = vmatprep.mubr.f32.mxu0 %v547
      %835 = vmatmul.mubr.f32.gmra.mxu0 %v546
      %v836 = vpop.f32.mrf.mxu0
      %v837 = vadd.f32 %v751, %v836
      %v838 = vpop.f32.mrf.mxu0
      %v839 = vadd.f32 %v755, %v838
      %840 = vmatprep.mubr.f32.mxu0 %v549
      %841 = vmatmul.mubr.f32.gmra.mxu0 %v548
      %v842 = vpop.f32.mrf.mxu0
      %v843 = vadd.f32 %v751, %v842
      %v844 = vpop.f32.mrf.mxu0
      %v845 = vadd.f32 %v755, %v844
      %846 = vmatprep.mubr.f32.mxu0 %v551
      %847 = vmatmul.mubr.f32.gmra.mxu0 %v550
      %v848 = vpop.f32.mrf.mxu0
      %v849 = vadd.f32 %v751, %v848
      %v850 = vpop.f32.mrf.mxu0
      %v851 = vadd.f32 %v755, %v850
      %852 = vmatprep.mubr.f32.mxu0 %v553
      %853 = vmatmul.mubr.f32.gmra.mxu0 %v552
      %v854 = vpop.f32.mrf.mxu0
      %v855 = vadd.f32 %v751, %v854
      %v856 = vpop.f32.mrf.mxu0
      %v857 = vadd.f32 %v755, %v856
      %858 = vmatprep.mubr.f32.mxu0 %v555
      %859 = vmatmul.mubr.f32.gmra.mxu0 %v554
      %v860 = vpop.f32.mrf.mxu0
      %v861 = vadd.f32 %v751, %v860
      %v862 = vpop.f32.mrf.mxu0
      %v863 = vadd.f32 %v755, %v862
      %864 = vmatprep.mubr.f32.mxu0 %v557
      %865 = vmatmul.mubr.f32.gmra.mxu0 %v556
      %v866 = vpop.f32.mrf.mxu0
      %v867 = vadd.f32 %v751, %v866
      %v868 = vpop.f32.mrf.mxu0
      %v869 = vadd.f32 %v755, %v868
      %870 = vdwg.mxu0
      %v871 = vmul.f32 %v664, 0.088388346
      %v872 = vmul.f32 %v669, 0.088388346
      %v873 = vmul.f32 %v674, 0.088388346
      %v874 = vmul.f32 %v679, 0.088388346
      %875 = vmatprep.subr.mxu0 0.0
      %876 = vmatpush1.xpose.msra.mxu0 0.0
      %877 = vmatprep.subr.mxu0 0.0
      %878 = vmatpush1.xpose.msra.mxu0 0.0
      %879 = vmatprep.subr.mxu0 0.0
      %880 = vmatpush1.xpose.msra.mxu0 0.0
      %881 = vmatprep.subr.mxu0 0.0
      %882 = vmatpush1.xpose.msra.mxu0 0.0
      %883 = vmatprep.subr.mxu0 0.0
      %884 = vmatpush1.xpose.msra.mxu0 0.0
      %885 = vmatprep.subr.mxu0 0.0
      %886 = vmatpush1.xpose.msra.mxu0 0.0
      %887 = vmatprep.subr.mxu0 0.0
      %888 = vmatpush1.xpose.msra.mxu0 0.0
      %889 = vmatprep.subr.mxu0 0.0
      %890 = vmatpush1.xpose.msra.mxu0 0.0
      %891 = vmatprep.subr.mxu0 0.0
      %892 = vmatpush1.xpose.msra.mxu0 %v867
      %893 = vmatprep.subr.mxu0 0.0
      %894 = vmatpush1.xpose.msra.mxu0 %v861
      %895 = vmatprep.subr.mxu0 0.0
      %896 = vmatpush1.xpose.msra.mxu0 %v855
      %897 = vmatprep.subr.mxu0 0.0
      %898 = vmatpush1.xpose.msra.mxu0 %v849
      %899 = vmatprep.subr.mxu0 0.0
      %900 = vmatpush1.xpose.msra.mxu0 %v843
      %901 = vmatprep.subr.mxu0 0.0
      %902 = vmatpush1.xpose.msra.mxu0 %v837
      %903 = vmatprep.subr.mxu0 0.0
      %904 = vmatpush1.xpose.msra.mxu0 %v831
      %905 = vmatprep.subr.mxu0 0.0
      %906 = vmatpush1.xpose.msra.mxu0 %v825
      %907 = vmatprep.subr.mxu0 0.0
      %908 = vmatpush2.xpose.msra.mxu0 0.0
      %909 = vmatprep.subr.mxu0 0.0
      %910 = vmatpush2.xpose.msra.mxu0 0.0
      %911 = vmatprep.subr.mxu0 0.0
      %912 = vmatpush2.xpose.msra.mxu0 0.0
      %913 = vmatprep.subr.mxu0 0.0
      %914 = vmatpush2.xpose.msra.mxu0 0.0
      %915 = vmatprep.subr.mxu0 0.0
      %916 = vmatpush2.xpose.msra.mxu0 0.0
      %917 = vmatprep.subr.mxu0 0.0
      %918 = vmatpush2.xpose.msra.mxu0 0.0
      %919 = vmatprep.subr.mxu0 0.0
      %920 = vmatpush2.xpose.msra.mxu0 0.0
      %921 = vmatprep.subr.mxu0 0.0
      %922 = vmatpush2.xpose.msra.mxu0 0.0
      %923 = vmatprep.subr.mxu0 0.0
      %924 = vmatpush2.xpose.msra.mxu0 0.0
      %925 = vmatprep.subr.mxu0 0.0
      %926 = vmatpush2.xpose.msra.mxu0 0.0
      %927 = vmatprep.subr.mxu0 0.0
      %928 = vmatpush2.xpose.msra.mxu0 0.0
      %929 = vmatprep.subr.mxu0 0.0
      %930 = vmatpush2.xpose.msra.mxu0 0.0
      %931 = vmatprep.subr.mxu0 0.0
      %932 = vmatpush2.xpose.msra.mxu0 0.0
      %933 = vmatprep.subr.mxu0 0.0
      %934 = vmatpush2.xpose.msra.mxu0 0.0
      %935 = vmatprep.subr.mxu0 0.0
      %936 = vmatpush2.xpose.msra.mxu0 0.0
      %937 = vmatprep.subr.mxu0 0.0
      %938 = vmatpush2.xpose.msra.mxu0 0.0
      %939 = vmatprep.mubr.f32.mxu0 0.0
      %940 = vmatmul.mubr.f32.gmra.mxu0 %v871
      %v941 = vpop.f32.mrf.mxu0
      %v942 = vadd.f32 0.0, %v941
      %v943 = vpop.f32.mrf.mxu0
      %944 = vmatprep.mubr.f32.mxu0 0.0
      %945 = vmatmul.mubr.f32.gmra.mxu0 %v872
      %v946 = vpop.f32.mrf.mxu0
      %v947 = vadd.f32 0.0, %v946
      %v948 = vpop.f32.mrf.mxu0
      %949 = vmatprep.mubr.f32.mxu0 0.0
      %950 = vmatmul.mubr.f32.gmra.mxu0 %v873
      %v951 = vpop.f32.mrf.mxu0
      %v952 = vadd.f32 0.0, %v951
      %v953 = vpop.f32.mrf.mxu0
      %954 = vmatprep.mubr.f32.mxu0 0.0
      %955 = vmatmul.mubr.f32.gmra.mxu0 %v874
      %v956 = vpop.f32.mrf.mxu0
      %v957 = vadd.f32 0.0, %v956
      %v958 = vpop.f32.mrf.mxu0
      %959 = vdwg.mxu0
      %vm960 = vcmask 523264
      %v961 = vsel %vm960, %v942, -inf
      %962 = vmax.xlane.f32.xlu0 %v961
      %v963 = vpop.xlane.xlu0 %962
      %v964 = vsel %vm960, %v947, -inf
      %965 = vmax.xlane.f32.xlu0 %v964
      %v966 = vpop.xlane.xlu0 %965
      %v967 = vsel %vm960, %v952, -inf
      %968 = vmax.xlane.f32.xlu0 %v967
      %v969 = vpop.xlane.xlu0 %968
      %v970 = vsel %vm960, %v957, -inf
      %971 = vmax.xlane.f32.xlu0 %v970
      %v972 = vpop.xlane.xlu0 %971
      %v973 = vsub.f32 %v942, %v963
      %v974 = vsub.f32 %v947, %v966
      %v975 = vsub.f32 %v952, %v969
      %v976 = vsub.f32 %v957, %v972
      %v977 = vmul.f32 %v973, 1.442695
      %v978 = vpow.pop %v977
      %v979 = vmul.f32 %v974, 1.442695
      %v980 = vpow.pop %v979
      %v981 = vmul.f32 %v975, 1.442695
      %v982 = vpow.pop %v981
      %v983 = vmul.f32 %v976, 1.442695
      %v984 = vpow.pop %v983
      %v985 = vsel %vm960, %v978, 0.0
      %986 = vadd.xlane.f32.xlu0 %v985
      %v987 = vpop.xlane.xlu0 %986
      %v988 = vsel %vm960, %v980, 0.0
      %989 = vadd.xlane.f32.xlu0 %v988
      %v990 = vpop.xlane.xlu0 %989
      %v991 = vsel %vm960, %v982, 0.0
      %992 = vadd.xlane.f32.xlu0 %v991
      %v993 = vpop.xlane.xlu0 %992
      %v994 = vsel %vm960, %v984, 0.0
      %995 = vadd.xlane.f32.xlu0 %v994
      %v996 = vpop.xlane.xlu0 %995
      %v998 = vsel %vm960, %v978, 0
      %v1001 = vsel %vm960, %v980, 0
      %v1004 = vsel %vm960, %v982, 0
      %v1007 = vsel %vm960, %v984, 0
      %1009 = vmatprep.subr.mxu0 0.0
      %1010 = vmatpush1.msra.mxu0 0.0
      %1011 = vmatprep.subr.mxu0 0.0
      %1012 = vmatpush1.msra.mxu0 0.0
      %1013 = vmatprep.subr.mxu0 0.0
      %1014 = vmatpush1.msra.mxu0 0.0
      %1015 = vmatprep.subr.mxu0 0.0
      %1016 = vmatpush1.msra.mxu0 0.0
      %1017 = vmatprep.subr.mxu0 0.0
      %1018 = vmatpush1.msra.mxu0 0.0
      %1019 = vmatprep.subr.mxu0 0.0
      %1020 = vmatpush1.msra.mxu0 0.0
      %1021 = vmatprep.subr.mxu0 0.0
      %1022 = vmatpush1.msra.mxu0 0.0
      %1023 = vmatprep.subr.mxu0 0.0
      %1024 = vmatpush1.msra.mxu0 0.0
      %1025 = vmatprep.subr.mxu0 0.0
      %1026 = vmatpush1.msra.mxu0 %v869
      %1027 = vmatprep.subr.mxu0 0.0
      %1028 = vmatpush1.msra.mxu0 %v863
      %1029 = vmatprep.subr.mxu0 0.0
      %1030 = vmatpush1.msra.mxu0 %v857
      %1031 = vmatprep.subr.mxu0 0.0
      %1032 = vmatpush1.msra.mxu0 %v851
      %1033 = vmatprep.subr.mxu0 0.0
      %1034 = vmatpush1.msra.mxu0 %v845
      %1035 = vmatprep.subr.mxu0 0.0
      %1036 = vmatpush1.msra.mxu0 %v839
      %1037 = vmatprep.subr.mxu0 0.0
      %1038 = vmatpush1.msra.mxu0 %v833
      %1039 = vmatprep.subr.mxu0 0.0
      %1040 = vmatpush1.msra.mxu0 %v827
      %1041 = vmatprep.subr.mxu0 0.0
      %1042 = vmatpush2.msra.mxu0 0.0
      %1043 = vmatprep.subr.mxu0 0.0
      %1044 = vmatpush2.msra.mxu0 0.0
      %1045 = vmatprep.subr.mxu0 0.0
      %1046 = vmatpush2.msra.mxu0 0.0
      %1047 = vmatprep.subr.mxu0 0.0
      %1048 = vmatpush2.msra.mxu0 0.0
      %1049 = vmatprep.subr.mxu0 0.0
      %1050 = vmatpush2.msra.mxu0 0.0
      %1051 = vmatprep.subr.mxu0 0.0
      %1052 = vmatpush2.msra.mxu0 0.0
      %1053 = vmatprep.subr.mxu0 0.0
      %1054 = vmatpush2.msra.mxu0 0.0
      %1055 = vmatprep.subr.mxu0 0.0
      %1056 = vmatpush2.msra.mxu0 0.0
      %1057 = vmatprep.subr.mxu0 0.0
      %1058 = vmatpush2.msra.mxu0 0.0
      %1059 = vmatprep.subr.mxu0 0.0
      %1060 = vmatpush2.msra.mxu0 0.0
      %1061 = vmatprep.subr.mxu0 0.0
      %1062 = vmatpush2.msra.mxu0 0.0
      %1063 = vmatprep.subr.mxu0 0.0
      %1064 = vmatpush2.msra.mxu0 0.0
      %1065 = vmatprep.subr.mxu0 0.0
      %1066 = vmatpush2.msra.mxu0 0.0
      %1067 = vmatprep.subr.mxu0 0.0
      %1068 = vmatpush2.msra.mxu0 0.0
      %1069 = vmatprep.subr.mxu0 0.0
      %1070 = vmatpush2.msra.mxu0 0.0
      %1071 = vmatprep.subr.mxu0 0.0
      %1072 = vmatpush2.msra.mxu0 0.0
      %1073 = vmatprep.mubr.f32.mxu0 0.0
      %1074 = vmatmul.mubr.f32.gmra.mxu0 %v998
      %v1075 = vpop.f32.mrf.mxu0
      %v1076 = vadd.f32 0.0, %v1075
      %v1077 = vpop.f32.mrf.mxu0
      %1078 = vmatprep.mubr.f32.mxu0 0.0
      %1079 = vmatmul.mubr.f32.gmra.mxu0 %v1001
      %v1080 = vpop.f32.mrf.mxu0
      %v1081 = vadd.f32 0.0, %v1080
      %v1082 = vpop.f32.mrf.mxu0
      %1083 = vmatprep.mubr.f32.mxu0 0.0
      %1084 = vmatmul.mubr.f32.gmra.mxu0 %v1004
      %v1085 = vpop.f32.mrf.mxu0
      %v1086 = vadd.f32 0.0, %v1085
      %v1087 = vpop.f32.mrf.mxu0
      %1088 = vmatprep.mubr.f32.mxu0 0.0
      %1089 = vmatmul.mubr.f32.gmra.mxu0 %v1007
      %v1090 = vpop.f32.mrf.mxu0
      %v1091 = vadd.f32 0.0, %v1090
      %v1092 = vpop.f32.mrf.mxu0
      %1093 = vdwg.mxu0
      %v1094 = vrcp.pop %v987
      %v1095 = vrcp.pop %v990
      %v1096 = vrcp.pop %v993
      %v1097 = vrcp.pop %v996
      %v1098 = vmul.f32 %v1076, %v1094
      %v1099 = vmul.f32 %v1081, %v1095
      %v1100 = vmul.f32 %v1086, %v1096
      %v1101 = vmul.f32 %v1091, %v1097
      %v1102 = vld [vmem:[#allocation2] sm:$0xff]
      %v1103 = vld [vmem:[#allocation2 + $0x8] sm:$0xff]
      %v1104 = vld [vmem:[#allocation2 + $0x10] sm:$0xff]
      %v1105 = vld [vmem:[#allocation2 + $0x18] sm:$0xff]
      %v1106 = vld [vmem:[#allocation2 + $0x20] sm:$0xff]
      %v1107 = vld [vmem:[#allocation2 + $0x28] sm:$0xff]
      %v1108 = vld [vmem:[#allocation2 + $0x30] sm:$0xff]
      %v1109 = vld [vmem:[#allocation2 + $0x38] sm:$0xff]
      %v1110 = vld [vmem:[%s510] sm:$0xff]
      %v1111 = vld [vmem:[%s510 + $0x8] sm:$0xff]
      %v1112 = vld [vmem:[%s510 + $0x10] sm:$0xff]
      %v1113 = vld [vmem:[%s510 + $0x18] sm:$0xff]
      %v1114 = vld [vmem:[%s510 + $0x20] sm:$0xff]
      %v1115 = vld [vmem:[%s510 + $0x28] sm:$0xff]
      %v1116 = vld [vmem:[%s510 + $0x30] sm:$0xff]
      %v1117 = vld [vmem:[%s510 + $0x38] sm:$0xff]
      %v1118 = vld [vmem:[%s510 + $0x40] sm:$0xff]
      %v1119 = vld [vmem:[%s510 + $0x48] sm:$0xff]
      %v1120 = vld [vmem:[%s510 + $0x50] sm:$0xff]
      %v1121 = vld [vmem:[%s510 + $0x58] sm:$0xff]
      %v1122 = vld [vmem:[%s510 + $0x60] sm:$0xff]
      %v1123 = vld [vmem:[%s510 + $0x68] sm:$0xff]
      %v1124 = vld [vmem:[%s510 + $0x70] sm:$0xff]
      %v1125 = vld [vmem:[%s510 + $0x78] sm:$0xff]
      %v1126 = vld [vmem:[%s510 + $0x80] sm:$0xff]
      %v1127 = vld [vmem:[%s510 + $0x88] sm:$0xff]
      %v1128 = vld [vmem:[%s510 + $0x90] sm:$0xff]
      %v1129 = vld [vmem:[%s510 + $0x98] sm:$0xff]
      %v1130 = vld [vmem:[%s510 + $0xa0] sm:$0xff]
      %v1131 = vld [vmem:[%s510 + $0xa8] sm:$0xff]
      %v1132 = vld [vmem:[%s510 + $0xb0] sm:$0xff]
      %v1133 = vld [vmem:[%s510 + $0xb8] sm:$0xff]
      %v1134 = vld [vmem:[%s510 + $0xc0] sm:$0xff]
      %v1135 = vld [vmem:[%s510 + $0xc8] sm:$0xff]
      %v1136 = vld [vmem:[%s510 + $0xd0] sm:$0xff]
      %v1137 = vld [vmem:[%s510 + $0xd8] sm:$0xff]
      %v1138 = vld [vmem:[%s510 + $0xe0] sm:$0xff]
      %v1139 = vld [vmem:[%s510 + $0xe8] sm:$0xff]
      %v1140 = vld [vmem:[%s510 + $0xf0] sm:$0xff]
      %v1141 = vld [vmem:[%s510 + $0xf8] sm:$0xff]
      %1142 = vmatprep.subr.mxu0 %v1141
      %1143 = vmatpush1.msra.mxu0 %v1140
      %1144 = vmatprep.subr.mxu0 %v1139
      %1145 = vmatpush1.msra.mxu0 %v1138
      %1146 = vmatprep.subr.mxu0 %v1137
      %1147 = vmatpush1.msra.mxu0 %v1136
      %1148 = vmatprep.subr.mxu0 %v1135
      %1149 = vmatpush1.msra.mxu0 %v1134
      %1150 = vmatprep.subr.mxu0 %v1133
      %1151 = vmatpush1.msra.mxu0 %v1132
      %1152 = vmatprep.subr.mxu0 %v1131
      %1153 = vmatpush1.msra.mxu0 %v1130
      %1154 = vmatprep.subr.mxu0 %v1129
      %1155 = vmatpush1.msra.mxu0 %v1128
      %1156 = vmatprep.subr.mxu0 %v1127
      %1157 = vmatpush1.msra.mxu0 %v1126
      %1158 = vmatprep.subr.mxu0 %v1125
      %1159 = vmatpush1.msra.mxu0 %v1124
      %1160 = vmatprep.subr.mxu0 %v1123
      %1161 = vmatpush1.msra.mxu0 %v1122
      %1162 = vmatprep.subr.mxu0 %v1121
      %1163 = vmatpush1.msra.mxu0 %v1120
      %1164 = vmatprep.subr.mxu0 %v1119
      %1165 = vmatpush1.msra.mxu0 %v1118
      %1166 = vmatprep.subr.mxu0 %v1117
      %1167 = vmatpush1.msra.mxu0 %v1116
      %1168 = vmatprep.subr.mxu0 %v1115
      %1169 = vmatpush1.msra.mxu0 %v1114
      %1170 = vmatprep.subr.mxu0 %v1113
      %1171 = vmatpush1.msra.mxu0 %v1112
      %1172 = vmatprep.subr.mxu0 %v1111
      %1173 = vmatpush1.msra.mxu0 %v1110
      %1174 = vmatprep.subr.mxu0 0.0
      %1175 = vmatpush2.msra.mxu0 0.0
      %1176 = vmatprep.subr.mxu0 0.0
      %1177 = vmatpush2.msra.mxu0 0.0
      %1178 = vmatprep.subr.mxu0 0.0
      %1179 = vmatpush2.msra.mxu0 0.0
      %1180 = vmatprep.subr.mxu0 0.0
      %1181 = vmatpush2.msra.mxu0 0.0
      %1182 = vmatprep.subr.mxu0 0.0
      %1183 = vmatpush2.msra.mxu0 0.0
      %1184 = vmatprep.subr.mxu0 0.0
      %1185 = vmatpush2.msra.mxu0 0.0
      %1186 = vmatprep.subr.mxu0 0.0
      %1187 = vmatpush2.msra.mxu0 0.0
      %1188 = vmatprep.subr.mxu0 0.0
      %1189 = vmatpush2.msra.mxu0 0.0
      %1190 = vmatprep.subr.mxu0 0.0
      %1191 = vmatpush2.msra.mxu0 0.0
      %1192 = vmatprep.subr.mxu0 0.0
      %1193 = vmatpush2.msra.mxu0 0.0
      %1194 = vmatprep.subr.mxu0 0.0
      %1195 = vmatpush2.msra.mxu0 0.0
      %1196 = vmatprep.subr.mxu0 0.0
      %1197 = vmatpush2.msra.mxu0 0.0
      %1198 = vmatprep.subr.mxu0 0.0
      %1199 = vmatpush2.msra.mxu0 0.0
      %1200 = vmatprep.subr.mxu0 0.0
      %1201 = vmatpush2.msra.mxu0 0.0
      %1202 = vmatprep.subr.mxu0 0.0
      %1203 = vmatpush2.msra.mxu0 0.0
      %1204 = vmatprep.subr.mxu0 0.0
      %1205 = vmatpush2.msra.mxu0 0.0
      %1206 = vmatprep.mubr.f32.mxu0 0.0
      %1207 = vmatmul.mubr.f32.gmra.mxu0 %v1098
      %v1208 = vpop.f32.mrf.mxu0
      %v1209 = vadd.f32 0.0, %v1208
      %v1210 = vpop.f32.mrf.mxu0
      %v1211 = vadd.f32 0.0, %v1210
      %1212 = vmatprep.mubr.f32.mxu0 0.0
      %1213 = vmatmul.mubr.f32.gmra.mxu0 %v1099
      %v1214 = vpop.f32.mrf.mxu0
      %v1215 = vadd.f32 0.0, %v1214
      %v1216 = vpop.f32.mrf.mxu0
      %v1217 = vadd.f32 0.0, %v1216
      %1218 = vmatprep.mubr.f32.mxu0 0.0
      %1219 = vmatmul.mubr.f32.gmra.mxu0 %v1100
      %v1220 = vpop.f32.mrf.mxu0
      %v1221 = vadd.f32 0.0, %v1220
      %v1222 = vpop.f32.mrf.mxu0
      %v1223 = vadd.f32 0.0, %v1222
      %1224 = vmatprep.mubr.f32.mxu0 0.0
      %1225 = vmatmul.mubr.f32.gmra.mxu0 %v1101
      %v1226 = vpop.f32.mrf.mxu0
      %v1227 = vadd.f32 0.0, %v1226
      %v1228 = vpop.f32.mrf.mxu0
      %v1229 = vadd.f32 0.0, %v1228
      %1230 = vdwg.mxu0
      %v1231 = vadd.f32 %v1102, %v1209
      %v1232 = vadd.f32 %v1103, %v1211
      %v1233 = vadd.f32 %v1104, %v1215
      %v1234 = vadd.f32 %v1105, %v1217
      %v1235 = vadd.f32 %v1106, %v1221
      %v1236 = vadd.f32 %v1107, %v1223
      %v1237 = vadd.f32 %v1108, %v1227
      %v1238 = vadd.f32 %v1109, %v1229
      %1239 = vst [vmem:[#allocation2] sm:$0xff] %v1231
      %1240 = vst [vmem:[#allocation2 + $0x8] sm:$0xff] %v1232
      %1241 = vst [vmem:[#allocation2 + $0x10] sm:$0xff] %v1233
      %1242 = vst [vmem:[#allocation2 + $0x18] sm:$0xff] %v1234
      %1243 = vst [vmem:[#allocation2 + $0x20] sm:$0xff] %v1235
      %1244 = vst [vmem:[#allocation2 + $0x28] sm:$0xff] %v1236
      %1245 = vst [vmem:[#allocation2 + $0x30] sm:$0xff] %v1237
      %1246 = vst [vmem:[#allocation2 + $0x38] sm:$0xff] %v1238
      %p1247 = scmp.eq.s32.totalorder %s28, 1
      // Predicated region
      $region65: #{transformer_encoder.5} parent=59 // pred_check
        %p1248 = pneg %p1247
      $region66: #{transformer_encoder.5} parent=59 // pred_check_branch
        %1250 = sbr.rel (%p1248) target = $region68
      $region67: #{transformer_encoder.5} parent=59 // pred_region
        %v1251 = vld [vmem:[#allocation2] sm:$0xff]
        %v1252 = vld [vmem:[#allocation2 + $0x8] sm:$0xff]
        %v1253 = vld [vmem:[#allocation2 + $0x10] sm:$0xff]
        %v1254 = vld [vmem:[#allocation2 + $0x18] sm:$0xff]
        %v1255 = vld [vmem:[#allocation2 + $0x20] sm:$0xff]
        %v1256 = vld [vmem:[#allocation2 + $0x28] sm:$0xff]
        %v1257 = vld [vmem:[#allocation2 + $0x30] sm:$0xff]
        %v1258 = vld [vmem:[#allocation2 + $0x38] sm:$0xff]
        %v1259 = vadd.f32 %v534, %v1251
        %v1260 = vadd.f32 %v535, %v1252
        %v1261 = vadd.f32 %v536, %v1253
        %v1262 = vadd.f32 %v537, %v1254
        %v1263 = vadd.f32 %v538, %v1255
        %v1264 = vadd.f32 %v539, %v1256
        %v1265 = vadd.f32 %v540, %v1257
        %v1266 = vadd.f32 %v541, %v1258
        %v1267 = vld [vmem:[%s7] sm:$0x3]
        %v1269 = vlaneseq
        %v1270 = vshrl.u32 %v1269, 7
        %v1271 = vsub.s32 0, %v1270
        %v1272 = vrot.slane %v1267, %v1271
        %v1273 = vlaneseq
        %v1274 = vshrl.u32 %v1273, 7
        %v1275 = vsub.s32 1, %v1274
        %v1276 = vrot.slane %v1267, %v1275
        %v1279 = vadd.f32 %v1259, %v1272
        %v1280 = vadd.f32 %v1260, %v1276
        %v1281 = vadd.f32 %v1261, %v1272
        %v1282 = vadd.f32 %v1262, %v1276
        %v1283 = vadd.f32 %v1263, %v1272
        %v1284 = vadd.f32 %v1264, %v1276
        %v1285 = vadd.f32 %v1265, %v1272
        %v1286 = vadd.f32 %v1266, %v1276
        %v1287 = vld [vmem:[%s8] sm:$0x3]
        %v1288 = vld [vmem:[%s9] sm:$0x3]
        %v1289 = vadd.f32 %v1279, %v1280
        %1290 = vadd.xlane.f32.xlu0 %v1289
        %v1291 = vpop.xlane.xlu0 %1290
        %v1292 = vadd.f32 %v1281, %v1282
        %1293 = vadd.xlane.f32.xlu0 %v1292
        %v1294 = vpop.xlane.xlu0 %1293
        %v1295 = vadd.f32 %v1283, %v1284
        %1296 = vadd.xlane.f32.xlu0 %v1295
        %v1297 = vpop.xlane.xlu0 %1296
        %v1298 = vadd.f32 %v1285, %v1286
        %1299 = vadd.xlane.f32.xlu0 %v1298
        %v1300 = vpop.xlane.xlu0 %1299
        %v1301 = vrcp.pop 256.0
        %v1302 = vmul.f32 %v1291, %v1301
        %v1303 = vmul.f32 %v1294, %v1301
        %v1304 = vmul.f32 %v1297, %v1301
        %v1305 = vmul.f32 %v1300, %v1301
        %v1306 = vsub.f32 %v1279, %v1302
        %v1307 = vsub.f32 %v1280, %v1302
        %v1308 = vsub.f32 %v1281, %v1303
        %v1309 = vsub.f32 %v1282, %v1303
        %v1310 = vsub.f32 %v1283, %v1304
        %v1311 = vsub.f32 %v1284, %v1304
        %v1312 = vsub.f32 %v1285, %v1305
        %v1313 = vsub.f32 %v1286, %v1305
        %v1314 = vmul.f32 %v1306, %v1306
        %v1315 = vmul.f32 %v1307, %v1307
        %v1316 = vmul.f32 %v1308, %v1308
        %v1317 = vmul.f32 %v1309, %v1309
        %v1318 = vmul.f32 %v1310, %v1310
        %v1319 = vmul.f32 %v1311, %v1311
        %v1320 = vmul.f32 %v1312, %v1312
        %v1321 = vmul.f32 %v1313, %v1313
        %v1322 = vadd.f32 %v1314, %v1315
        %1323 = vadd.xlane.f32.xlu0 %v1322
        %v1324 = vpop.xlane.xlu0 %1323
        %v1325 = vadd.f32 %v1316, %v1317
        %1326 = vadd.xlane.f32.xlu0 %v1325
        %v1327 = vpop.xlane.xlu0 %1326
        %v1328 = vadd.f32 %v1318, %v1319
        %1329 = vadd.xlane.f32.xlu0 %v1328
        %v1330 = vpop.xlane.xlu0 %1329
        %v1331 = vadd.f32 %v1320, %v1321
        %1332 = vadd.xlane.f32.xlu0 %v1331
        %v1333 = vpop.xlane.xlu0 %1332
        %v1334 = vmul.f32 %v1324, %v1301
        %v1335 = vmul.f32 %v1327, %v1301
        %v1336 = vmul.f32 %v1330, %v1301
        %v1337 = vmul.f32 %v1333, %v1301
        %v1338 = vadd.f32 %v1334, 1e-05
        %v1339 = vadd.f32 %v1335, 1e-05
        %v1340 = vadd.f32 %v1336, 1e-05
        %v1341 = vadd.f32 %v1337, 1e-05
        %v1342 = vrsqrt.pop %v1338
        %v1343 = vrsqrt.pop %v1339
        %v1344 = vrsqrt.pop %v1340
        %v1345 = vrsqrt.pop %v1341
        %v1346 = vmul.f32 %v1306, %v1342
        %v1347 = vmul.f32 %v1307, %v1342
        %v1348 = vmul.f32 %v1308, %v1343
        %v1349 = vmul.f32 %v1309, %v1343
        %v1350 = vmul.f32 %v1310, %v1344
        %v1351 = vmul.f32 %v1311, %v1344
        %v1352 = vmul.f32 %v1312, %v1345
        %v1353 = vmul.f32 %v1313, %v1345
        %v1355 = vlaneseq
        %v1356 = vshrl.u32 %v1355, 7
        %v1357 = vsub.s32 0, %v1356
        %v1358 = vrot.slane %v1287, %v1357
        %v1359 = vlaneseq
        %v1360 = vshrl.u32 %v1359, 7
        %v1361 = vsub.s32 1, %v1360
        %v1362 = vrot.slane %v1287, %v1361
        %v1365 = vmul.f32 %v1346, %v1358
        %v1366 = vmul.f32 %v1347, %v1362
        %v1367 = vmul.f32 %v1348, %v1358
        %v1368 = vmul.f32 %v1349, %v1362
        %v1369 = vmul.f32 %v1350, %v1358
        %v1370 = vmul.f32 %v1351, %v1362
        %v1371 = vmul.f32 %v1352, %v1358
        %v1372 = vmul.f32 %v1353, %v1362
        %v1374 = vlaneseq
        %v1375 = vshrl.u32 %v1374, 7
        %v1376 = vsub.s32 0, %v1375
        %v1377 = vrot.slane %v1288, %v1376
        %v1378 = vlaneseq
        %v1379 = vshrl.u32 %v1378, 7
        %v1380 = vsub.s32 1, %v1379
        %v1381 = vrot.slane %v1288, %v1380
        %v1384 = vadd.f32 %v1365, %v1377
        %v1385 = vadd.f32 %v1366, %v1381
        %v1386 = vadd.f32 %v1367, %v1377
        %v1387 = vadd.f32 %v1368, %v1381
        %v1388 = vadd.f32 %v1369, %v1377
        %v1389 = vadd.f32 %v1370, %v1381
        %v1390 = vadd.f32 %v1371, %v1377
        %v1391 = vadd.f32 %v1372, %v1381
        %1392 = vst [vmem:[%s520] sm:$0xff] %v1384
        %1393 = vst [vmem:[%s520 + $0x8] sm:$0xff] %v1385
        %1394 = vst [vmem:[%s520 + $0x10] sm:$0xff] %v1386
        %1395 = vst [vmem:[%s520 + $0x18] sm:$0xff] %v1387
        %1396 = vst [vmem:[%s520 + $0x20] sm:$0xff] %v1388
        %1397 = vst [vmem:[%s520 + $0x28] sm:$0xff] %v1389
        %1398 = vst [vmem:[%s520 + $0x30] sm:$0xff] %v1390
        %1399 = vst [vmem:[%s520 + $0x38] sm:$0xff] %v1391
      $region68: #{transformer_encoder.5} parent=59 // pred_fallthru
        _
      %s1400 = smul.u32 4, %s27
      %p1401 = scmp.lt.s32.totalorder %s26, 1
      %s1402 = scalar_select %p1401, %s26, 1
      %p1403 = scmp.lt.s32.totalorder %s1400, 7
      %s1404 = scalar_select %p1403, %s1400, 7
      %s1405 = smul.addr %s1404, 2
      %s1406 = smul.addr %s1402, 16
      %s1407 = sadd.s32 %s1405, %s1406
      %s1408 = smul.addr %s1407, 8
      %s1409 = scalar_lea.vmem %s10, %s1408
      // Predicated region
      $region69: #{transformer_encoder.5} parent=59 // pred_check
        %p1410 = pneg %p307
      $region70: #{transformer_encoder.5} parent=59 // pred_check_branch
        %1412 = sbr.rel (%p1410) target = $region72
      $region71: #{transformer_encoder.5} parent=59 // pred_region
        %s1413 = smul.u32 4, %s27
      $region72: #{transformer_encoder.5} parent=59 // pred_fallthru
        _
    $region60: #{transformer_encoder.5} parent=5 // pred_fallthru
      _
    %p1414 = scmp.le.s32.totalorder 2, %s16
    // Predicated region
    $region73: #{transformer_encoder.5} parent=5 // pred_check
      %p1415 = pneg %p1414
    $region74: #{transformer_encoder.5} parent=5 // pred_check_branch
      %1417 = sbr.rel (%p1415) target = $region76
    $region75: #{transformer_encoder.5} parent=5 // pred_region
      %s1418 = ssub.s32 %s16, 2
      // Predicated region
      $region77: #{transformer_encoder.5} parent=75 // pred_check
        %p1419 = pneg %p313
      $region78: #{transformer_encoder.5} parent=75 // pred_check_branch
        %1421 = sbr.rel (%p1419) target = $region80
      $region79: #{transformer_encoder.5} parent=75 // pred_region
        %s1422 = smul.u32 4, %s30
        %p1423 = scmp.lt.s32.totalorder %s29, 1
        %s1424 = scalar_select %p1423, %s29, 1
        %p1425 = scmp.lt.s32.totalorder %s1422, 7
        %s1426 = scalar_select %p1425, %s1422, 7
        %s1427 = smul.addr %s1426, 2
        %s1428 = smul.addr %s1424, 16
        %s1429 = sadd.s32 %s1427, %s1428
        %s1430 = smul.addr %s1429, 8
        %s1431 = scalar_lea.vmem %s10, %s1430
      $region80: #{transformer_encoder.5} parent=75 // pred_fallthru
        _
    $region76: #{transformer_encoder.5} parent=5 // pred_fallthru
      _
  $region6: #{transformer_encoder.5} parent=0 // loop_footer
    %s20 = sadd.s32 1, %s16
  $region7: #{transformer_encoder.5} parent=0 // loop_footer_branch
    %15 = sbr.rel target = $region3
  $region8: #{transformer_encoder.5} parent=0 // loop_exit
    _

</llo_original>
